<compile_context>
chip_gen: v5e
topology: v5e:2x2
jax: 0.10.0
libtpu: 0.0.40
codegen_flags: <defaults>
</compile_context>

<pallas_src>
import functools

import jax
import jax.numpy as jnp
from jax import lax
from jax.experimental import pallas as pl
from jax.experimental.pallas import tpu as pltpu

BN_EPS = 1e-5
NEG_SLOPE = 0.1
VMEM_LIMIT = 48 * 1024 * 1024  # <= ~48 MiB: leaves headroom under v7x's 64 MiB VMEM


def _round_up(x, m):
    return (x + m - 1) // m * m


# ---------------------------------------------------------------------------
# Shared in-kernel 3x3 conv on one halo'd tile (in-kernel im2col).
# ---------------------------------------------------------------------------
def _conv_tile(xt_ref, w_ref, th, wd, c_in, c_out_s):
    """xt_ref: [th+2, wd+2, c_in] halo'd NHWC tile; w_ref: [3, 3, c_in, c_out_s].

    Returns the conv output [th*wd, c_out_s] in f32 (9 shifted taps, each a
    small matmul accumulated on the MXU with f32 accumulation)."""
    xt = xt_ref[...]
    acc = jnp.zeros((th * wd, c_out_s), jnp.float32)
    for kh in range(3):
        for kw in range(3):
            tap = xt[kh:kh + th, kw:kw + wd, :].reshape(th * wd, c_in)
            acc = acc + jnp.dot(tap, w_ref[kh, kw],
                                preferred_element_type=jnp.float32)
    return acc


# ---------------------------------------------------------------------------
# Pass 1: streamed per-channel sum / sum-of-squares of the conv output.
# ---------------------------------------------------------------------------
def _conv_stats_kernel(xt_ref, w_ref, stats_ref, *, th, wd, c_in, c_out_s,
                       h, nh, tiles_per_split):
    j = pl.program_id(1)

    @pl.when(j == 0)
    def _init():
        stats_ref[...] = jnp.zeros_like(stats_ref)

    conv = _conv_tile(xt_ref, w_ref, th, wd, c_in, c_out_s)  # [th*wd, C] f32

    if h % th != 0:
        # Mask rows past the true image height: the first padded row still sees
        # one real row through its kh=0 tap and must not leak into the stats.
        tile_idx = pl.program_id(0) * tiles_per_split + j
        n_valid = jnp.minimum(th, h - (tile_idx % nh) * th)
        row = lax.broadcasted_iota(jnp.int32, (th * wd, 1), 0) // wd
        conv = jnp.where(row < n_valid, conv, 0.0)

    # Row-slice accumulation into the resident [2, C] block (no concatenate).
    stats_ref[0:1, :] += jnp.sum(conv, axis=0, keepdims=True)
    stats_ref[1:2, :] += jnp.sum(conv * conv, axis=0, keepdims=True)


# ---------------------------------------------------------------------------
# Pass 2: recompute the conv, apply per-channel scale/shift + LeakyReLU.
# ---------------------------------------------------------------------------
def _conv_bn_lrelu_kernel(xt_ref, w_ref, ss_ref, out_ref, *, th, wd, c_in, c_out_s):
    conv = _conv_tile(xt_ref, w_ref, th, wd, c_in, c_out_s)
    y = conv * ss_ref[0:1, :] + ss_ref[1:2, :]
    out_ref[...] = jnp.where(y > 0, y, NEG_SLOPE * y)


# ---------------------------------------------------------------------------
# Wrapper
# ---------------------------------------------------------------------------
def cnn_unit_forward(x, weight, bias, gamma, beta, *,
                     rows_per_tile=1024, compute_dtype=jnp.bfloat16):
    """CNNUnit forward. x: [N, C_in, H, W] NCHW; weight: [C_out, C_in, 3, 3].

    `bias` is accepted for interface parity with nn.Conv2d but unused: under
    train-mode BatchNorm the mean subtraction cancels it exactly.
    """
    del bias
    n, c_in, h, wd = x.shape
    c_out = weight.shape[0]
    # Store channels at (near-)true width: avoids 16x HBM inflation vs 128-pad.
    c_out_s = _round_up(c_out, 8)

    # ~rows_per_tile output rows per grid step (pipeline-efficiency sweet spot).
    th = max(1, min(h, rows_per_tile // max(wd, 1)))
    nh = -(-h // th)                    # ceil(h / th)
    hp = nh * th
    n_tiles = n * nh
    m_true = n * h * wd

    # Halo'd channels-last tiles for in-kernel im2col: [n_tiles, TH+2, W+2, C_in].
    x_nhwc = jnp.transpose(x, (0, 2, 3, 1)).astype(compute_dtype)
    x_padded = jnp.pad(x_nhwc, ((0, 0), (1, 1 + hp - h), (1, 1), (0, 0)))
    if nh == 1:
        tiles = x_padded[:, None]
    else:
        tiles = jnp.stack(
            [x_padded[:, t * th:t * th + th + 2] for t in range(nh)], axis=1)
    tiles = tiles.reshape(n_tiles, th + 2, wd + 2, c_in)

    # Weight taps [3, 3, C_in, C_out_s]; zero-padded channels give zero conv,
    # zero stats and zero output (sliced off below).
    w_taps = jnp.transpose(weight, (2, 3, 1, 0)).astype(compute_dtype)
    w_taps = jnp.pad(w_taps, ((0, 0), (0, 0), (0, 0), (0, c_out_s - c_out)))

    # Megacore split of the stats pass (v7x: 2 TensorCores; harmless on 1-TC chips).
    n_split = 2 if (n_tiles % 2 == 0 and n_tiles >= 2) else 1
    tiles_per_split = n_tiles // n_split

    flops = 2 * n_tiles * th * wd * (9 * c_in) * c_out_s
    in_bytes = tiles.size * tiles.dtype.itemsize + w_taps.size * w_taps.dtype.itemsize

    # ---- Pass 1: per-channel sum / sum(x^2), partial per split. ------------
    partial_stats = pl.pallas_call(
        functools.partial(_conv_stats_kernel, th=th, wd=wd, c_in=c_in,
                          c_out_s=c_out_s, h=h, nh=nh,
                          tiles_per_split=tiles_per_split),
        grid=(n_split, tiles_per_split),
        in_specs=[
            pl.BlockSpec((None, th + 2, wd + 2, c_in),
                         lambda s, j: (s * tiles_per_split + j, 0, 0, 0)),
            pl.BlockSpec((3, 3, c_in, c_out_s), lambda s, j: (0, 0, 0, 0)),
        ],
        out_specs=pl.BlockSpec((None, 2, c_out_s), lambda s, j: (s, 0, 0)),
        out_shape=jax.ShapeDtypeStruct((n_split, 2, c_out_s), jnp.float32),
        compiler_params=pltpu.CompilerParams(
            dimension_semantics=("parallel", "arbitrary"),
            vmem_limit_bytes=VMEM_LIMIT),
        cost_estimate=pl.CostEstimate(flops=flops, transcendentals=0,
                                      bytes_accessed=in_bytes),
    )(tiles, w_taps)

    # Combine split partials and fold BN into a per-channel scale/shift (tiny op).
    stats = jnp.sum(partial_stats, axis=0)            # [2, C_out_s]
    mean = stats[0] / m_true                          # divide by TRUE M
    var = stats[1] / m_true - mean * mean             # biased batch variance
    inv_std = lax.rsqrt(var + BN_EPS)
    gamma_p = jnp.pad(gamma.astype(jnp.float32), (0, c_out_s - c_out))
    beta_p = jnp.pad(beta.astype(jnp.float32), (0, c_out_s - c_out))
    scale = gamma_p * inv_std
    shift = beta_p - mean * scale
    scale_shift = jnp.stack([scale, shift], axis=0)   # [2, C_out_s] f32

    # ---- Pass 2: recompute conv, apply scale/shift + LeakyReLU. -------------
    out_tiles = pl.pallas_call(
        functools.partial(_conv_bn_lrelu_kernel, th=th, wd=wd, c_in=c_in,
                          c_out_s=c_out_s),
        grid=(n_tiles,),
        in_specs=[
            pl.BlockSpec((None, th + 2, wd + 2, c_in), lambda i: (i, 0, 0, 0)),
            pl.BlockSpec((3, 3, c_in, c_out_s), lambda i: (0, 0, 0, 0)),
            pl.BlockSpec((2, c_out_s), lambda i: (0, 0)),
        ],
        out_specs=pl.BlockSpec((None, th * wd, c_out_s), lambda i: (i, 0, 0)),
        out_shape=jax.ShapeDtypeStruct((n_tiles, th * wd, c_out_s), jnp.float32),
        compiler_params=pltpu.CompilerParams(
            dimension_semantics=("parallel",),
            vmem_limit_bytes=VMEM_LIMIT),
        cost_estimate=pl.CostEstimate(
            flops=flops, transcendentals=0,
            bytes_accessed=in_bytes + n_tiles * th * wd * c_out_s * 4),
    )(tiles, w_taps, scale_shift)

    # [n_tiles, TH*W, C_out_s] -> [N, Hp, W, C_out_s] -> drop padding -> NCHW.
    out = out_tiles.reshape(n, hp, wd, c_out_s)[:, :h, :, :c_out]
    return jnp.transpose(out, (0, 3, 1, 2))


def reference_forward(x, weight, bias, gamma, beta):
    """Pure-JAX f32 reference matching PyTorch training-mode forward (with bias)."""
    conv = lax.conv_general_dilated(
        x, weight, window_strides=(1, 1), padding=((1, 1), (1, 1)),
        dimension_numbers=("NCHW", "OIHW", "NCHW"))
    conv = conv + bias[None, :, None, None]
    mean = jnp.mean(conv, axis=(0, 2, 3), keepdims=True)
    var = jnp.mean((conv - mean) ** 2, axis=(0, 2, 3), keepdims=True)
    y = (conv - mean) * lax.rsqrt(var + BN_EPS)
    y = y * gamma[None, :, None, None] + beta[None, :, None, None]
    return jnp.where(y > 0, y, NEG_SLOPE * y)


if __name__ == "__main__":
    key = jax.random.PRNGKey(0)
    k_x, k_w, k_b, k_g, k_bt = jax.random.split(key, 5)

    N, C_in, C_out, H, W = 2, 4, 8, 16, 16

    x = jax.random.normal(k_x, (N, C_in, H, W), dtype=jnp.float32)
    weight = jax.random.normal(k_w, (C_out, C_in, 3, 3), dtype=jnp.float32) * 0.1
    bias = jax.random.normal(k_b, (C_out,), dtype=jnp.float32) * 0.1
    gamma = 1.0 + 0.1 * jax.random.normal(k_g, (C_out,), dtype=jnp.float32)
    beta = 0.1 * jax.random.normal(k_bt, (C_out,), dtype=jnp.float32)

    ref = jax.block_until_ready(reference_forward(x, weight, bias, gamma, beta))

    # f32 compute path: tight parity with the f32 reference.
    fwd_f32 = jax.jit(functools.partial(cnn_unit_forward, compute_dtype=jnp.float32))
    out_f32 = jax.block_until_ready(fwd_f32(x, weight, bias, gamma, beta))
    assert out_f32.shape == (N, C_out, H, W)
    err_f32 = float(jnp.max(jnp.abs(out_f32 - ref)))
    assert jnp.allclose(out_f32, ref, atol=5e-4, rtol=5e-4), err_f32

    # Default bf16-input path (f32 accumulation + f32 BN math): error is bounded
    # by bf16 rounding of the matmul inputs on a unit-variance output.
    fwd_bf16 = jax.jit(cnn_unit_forward)
    out_bf16 = jax.block_until_ready(fwd_bf16(x, weight, bias, gamma, beta))
    err_bf16 = float(jnp.max(jnp.abs(out_bf16 - ref)))
    assert jnp.allclose(out_bf16, ref, atol=5e-2, rtol=5e-2), err_bf16

    print("KERNEL_OK")
</pallas_src>

<mosaic_0001>
module attributes {stable_mosaic.version = 11 : i64} {
  func.func @_conv_stats_kernel(%arg0: i32, %arg1: i32, %arg2: memref<1x18x18x4xf32, #tpu.memory_space<vmem>>, %arg3: memref<3x3x4x8xf32, #tpu.memory_space<vmem>>, %arg4: memref<1x2x8xf32, #tpu.memory_space<vmem>>) attributes {dimension_semantics = [#tpu.dimension_semantics<parallel>, #tpu.dimension_semantics<arbitrary>], iteration_bounds = array<i64: 2, 1>, scalar_prefetch = 0 : i64, scratch_operands = 0 : i64, tpu.core_type = #tpu.core_type<tc>, window_params = [{transform_indices = @transform_0, window_bounds = array<i64: 1, 18, 18, 4>}, {pipeline_mode = #tpu.pipeline_mode<synchronous>, transform_indices = @transform_1, window_bounds = array<i64: 3, 3, 4, 8>}, {transform_indices = @transform_2, window_bounds = array<i64: 1, 2, 8>}]} {
    %c0_i32 = arith.constant 0 : i32
    %0 = arith.cmpi eq, %arg1, %c0_i32 : i32
    %1 = arith.extui %0 : i1 to i32
    %c0_i32_0 = arith.constant 0 : i32
    %2 = arith.cmpi ne, %1, %c0_i32_0 : i32
    scf.if %2 {
      %cst_61 = arith.constant 0.000000e+00 : f32
      %77 = vector.broadcast %cst_61 : f32 to vector<2x8xf32>
      %c0_62 = arith.constant 0 : index
      %c0_63 = arith.constant 0 : index
      %c0_64 = arith.constant 0 : index
      %78 = vector.load %arg4[%c0_62, %c0_63, %c0_64] : memref<1x2x8xf32, #tpu.memory_space<vmem>>, vector<1x2x8xf32>
      %79 = vector.shape_cast %78 : vector<1x2x8xf32> to vector<2x8xf32>
      %80 = vector.shape_cast %77 : vector<2x8xf32> to vector<1x2x8xf32>
      tpu.vector_store %arg4[%c0_62, %c0_63, %c0_64], %80 {strides = array<i32>} : memref<1x2x8xf32, #tpu.memory_space<vmem>>, vector<1x2x8xf32>,
    } else {
    }
    %c0 = arith.constant 0 : index
    %c0_1 = arith.constant 0 : index
    %c0_2 = arith.constant 0 : index
    %c0_3 = arith.constant 0 : index
    %3 = vector.load %arg2[%c0, %c0_1, %c0_2, %c0_3] : memref<1x18x18x4xf32, #tpu.memory_space<vmem>>, vector<1x18x18x4xf32>
    %4 = vector.shape_cast %3 : vector<1x18x18x4xf32> to vector<18x18x4xf32>
    %cst = arith.constant 0.000000e+00 : f32
    %5 = vector.broadcast %cst : f32 to vector<256x8xf32>
    %6 = vector.extract_strided_slice %4 {offsets = [0, 0, 0], sizes = [16, 16, 4], strides = [1, 1, 1]} : vector<18x18x4xf32> to vector<16x16x4xf32>
    %7 = vector.shape_cast %6 : vector<16x16x4xf32> to vector<256x4xf32>
    %c0_4 = arith.constant 0 : index
    %c0_5 = arith.constant 0 : index
    %c0_6 = arith.constant 0 : index
    %c0_7 = arith.constant 0 : index
    %8 = vector.load %arg3[%c0_4, %c0_5, %c0_6, %c0_7] : memref<3x3x4x8xf32, #tpu.memory_space<vmem>>, vector<1x1x4x8xf32>
    %9 = vector.shape_cast %8 : vector<1x1x4x8xf32> to vector<4x8xf32>
    %cst_8 = arith.constant dense<0.000000e+00> : vector<256x8xf32>
    %10 = tpu.matmul %7, %9, %cst_8 {dimension_numbers = #tpu.dot_dimension_numbers<[1], [0], [0], [1], [0, 0, 1, 1], [], []>} : vector<256x4xf32>, vector<4x8xf32>, vector<256x8xf32> -> vector<256x8xf32>
    %11 = arith.addf %5, %10 : vector<256x8xf32>
    %12 = vector.extract_strided_slice %4 {offsets = [0, 1, 0], sizes = [16, 16, 4], strides = [1, 1, 1]} : vector<18x18x4xf32> to vector<16x16x4xf32>
    %13 = vector.shape_cast %12 : vector<16x16x4xf32> to vector<256x4xf32>
    %c0_9 = arith.constant 0 : index
    %c1 = arith.constant 1 : index
    %c0_10 = arith.constant 0 : index
    %c0_11 = arith.constant 0 : index
    %14 = vector.load %arg3[%c0_9, %c1, %c0_10, %c0_11] : memref<3x3x4x8xf32, #tpu.memory_space<vmem>>, vector<1x1x4x8xf32>
    %15 = vector.shape_cast %14 : vector<1x1x4x8xf32> to vector<4x8xf32>
    %cst_12 = arith.constant dense<0.000000e+00> : vector<256x8xf32>
    %16 = tpu.matmul %13, %15, %cst_12 {dimension_numbers = #tpu.dot_dimension_numbers<[1], [0], [0], [1], [0, 0, 1, 1], [], []>} : vector<256x4xf32>, vector<4x8xf32>, vector<256x8xf32> -> vector<256x8xf32>
    %17 = arith.addf %11, %16 : vector<256x8xf32>
    %18 = vector.extract_strided_slice %4 {offsets = [0, 2, 0], sizes = [16, 16, 4], strides = [1, 1, 1]} : vector<18x18x4xf32> to vector<16x16x4xf32>
    %19 = vector.shape_cast %18 : vector<16x16x4xf32> to vector<256x4xf32>
    %c0_13 = arith.constant 0 : index
    %c2 = arith.constant 2 : index
    %c0_14 = arith.constant 0 : index
    %c0_15 = arith.constant 0 : index
    %20 = vector.load %arg3[%c0_13, %c2, %c0_14, %c0_15] : memref<3x3x4x8xf32, #tpu.memory_space<vmem>>, vector<1x1x4x8xf32>
    %21 = vector.shape_cast %20 : vector<1x1x4x8xf32> to vector<4x8xf32>
    %cst_16 = arith.constant dense<0.000000e+00> : vector<256x8xf32>
    %22 = tpu.matmul %19, %21, %cst_16 {dimension_numbers = #tpu.dot_dimension_numbers<[1], [0], [0], [1], [0, 0, 1, 1], [], []>} : vector<256x4xf32>, vector<4x8xf32>, vector<256x8xf32> -> vector<256x8xf32>
    %23 = arith.addf %17, %22 : vector<256x8xf32>
    %24 = vector.extract_strided_slice %4 {offsets = [1, 0, 0], sizes = [16, 16, 4], strides = [1, 1, 1]} : vector<18x18x4xf32> to vector<16x16x4xf32>
    %25 = vector.shape_cast %24 : vector<16x16x4xf32> to vector<256x4xf32>
    %c1_17 = arith.constant 1 : index
    %c0_18 = arith.constant 0 : index
    %c0_19 = arith.constant 0 : index
    %c0_20 = arith.constant 0 : index
    %26 = vector.load %arg3[%c1_17, %c0_18, %c0_19, %c0_20] : memref<3x3x4x8xf32, #tpu.memory_space<vmem>>, vector<1x1x4x8xf32>
    %27 = vector.shape_cast %26 : vector<1x1x4x8xf32> to vector<4x8xf32>
    %cst_21 = arith.constant dense<0.000000e+00> : vector<256x8xf32>
    %28 = tpu.matmul %25, %27, %cst_21 {dimension_numbers = #tpu.dot_dimension_numbers<[1], [0], [0], [1], [0, 0, 1, 1], [], []>} : vector<256x4xf32>, vector<4x8xf32>, vector<256x8xf32> -> vector<256x8xf32>
    %29 = arith.addf %23, %28 : vector<256x8xf32>
    %30 = vector.extract_strided_slice %4 {offsets = [1, 1, 0], sizes = [16, 16, 4], strides = [1, 1, 1]} : vector<18x18x4xf32> to vector<16x16x4xf32>
    %31 = vector.shape_cast %30 : vector<16x16x4xf32> to vector<256x4xf32>
    %c1_22 = arith.constant 1 : index
    %c1_23 = arith.constant 1 : index
    %c0_24 = arith.constant 0 : index
    %c0_25 = arith.constant 0 : index
    %32 = vector.load %arg3[%c1_22, %c1_23, %c0_24, %c0_25] : memref<3x3x4x8xf32, #tpu.memory_space<vmem>>, vector<1x1x4x8xf32>
    %33 = vector.shape_cast %32 : vector<1x1x4x8xf32> to vector<4x8xf32>
    %cst_26 = arith.constant dense<0.000000e+00> : vector<256x8xf32>
    %34 = tpu.matmul %31, %33, %cst_26 {dimension_numbers = #tpu.dot_dimension_numbers<[1], [0], [0], [1], [0, 0, 1, 1], [], []>} : vector<256x4xf32>, vector<4x8xf32>, vector<256x8xf32> -> vector<256x8xf32>
    %35 = arith.addf %29, %34 : vector<256x8xf32>
    %36 = vector.extract_strided_slice %4 {offsets = [1, 2, 0], sizes = [16, 16, 4], strides = [1, 1, 1]} : vector<18x18x4xf32> to vector<16x16x4xf32>
    %37 = vector.shape_cast %36 : vector<16x16x4xf32> to vector<256x4xf32>
    %c1_27 = arith.constant 1 : index
    %c2_28 = arith.constant 2 : index
    %c0_29 = arith.constant 0 : index
    %c0_30 = arith.constant 0 : index
    %38 = vector.load %arg3[%c1_27, %c2_28, %c0_29, %c0_30] : memref<3x3x4x8xf32, #tpu.memory_space<vmem>>, vector<1x1x4x8xf32>
    %39 = vector.shape_cast %38 : vector<1x1x4x8xf32> to vector<4x8xf32>
    %cst_31 = arith.constant dense<0.000000e+00> : vector<256x8xf32>
    %40 = tpu.matmul %37, %39, %cst_31 {dimension_numbers = #tpu.dot_dimension_numbers<[1], [0], [0], [1], [0, 0, 1, 1], [], []>} : vector<256x4xf32>, vector<4x8xf32>, vector<256x8xf32> -> vector<256x8xf32>
    %41 = arith.addf %35, %40 : vector<256x8xf32>
    %42 = vector.extract_strided_slice %4 {offsets = [2, 0, 0], sizes = [16, 16, 4], strides = [1, 1, 1]} : vector<18x18x4xf32> to vector<16x16x4xf32>
    %43 = vector.shape_cast %42 : vector<16x16x4xf32> to vector<256x4xf32>
    %c2_32 = arith.constant 2 : index
    %c0_33 = arith.constant 0 : index
    %c0_34 = arith.constant 0 : index
    %c0_35 = arith.constant 0 : index
    %44 = vector.load %arg3[%c2_32, %c0_33, %c0_34, %c0_35] : memref<3x3x4x8xf32, #tpu.memory_space<vmem>>, vector<1x1x4x8xf32>
    %45 = vector.shape_cast %44 : vector<1x1x4x8xf32> to vector<4x8xf32>
    %cst_36 = arith.constant dense<0.000000e+00> : vector<256x8xf32>
    %46 = tpu.matmul %43, %45, %cst_36 {dimension_numbers = #tpu.dot_dimension_numbers<[1], [0], [0], [1], [0, 0, 1, 1], [], []>} : vector<256x4xf32>, vector<4x8xf32>, vector<256x8xf32> -> vector<256x8xf32>
    %47 = arith.addf %41, %46 : vector<256x8xf32>
    %48 = vector.extract_strided_slice %4 {offsets = [2, 1, 0], sizes = [16, 16, 4], strides = [1, 1, 1]} : vector<18x18x4xf32> to vector<16x16x4xf32>
    %49 = vector.shape_cast %48 : vector<16x16x4xf32> to vector<256x4xf32>
    %c2_37 = arith.constant 2 : index
    %c1_38 = arith.constant 1 : index
    %c0_39 = arith.constant 0 : index
    %c0_40 = arith.constant 0 : index
    %50 = vector.load %arg3[%c2_37, %c1_38, %c0_39, %c0_40] : memref<3x3x4x8xf32, #tpu.memory_space<vmem>>, vector<1x1x4x8xf32>
    %51 = vector.shape_cast %50 : vector<1x1x4x8xf32> to vector<4x8xf32>
    %cst_41 = arith.constant dense<0.000000e+00> : vector<256x8xf32>
    %52 = tpu.matmul %49, %51, %cst_41 {dimension_numbers = #tpu.dot_dimension_numbers<[1], [0], [0], [1], [0, 0, 1, 1], [], []>} : vector<256x4xf32>, vector<4x8xf32>, vector<256x8xf32> -> vector<256x8xf32>
    %53 = arith.addf %47, %52 : vector<256x8xf32>
    %54 = vector.extract_strided_slice %4 {offsets = [2, 2, 0], sizes = [16, 16, 4], strides = [1, 1, 1]} : vector<18x18x4xf32> to vector<16x16x4xf32>
    %55 = vector.shape_cast %54 : vector<16x16x4xf32> to vector<256x4xf32>
    %c2_42 = arith.constant 2 : index
    %c2_43 = arith.constant 2 : index
    %c0_44 = arith.constant 0 : index
    %c0_45 = arith.constant 0 : index
    %56 = vector.load %arg3[%c2_42, %c2_43, %c0_44, %c0_45] : memref<3x3x4x8xf32, #tpu.memory_space<vmem>>, vector<1x1x4x8xf32>
    %57 = vector.shape_cast %56 : vector<1x1x4x8xf32> to vector<4x8xf32>
    %cst_46 = arith.constant dense<0.000000e+00> : vector<256x8xf32>
    %58 = tpu.matmul %55, %57, %cst_46 {dimension_numbers = #tpu.dot_dimension_numbers<[1], [0], [0], [1], [0, 0, 1, 1], [], []>} : vector<256x4xf32>, vector<4x8xf32>, vector<256x8xf32> -> vector<256x8xf32>
    %59 = arith.addf %53, %58 : vector<256x8xf32>
    %c0_47 = arith.constant 0 : index
    %c0_48 = arith.constant 0 : index
    %c0_49 = arith.constant 0 : index
    %60 = vector.load %arg4[%c0_47, %c0_48, %c0_49] : memref<1x2x8xf32, #tpu.memory_space<vmem>>, vector<1x1x8xf32>
    %61 = vector.shape_cast %60 : vector<1x1x8xf32> to vector<1x8xf32>
    %cst_50 = arith.constant dense<0.000000e+00> : vector<8xf32>
    %62 = vector.multi_reduction <add>, %59, %cst_50 [0] : vector<256x8xf32> to vector<8xf32>
    %63 = vector.shape_cast %62 : vector<8xf32> to vector<1x8xf32>
    %64 = arith.addf %61, %63 : vector<1x8xf32>
    %c0_51 = arith.constant 0 : index
    %c0_52 = arith.constant 0 : index
    %c0_53 = arith.constant 0 : index
    %65 = vector.load %arg4[%c0_51, %c0_52, %c0_53] : memref<1x2x8xf32, #tpu.memory_space<vmem>>, vector<1x1x8xf32>
    %66 = vector.shape_cast %65 : vector<1x1x8xf32> to vector<1x8xf32>
    %67 = vector.shape_cast %64 : vector<1x8xf32> to vector<1x1x8xf32>
    tpu.vector_store %arg4[%c0_51, %c0_52, %c0_53], %67 {strides = array<i32>} : memref<1x2x8xf32, #tpu.memory_space<vmem>>, vector<1x1x8xf32>,
    %c0_54 = arith.constant 0 : index
    %c1_55 = arith.constant 1 : index
    %c0_56 = arith.constant 0 : index
    %68 = vector.load %arg4[%c0_54, %c1_55, %c0_56] : memref<1x2x8xf32, #tpu.memory_space<vmem>>, vector<1x1x8xf32>
    %69 = vector.shape_cast %68 : vector<1x1x8xf32> to vector<1x8xf32>
    %70 = arith.mulf %59, %59 : vector<256x8xf32>
    %cst_57 = arith.constant dense<0.000000e+00> : vector<8xf32>
    %71 = vector.multi_reduction <add>, %70, %cst_57 [0] : vector<256x8xf32> to vector<8xf32>
    %72 = vector.shape_cast %71 : vector<8xf32> to vector<1x8xf32>
    %73 = arith.addf %69, %72 : vector<1x8xf32>
    %c0_58 = arith.constant 0 : index
    %c1_59 = arith.constant 1 : index
    %c0_60 = arith.constant 0 : index
    %74 = vector.load %arg4[%c0_58, %c1_59, %c0_60] : memref<1x2x8xf32, #tpu.memory_space<vmem>>, vector<1x1x8xf32>
    %75 = vector.shape_cast %74 : vector<1x1x8xf32> to vector<1x8xf32>
    %76 = vector.shape_cast %73 : vector<1x8xf32> to vector<1x1x8xf32>
    tpu.vector_store %arg4[%c0_58, %c1_59, %c0_60], %76 {strides = array<i32>} : memref<1x2x8xf32, #tpu.memory_space<vmem>>, vector<1x1x8xf32>,
    return
  }
  func.func @transform_0(%arg0: i32, %arg1: i32) -> (i32, i32, i32, i32) {
    %c1_i32 = arith.constant 1 : i32
    %0 = arith.muli %arg0, %c1_i32 : i32
    %1 = arith.addi %0, %arg1 : i32
    %c0_i32 = arith.constant 0 : i32
    %c0_i32_0 = arith.constant 0 : i32
    %c0_i32_1 = arith.constant 0 : i32
    %c0_i32_2 = arith.constant 0 : i32
    return %1, %c0_i32, %c0_i32_0, %c0_i32_1 : i32, i32, i32, i32
  }
  func.func @transform_1(%arg0: i32, %arg1: i32) -> (i32, i32, i32, i32) {
    %c0_i32 = arith.constant 0 : i32
    %c0_i32_0 = arith.constant 0 : i32
    %c0_i32_1 = arith.constant 0 : i32
    %c0_i32_2 = arith.constant 0 : i32
    %c0_i32_3 = arith.constant 0 : i32
    return %c0_i32, %c0_i32_0, %c0_i32_1, %c0_i32_2 : i32, i32, i32, i32
  }
  func.func @transform_2(%arg0: i32, %arg1: i32) -> (i32, i32, i32) {
    %c0_i32 = arith.constant 0 : i32
    %c0_i32_0 = arith.constant 0 : i32
    %c0_i32_1 = arith.constant 0 : i32
    return %arg0, %c0_i32, %c0_i32_0 : i32, i32, i32
  }
}

module attributes {stable_mosaic.version = 11 : i64} {
  func.func @_conv_bn_lrelu_kernel(%arg0: i32, %arg1: memref<1x18x18x4xf32, #tpu.memory_space<vmem>>, %arg2: memref<3x3x4x8xf32, #tpu.memory_space<vmem>>, %arg3: memref<2x8xf32, #tpu.memory_space<vmem>>, %arg4: memref<1x256x8xf32, #tpu.memory_space<vmem>>) attributes {dimension_semantics = [#tpu.dimension_semantics<parallel>], iteration_bounds = array<i64: 2>, scalar_prefetch = 0 : i64, scratch_operands = 0 : i64, tpu.core_type = #tpu.core_type<tc>, window_params = [{transform_indices = @transform_0, window_bounds = array<i64: 1, 18, 18, 4>}, {pipeline_mode = #tpu.pipeline_mode<synchronous>, transform_indices = @transform_1, window_bounds = array<i64: 3, 3, 4, 8>}, {pipeline_mode = #tpu.pipeline_mode<synchronous>, transform_indices = @transform_2, window_bounds = array<i64: 2, 8>}, {transform_indices = @transform_3, window_bounds = array<i64: 1, 256, 8>}]} {
    %c0 = arith.constant 0 : index
    %c0_0 = arith.constant 0 : index
    %c0_1 = arith.constant 0 : index
    %c0_2 = arith.constant 0 : index
    %0 = vector.load %arg1[%c0, %c0_0, %c0_1, %c0_2] : memref<1x18x18x4xf32, #tpu.memory_space<vmem>>, vector<1x18x18x4xf32>
    %1 = vector.shape_cast %0 : vector<1x18x18x4xf32> to vector<18x18x4xf32>
    %cst = arith.constant 0.000000e+00 : f32
    %2 = vector.broadcast %cst : f32 to vector<256x8xf32>
    %3 = vector.extract_strided_slice %1 {offsets = [0, 0, 0], sizes = [16, 16, 4], strides = [1, 1, 1]} : vector<18x18x4xf32> to vector<16x16x4xf32>
    %4 = vector.shape_cast %3 : vector<16x16x4xf32> to vector<256x4xf32>
    %c0_3 = arith.constant 0 : index
    %c0_4 = arith.constant 0 : index
    %c0_5 = arith.constant 0 : index
    %c0_6 = arith.constant 0 : index
    %5 = vector.load %arg2[%c0_3, %c0_4, %c0_5, %c0_6] : memref<3x3x4x8xf32, #tpu.memory_space<vmem>>, vector<1x1x4x8xf32>
    %6 = vector.shape_cast %5 : vector<1x1x4x8xf32> to vector<4x8xf32>
    %cst_7 = arith.constant dense<0.000000e+00> : vector<256x8xf32>
    %7 = tpu.matmul %4, %6, %cst_7 {dimension_numbers = #tpu.dot_dimension_numbers<[1], [0], [0], [1], [0, 0, 1, 1], [], []>} : vector<256x4xf32>, vector<4x8xf32>, vector<256x8xf32> -> vector<256x8xf32>
    %8 = arith.addf %2, %7 : vector<256x8xf32>
    %9 = vector.extract_strided_slice %1 {offsets = [0, 1, 0], sizes = [16, 16, 4], strides = [1, 1, 1]} : vector<18x18x4xf32> to vector<16x16x4xf32>
    %10 = vector.shape_cast %9 : vector<16x16x4xf32> to vector<256x4xf32>
    %c0_8 = arith.constant 0 : index
    %c1 = arith.constant 1 : index
    %c0_9 = arith.constant 0 : index
    %c0_10 = arith.constant 0 : index
    %11 = vector.load %arg2[%c0_8, %c1, %c0_9, %c0_10] : memref<3x3x4x8xf32, #tpu.memory_space<vmem>>, vector<1x1x4x8xf32>
    %12 = vector.shape_cast %11 : vector<1x1x4x8xf32> to vector<4x8xf32>
    %cst_11 = arith.constant dense<0.000000e+00> : vector<256x8xf32>
    %13 = tpu.matmul %10, %12, %cst_11 {dimension_numbers = #tpu.dot_dimension_numbers<[1], [0], [0], [1], [0, 0, 1, 1], [], []>} : vector<256x4xf32>, vector<4x8xf32>, vector<256x8xf32> -> vector<256x8xf32>
    %14 = arith.addf %8, %13 : vector<256x8xf32>
    %15 = vector.extract_strided_slice %1 {offsets = [0, 2, 0], sizes = [16, 16, 4], strides = [1, 1, 1]} : vector<18x18x4xf32> to vector<16x16x4xf32>
    %16 = vector.shape_cast %15 : vector<16x16x4xf32> to vector<256x4xf32>
    %c0_12 = arith.constant 0 : index
    %c2 = arith.constant 2 : index
    %c0_13 = arith.constant 0 : index
    %c0_14 = arith.constant 0 : index
    %17 = vector.load %arg2[%c0_12, %c2, %c0_13, %c0_14] : memref<3x3x4x8xf32, #tpu.memory_space<vmem>>, vector<1x1x4x8xf32>
    %18 = vector.shape_cast %17 : vector<1x1x4x8xf32> to vector<4x8xf32>
    %cst_15 = arith.constant dense<0.000000e+00> : vector<256x8xf32>
    %19 = tpu.matmul %16, %18, %cst_15 {dimension_numbers = #tpu.dot_dimension_numbers<[1], [0], [0], [1], [0, 0, 1, 1], [], []>} : vector<256x4xf32>, vector<4x8xf32>, vector<256x8xf32> -> vector<256x8xf32>
    %20 = arith.addf %14, %19 : vector<256x8xf32>
    %21 = vector.extract_strided_slice %1 {offsets = [1, 0, 0], sizes = [16, 16, 4], strides = [1, 1, 1]} : vector<18x18x4xf32> to vector<16x16x4xf32>
    %22 = vector.shape_cast %21 : vector<16x16x4xf32> to vector<256x4xf32>
    %c1_16 = arith.constant 1 : index
    %c0_17 = arith.constant 0 : index
    %c0_18 = arith.constant 0 : index
    %c0_19 = arith.constant 0 : index
    %23 = vector.load %arg2[%c1_16, %c0_17, %c0_18, %c0_19] : memref<3x3x4x8xf32, #tpu.memory_space<vmem>>, vector<1x1x4x8xf32>
    %24 = vector.shape_cast %23 : vector<1x1x4x8xf32> to vector<4x8xf32>
    %cst_20 = arith.constant dense<0.000000e+00> : vector<256x8xf32>
    %25 = tpu.matmul %22, %24, %cst_20 {dimension_numbers = #tpu.dot_dimension_numbers<[1], [0], [0], [1], [0, 0, 1, 1], [], []>} : vector<256x4xf32>, vector<4x8xf32>, vector<256x8xf32> -> vector<256x8xf32>
    %26 = arith.addf %20, %25 : vector<256x8xf32>
    %27 = vector.extract_strided_slice %1 {offsets = [1, 1, 0], sizes = [16, 16, 4], strides = [1, 1, 1]} : vector<18x18x4xf32> to vector<16x16x4xf32>
    %28 = vector.shape_cast %27 : vector<16x16x4xf32> to vector<256x4xf32>
    %c1_21 = arith.constant 1 : index
    %c1_22 = arith.constant 1 : index
    %c0_23 = arith.constant 0 : index
    %c0_24 = arith.constant 0 : index
    %29 = vector.load %arg2[%c1_21, %c1_22, %c0_23, %c0_24] : memref<3x3x4x8xf32, #tpu.memory_space<vmem>>, vector<1x1x4x8xf32>
    %30 = vector.shape_cast %29 : vector<1x1x4x8xf32> to vector<4x8xf32>
    %cst_25 = arith.constant dense<0.000000e+00> : vector<256x8xf32>
    %31 = tpu.matmul %28, %30, %cst_25 {dimension_numbers = #tpu.dot_dimension_numbers<[1], [0], [0], [1], [0, 0, 1, 1], [], []>} : vector<256x4xf32>, vector<4x8xf32>, vector<256x8xf32> -> vector<256x8xf32>
    %32 = arith.addf %26, %31 : vector<256x8xf32>
    %33 = vector.extract_strided_slice %1 {offsets = [1, 2, 0], sizes = [16, 16, 4], strides = [1, 1, 1]} : vector<18x18x4xf32> to vector<16x16x4xf32>
    %34 = vector.shape_cast %33 : vector<16x16x4xf32> to vector<256x4xf32>
    %c1_26 = arith.constant 1 : index
    %c2_27 = arith.constant 2 : index
    %c0_28 = arith.constant 0 : index
    %c0_29 = arith.constant 0 : index
    %35 = vector.load %arg2[%c1_26, %c2_27, %c0_28, %c0_29] : memref<3x3x4x8xf32, #tpu.memory_space<vmem>>, vector<1x1x4x8xf32>
    %36 = vector.shape_cast %35 : vector<1x1x4x8xf32> to vector<4x8xf32>
    %cst_30 = arith.constant dense<0.000000e+00> : vector<256x8xf32>
    %37 = tpu.matmul %34, %36, %cst_30 {dimension_numbers = #tpu.dot_dimension_numbers<[1], [0], [0], [1], [0, 0, 1, 1], [], []>} : vector<256x4xf32>, vector<4x8xf32>, vector<256x8xf32> -> vector<256x8xf32>
    %38 = arith.addf %32, %37 : vector<256x8xf32>
    %39 = vector.extract_strided_slice %1 {offsets = [2, 0, 0], sizes = [16, 16, 4], strides = [1, 1, 1]} : vector<18x18x4xf32> to vector<16x16x4xf32>
    %40 = vector.shape_cast %39 : vector<16x16x4xf32> to vector<256x4xf32>
    %c2_31 = arith.constant 2 : index
    %c0_32 = arith.constant 0 : index
    %c0_33 = arith.constant 0 : index
    %c0_34 = arith.constant 0 : index
    %41 = vector.load %arg2[%c2_31, %c0_32, %c0_33, %c0_34] : memref<3x3x4x8xf32, #tpu.memory_space<vmem>>, vector<1x1x4x8xf32>
    %42 = vector.shape_cast %41 : vector<1x1x4x8xf32> to vector<4x8xf32>
    %cst_35 = arith.constant dense<0.000000e+00> : vector<256x8xf32>
    %43 = tpu.matmul %40, %42, %cst_35 {dimension_numbers = #tpu.dot_dimension_numbers<[1], [0], [0], [1], [0, 0, 1, 1], [], []>} : vector<256x4xf32>, vector<4x8xf32>, vector<256x8xf32> -> vector<256x8xf32>
    %44 = arith.addf %38, %43 : vector<256x8xf32>
    %45 = vector.extract_strided_slice %1 {offsets = [2, 1, 0], sizes = [16, 16, 4], strides = [1, 1, 1]} : vector<18x18x4xf32> to vector<16x16x4xf32>
    %46 = vector.shape_cast %45 : vector<16x16x4xf32> to vector<256x4xf32>
    %c2_36 = arith.constant 2 : index
    %c1_37 = arith.constant 1 : index
    %c0_38 = arith.constant 0 : index
    %c0_39 = arith.constant 0 : index
    %47 = vector.load %arg2[%c2_36, %c1_37, %c0_38, %c0_39] : memref<3x3x4x8xf32, #tpu.memory_space<vmem>>, vector<1x1x4x8xf32>
    %48 = vector.shape_cast %47 : vector<1x1x4x8xf32> to vector<4x8xf32>
    %cst_40 = arith.constant dense<0.000000e+00> : vector<256x8xf32>
    %49 = tpu.matmul %46, %48, %cst_40 {dimension_numbers = #tpu.dot_dimension_numbers<[1], [0], [0], [1], [0, 0, 1, 1], [], []>} : vector<256x4xf32>, vector<4x8xf32>, vector<256x8xf32> -> vector<256x8xf32>
    %50 = arith.addf %44, %49 : vector<256x8xf32>
    %51 = vector.extract_strided_slice %1 {offsets = [2, 2, 0], sizes = [16, 16, 4], strides = [1, 1, 1]} : vector<18x18x4xf32> to vector<16x16x4xf32>
    %52 = vector.shape_cast %51 : vector<16x16x4xf32> to vector<256x4xf32>
    %c2_41 = arith.constant 2 : index
    %c2_42 = arith.constant 2 : index
    %c0_43 = arith.constant 0 : index
    %c0_44 = arith.constant 0 : index
    %53 = vector.load %arg2[%c2_41, %c2_42, %c0_43, %c0_44] : memref<3x3x4x8xf32, #tpu.memory_space<vmem>>, vector<1x1x4x8xf32>
    %54 = vector.shape_cast %53 : vector<1x1x4x8xf32> to vector<4x8xf32>
    %cst_45 = arith.constant dense<0.000000e+00> : vector<256x8xf32>
    %55 = tpu.matmul %52, %54, %cst_45 {dimension_numbers = #tpu.dot_dimension_numbers<[1], [0], [0], [1], [0, 0, 1, 1], [], []>} : vector<256x4xf32>, vector<4x8xf32>, vector<256x8xf32> -> vector<256x8xf32>
    %56 = arith.addf %50, %55 : vector<256x8xf32>
    %c0_46 = arith.constant 0 : index
    %c0_47 = arith.constant 0 : index
    %57 = vector.load %arg3[%c0_46, %c0_47] : memref<2x8xf32, #tpu.memory_space<vmem>>, vector<1x8xf32>
    %58 = vector.broadcast %57 : vector<1x8xf32> to vector<256x8xf32>
    %59 = arith.mulf %56, %58 : vector<256x8xf32>
    %c1_48 = arith.constant 1 : index
    %c0_49 = arith.constant 0 : index
    %60 = vector.load %arg3[%c1_48, %c0_49] : memref<2x8xf32, #tpu.memory_space<vmem>>, vector<1x8xf32>
    %61 = vector.broadcast %60 : vector<1x8xf32> to vector<256x8xf32>
    %62 = arith.addf %59, %61 : vector<256x8xf32>
    %cst_50 = arith.constant 0.000000e+00 : f32
    %63 = vector.broadcast %cst_50 : f32 to vector<256x8xf32>
    %64 = arith.cmpf ogt, %62, %63 : vector<256x8xf32>
    %cst_51 = arith.constant 1.000000e-01 : f32
    %65 = vector.broadcast %cst_51 : f32 to vector<256x8xf32>
    %66 = arith.mulf %65, %62 : vector<256x8xf32>
    %67 = arith.select %64, %62, %66 : vector<256x8xi1>, vector<256x8xf32>
    %c0_52 = arith.constant 0 : index
    %c0_53 = arith.constant 0 : index
    %c0_54 = arith.constant 0 : index
    %68 = vector.load %arg4[%c0_52, %c0_53, %c0_54] : memref<1x256x8xf32, #tpu.memory_space<vmem>>, vector<1x256x8xf32>
    %69 = vector.shape_cast %68 : vector<1x256x8xf32> to vector<256x8xf32>
    %70 = vector.shape_cast %67 : vector<256x8xf32> to vector<1x256x8xf32>
    tpu.vector_store %arg4[%c0_52, %c0_53, %c0_54], %70 {strides = array<i32>} : memref<1x256x8xf32, #tpu.memory_space<vmem>>, vector<1x256x8xf32>,
    return
  }
  func.func @transform_0(%arg0: i32) -> (i32, i32, i32, i32) {
    %c0_i32 = arith.constant 0 : i32
    %c0_i32_0 = arith.constant 0 : i32
    %c0_i32_1 = arith.constant 0 : i32
    %c0_i32_2 = arith.constant 0 : i32
    return %arg0, %c0_i32, %c0_i32_0, %c0_i32_1 : i32, i32, i32, i32
  }
  func.func @transform_1(%arg0: i32) -> (i32, i32, i32, i32) {
    %c0_i32 = arith.constant 0 : i32
    %c0_i32_0 = arith.constant 0 : i32
    %c0_i32_1 = arith.constant 0 : i32
    %c0_i32_2 = arith.constant 0 : i32
    %c0_i32_3 = arith.constant 0 : i32
    return %c0_i32, %c0_i32_0, %c0_i32_1, %c0_i32_2 : i32, i32, i32, i32
  }
  func.func @transform_2(%arg0: i32) -> (i32, i32) {
    %c0_i32 = arith.constant 0 : i32
    %c0_i32_0 = arith.constant 0 : i32
    %c0_i32_1 = arith.constant 0 : i32
    return %c0_i32, %c0_i32_0 : i32, i32
  }
  func.func @transform_3(%arg0: i32) -> (i32, i32, i32) {
    %c0_i32 = arith.constant 0 : i32
    %c0_i32_0 = arith.constant 0 : i32
    %c0_i32_1 = arith.constant 0 : i32
    return %arg0, %c0_i32, %c0_i32_0 : i32, i32, i32
  }
}

</mosaic_0001>

<llo_original>
// kernel: cnn_unit_forward.2
$region0: #{cnn_unit_forward.2}
  #allocation0 [shape = 'u32[]', space=smem, size = 0x4, offset = 0x4, fixed_abs, tag = 'smem constant byte address 0x4 - core index']
  #allocation1 [shape = 'u32[72,128]{1,0:T(1,128)}', space=vmem, size = 0x9000, scoped, tag = 'internal scratch']
  %s0 = inlined_call_operand.vmem [shape: f32[2,18,18,4], index: 0, kind: input, shape index: {}]
  %s1 = inlined_call_operand.vmem [shape: f32[3,3,4,8], index: 1, kind: input, shape index: {}]
  %s2 = inlined_call_operand.vmem [shape: f32[2,2,8], index: 2, kind: output, shape index: {}]
  %s3 = sld [smem:[#allocation0]]
  $region45: #{cnn_unit_forward.2} parent=0
    _
  %s5 = ssub.s32 1, %s3
  %s6 = scalar_select 0, %s5, %s3
  loop: start=0, step=1, limit=4
  $region2: #{cnn_unit_forward.2} parent=0 // loop_pre_header
    _
  $region3: #{cnn_unit_forward.2} parent=0 // loop_header
    %s8 = sphi 0, %s12
    %p9 = scmp.ge.s32.totalorder %s8, 4
    %s15 = sphi 0, %s27
    %s16 = sphi 0, %s23
    %s17 = sphi 0, %s15
    %s18 = sphi 0, %s16
    %s19 = sphi 0, %s17
    %s20 = sphi 0, %s18
    %s32 = sphi 0, %s34
    %s35 = sphi 0, %s32
    %s36 = sphi 0, %s35
    %s52 = sphi 0, %s36
    %s56 = sphi 0, %s56
    %s58 = sphi 0, %s56
    %s59 = sphi 0, %s58
    %s73 = sphi 0, %s59
    %s79 = sphi 0, %s81
    %s82 = sphi 0, %s79
    %s83 = sphi 0, %s82
    %s99 = sphi 0, %s83
  $region4: #{cnn_unit_forward.2} parent=0 // loop_header_branch
    %11 = sbr.rel (%p9) target = $region8
  $region5: #{cnn_unit_forward.2} parent=0 // loop_body
    %s13 = ssub.s32 %s8, 1
    %s14 = ssub.s32 %s8, 2
    %s21 = sadd.s32 1, %s16
    %p22 = scmp.ge.s32.totalorder %s21, 1
    %s23 = scalar_select %p22, 0, %s21
    %s24 = sadd.s32 1, %s15
    %s25 = scalar_select %p22, %s24, %s15
    %p26 = scmp.ge.s32.totalorder %s25, 2
    %s27 = scalar_select %p26, 0, %s25
    %s28 = sadd.s32 %s15, %s16
    %s29 = sadd.s32 %s27, %s23
    %s30 = ssub.s32 %s28, %s29
    %p31 = scmp.eq.s32.totalorder %s30, 0
    %s33 = sadd.s32 %s32, 1
    %s34 = scalar_select %p31, %s32, %s33
    %p37 = pneg %p31
    %p38 = scmp.eq.s32.totalorder %s8, 1
    %p39 = por %p37, %p38
    %p40 = scmp.ne.s32.totalorder %s32, %s35
    %p41 = scmp.eq.s32.totalorder %s8, 0
    %p42 = por %p40, %p41
    %p43 = scmp.ne.s32.totalorder %s32, %s35
    %p44 = scmp.eq.s32.totalorder %s13, 1
    %p45 = por %p43, %p44
    %p46 = scmp.ne.s32.totalorder %s35, %s36
    %p47 = scmp.eq.s32.totalorder %s13, 0
    %p48 = por %p46, %p47
    %p49 = scmp.ne.s32.totalorder %s35, %s36
    %p50 = scmp.eq.s32.totalorder %s14, 1
    %p51 = por %p49, %p50
    %p53 = scmp.ne.s32.totalorder %s36, %s52
    %p54 = scmp.eq.s32.totalorder %s14, 0
    %p55 = por %p53, %p54
    %s57 = sadd.s32 %s56, 1
    %p60 = scmp.eq.s32.totalorder %s8, 1
    %p61 = scmp.ne.s32.totalorder %s56, %s58
    %p62 = scmp.eq.s32.totalorder %s8, 0
    %p63 = por %p61, %p62
    %p64 = scmp.ne.s32.totalorder %s56, %s58
    %p65 = scmp.eq.s32.totalorder %s13, 1
    %p66 = por %p64, %p65
    %p67 = scmp.ne.s32.totalorder %s58, %s59
    %p68 = scmp.eq.s32.totalorder %s13, 0
    %p69 = por %p67, %p68
    %p70 = scmp.ne.s32.totalorder %s58, %s59
    %p71 = scmp.eq.s32.totalorder %s14, 1
    %p72 = por %p70, %p71
    %p74 = scmp.ne.s32.totalorder %s59, %s73
    %p75 = scmp.eq.s32.totalorder %s14, 0
    %p76 = por %p74, %p75
    %s77 = ssub.s32 %s15, %s27
    %p78 = scmp.eq.s32.totalorder %s77, 0
    %s80 = sadd.s32 %s79, 1
    %s81 = scalar_select %p78, %s79, %s80
    %p84 = pneg %p78
    %p85 = scmp.eq.s32.totalorder %s8, 1
    %p86 = por %p84, %p85
    %p87 = scmp.ne.s32.totalorder %s79, %s82
    %p88 = scmp.eq.s32.totalorder %s8, 0
    %p89 = por %p87, %p88
    %p90 = scmp.ne.s32.totalorder %s79, %s82
    %p91 = scmp.eq.s32.totalorder %s13, 1
    %p92 = por %p90, %p91
    %p93 = scmp.ne.s32.totalorder %s82, %s83
    %p94 = scmp.eq.s32.totalorder %s13, 0
    %p95 = por %p93, %p94
    %p96 = scmp.ne.s32.totalorder %s82, %s83
    %p97 = scmp.eq.s32.totalorder %s14, 1
    %p98 = por %p96, %p97
    %p100 = scmp.ne.s32.totalorder %s83, %s99
    %p101 = scmp.eq.s32.totalorder %s14, 0
    %p102 = por %p100, %p101
    %p103 = scmp.le.s32.totalorder 1, %s8
    %p104 = scmp.lt.s32.totalorder %s8, 3
    %p105 = pnand %p103, %p104
    %p106 = pneg %p105
    // Predicated region
    $region9: #{cnn_unit_forward.2} parent=5 // pred_check
      _
    $region10: #{cnn_unit_forward.2} parent=5 // pred_check_branch
      %108 = sbr.rel (%p105) target = $region12
    $region11: #{cnn_unit_forward.2} parent=5 // pred_region
      %s109 = ssub.s32 %s8, 1
      // Predicated region
      $region13: #{cnn_unit_forward.2} parent=11 // pred_check
        %p110 = pneg %p69
      $region14: #{cnn_unit_forward.2} parent=11 // pred_check_branch
        %112 = sbr.rel (%p110) target = $region16
      $region15: #{cnn_unit_forward.2} parent=11 // pred_region
        _
      $region16: #{cnn_unit_forward.2} parent=11 // pred_fallthru
        _
    $region12: #{cnn_unit_forward.2} parent=5 // pred_fallthru
      _
    %p113 = scmp.lt.s32.totalorder %s8, 2
    // Predicated region
    $region17: #{cnn_unit_forward.2} parent=5 // pred_check
      %p114 = pneg %p113
    $region18: #{cnn_unit_forward.2} parent=5 // pred_check_branch
      %116 = sbr.rel (%p114) target = $region20
    $region19: #{cnn_unit_forward.2} parent=5 // pred_region
      // Predicated region
      $region21: #{cnn_unit_forward.2} parent=19 // pred_check
        %p117 = pneg %p42
      $region22: #{cnn_unit_forward.2} parent=19 // pred_check_branch
        %119 = sbr.rel (%p117) target = $region24
      $region23: #{cnn_unit_forward.2} parent=19 // pred_region
        %s120 = sadd.s32 %s15, %s16
        %p121 = scmp.lt.s32.totalorder %s120, 1
        %s122 = scalar_select %p121, %s120, 1
        %s123 = smul.addr %s122, 54
        %s124 = smul.addr %s123, 8
        %s125 = scalar_lea.vmem %s0, %s124
        %s126 = sadd.s32 %s15, %s16
      $region24: #{cnn_unit_forward.2} parent=19 // pred_fallthru
        _
    $region20: #{cnn_unit_forward.2} parent=5 // pred_fallthru
      _
    %p127 = scmp.le.s32.totalorder 1, %s8
    %p128 = scmp.lt.s32.totalorder %s8, 3
    %p129 = pnand %p127, %p128
    %p130 = pneg %p129
    // Predicated region
    $region25: #{cnn_unit_forward.2} parent=5 // pred_check
      _
    $region26: #{cnn_unit_forward.2} parent=5 // pred_check_branch
      %132 = sbr.rel (%p129) target = $region28
    $region27: #{cnn_unit_forward.2} parent=5 // pred_region
      %s133 = ssub.s32 %s8, 1
      %s134 = sadd.s32 %s17, %s18
      %p135 = scmp.lt.s32.totalorder %s134, 1
      %s136 = scalar_select %p135, %s134, 1
      %s137 = smul.addr %s136, 54
      %s138 = smul.addr %s137, 8
      %s139 = scalar_lea.vmem %s0, %s138
      %p140 = pneg %p48
      %p141 = pneg %p45
      %p142 = pneg %p69
      %p143 = pneg %p66
      %p144 = pneg %p95
      %p145 = pneg %p92
      %p146 = scmp.lt.s32.totalorder %s17, 1
      %s147 = scalar_select %p146, %s17, 1
      %s148 = smul.addr %s147, 2
      %s149 = scalar_lea.vmem %s2, %s148
      %s150 = sadd.s32 %s17, %s18
      %p151 = scmp.lt.s32.totalorder %s150, 1
      %s152 = scalar_select %p151, %s150, 1
      %s153 = smul.addr %s152, 54
      %s154 = smul.addr %s153, 8
      %s155 = scalar_lea.vmem %s0, %s154
      %s156 = sadd.s32 %s17, %s18
      %p157 = scmp.lt.s32.totalorder %s17, 1
      %s158 = scalar_select %p157, %s17, 1
      %s159 = smul.addr %s158, 2
      %s160 = scalar_lea.vmem %s2, %s159
      %p161 = scmp.eq.s32.totalorder %s18, 0
      // Predicated region
      $region29: #{cnn_unit_forward.2} parent=27 // pred_check
        %p162 = pneg %p161
      $region30: #{cnn_unit_forward.2} parent=27 // pred_check_branch
        %164 = sbr.rel (%p162) target = $region32
      $region31: #{cnn_unit_forward.2} parent=27 // pred_region
        %vm165 = vcmask 58368
        %166 = vst.msk [vmem:[%s160] sm:$0x3] %vm165, 0.0
      $region32: #{cnn_unit_forward.2} parent=27 // pred_fallthru
        _
      %v167 = vld [vmem:[%s155] sm:$0xff]
      %v168 = vld [vmem:[%s155 + $0x8] sm:$0xff]
      %v169 = vld [vmem:[%s155 + $0x10] sm:$0x3]
      %v170 = vld [vmem:[%s155 + $0x18] sm:$0xff]
      %v171 = vld [vmem:[%s155 + $0x20] sm:$0xff]
      %v172 = vld [vmem:[%s155 + $0x28] sm:$0x3]
      %v173 = vld [vmem:[%s155 + $0x30] sm:$0xff]
      %v174 = vld [vmem:[%s155 + $0x38] sm:$0xff]
      %v175 = vld [vmem:[%s155 + $0x40] sm:$0x3]
      %v176 = vld [vmem:[%s155 + $0x48] sm:$0xff]
      %v177 = vld [vmem:[%s155 + $0x50] sm:$0xff]
      %v178 = vld [vmem:[%s155 + $0x58] sm:$0x3]
      %v179 = vld [vmem:[%s155 + $0x60] sm:$0xff]
      %v180 = vld [vmem:[%s155 + $0x68] sm:$0xff]
      %v181 = vld [vmem:[%s155 + $0x70] sm:$0x3]
      %v182 = vld [vmem:[%s155 + $0x78] sm:$0xff]
      %v183 = vld [vmem:[%s155 + $0x80] sm:$0xff]
      %v184 = vld [vmem:[%s155 + $0x88] sm:$0x3]
      %v185 = vld [vmem:[%s155 + $0x90] sm:$0xff]
      %v186 = vld [vmem:[%s155 + $0x98] sm:$0xff]
      %v187 = vld [vmem:[%s155 + $0xa0] sm:$0x3]
      %v188 = vld [vmem:[%s155 + $0xa8] sm:$0xff]
      %v189 = vld [vmem:[%s155 + $0xb0] sm:$0xff]
      %v190 = vld [vmem:[%s155 + $0xb8] sm:$0x3]
      %v191 = vld [vmem:[%s155 + $0xc0] sm:$0xff]
      %v192 = vld [vmem:[%s155 + $0xc8] sm:$0xff]
      %v193 = vld [vmem:[%s155 + $0xd0] sm:$0x3]
      %v194 = vld [vmem:[%s155 + $0xd8] sm:$0xff]
      %v195 = vld [vmem:[%s155 + $0xe0] sm:$0xff]
      %v196 = vld [vmem:[%s155 + $0xe8] sm:$0x3]
      %v197 = vld [vmem:[%s155 + $0xf0] sm:$0xff]
      %v198 = vld [vmem:[%s155 + $0xf8] sm:$0xff]
      %v199 = vld [vmem:[%s155 + $0x100] sm:$0x3]
      %v200 = vld [vmem:[%s155 + $0x108] sm:$0xff]
      %v201 = vld [vmem:[%s155 + $0x110] sm:$0xff]
      %v202 = vld [vmem:[%s155 + $0x118] sm:$0x3]
      %v203 = vld [vmem:[%s155 + $0x120] sm:$0xff]
      %v204 = vld [vmem:[%s155 + $0x128] sm:$0xff]
      %v205 = vld [vmem:[%s155 + $0x130] sm:$0x3]
      %v206 = vld [vmem:[%s155 + $0x138] sm:$0xff]
      %v207 = vld [vmem:[%s155 + $0x140] sm:$0xff]
      %v208 = vld [vmem:[%s155 + $0x148] sm:$0x3]
      %v209 = vld [vmem:[%s155 + $0x150] sm:$0xff]
      %v210 = vld [vmem:[%s155 + $0x158] sm:$0xff]
      %v211 = vld [vmem:[%s155 + $0x160] sm:$0x3]
      %v212 = vld [vmem:[%s155 + $0x168] sm:$0xff]
      %v213 = vld [vmem:[%s155 + $0x170] sm:$0xff]
      %v214 = vld [vmem:[%s155 + $0x178] sm:$0x3]
      %v215 = vld [vmem:[%s155 + $0x180] sm:$0xff]
      %v216 = vld [vmem:[%s155 + $0x188] sm:$0xff]
      %v217 = vld [vmem:[%s155 + $0x190] sm:$0x3]
      %v218 = vld [vmem:[%s155 + $0x198] sm:$0xff]
      %v219 = vld [vmem:[%s155 + $0x1a0] sm:$0xff]
      %v220 = vld [vmem:[%s155 + $0x1a8] sm:$0x3]
      %v221 = vld [vmem:[%s1] sm:$0xf]
      %vm270 = vcmask 1046528
      %v271 = vrot.slane %v167, 1
      %v272 = vrot.slane %v168, 1
      %v273 = vsel %vm270, %v271, %v272
      %v274 = vrot.slane %v169, 1
      %v275 = vsel %vm270, %v272, %v274
      %v276 = vrot.slane %v170, 1
      %v277 = vrot.slane %v171, 1
      %v278 = vsel %vm270, %v276, %v277
      %v279 = vrot.slane %v172, 1
      %v280 = vsel %vm270, %v277, %v279
      %v281 = vrot.slane %v173, 1
      %v282 = vrot.slane %v174, 1
      %v283 = vsel %vm270, %v281, %v282
      %v284 = vrot.slane %v175, 1
      %v285 = vsel %vm270, %v282, %v284
      %v286 = vrot.slane %v176, 1
      %v287 = vrot.slane %v177, 1
      %v288 = vsel %vm270, %v286, %v287
      %v289 = vrot.slane %v178, 1
      %v290 = vsel %vm270, %v287, %v289
      %v291 = vrot.slane %v179, 1
      %v292 = vrot.slane %v180, 1
      %v293 = vsel %vm270, %v291, %v292
      %v294 = vrot.slane %v181, 1
      %v295 = vsel %vm270, %v292, %v294
      %v296 = vrot.slane %v182, 1
      %v297 = vrot.slane %v183, 1
      %v298 = vsel %vm270, %v296, %v297
      %v299 = vrot.slane %v184, 1
      %v300 = vsel %vm270, %v297, %v299
      %v301 = vrot.slane %v185, 1
      %v302 = vrot.slane %v186, 1
      %v303 = vsel %vm270, %v301, %v302
      %v304 = vrot.slane %v187, 1
      %v305 = vsel %vm270, %v302, %v304
      %v306 = vrot.slane %v188, 1
      %v307 = vrot.slane %v189, 1
      %v308 = vsel %vm270, %v306, %v307
      %v309 = vrot.slane %v190, 1
      %v310 = vsel %vm270, %v307, %v309
      %v311 = vrot.slane %v191, 1
      %v312 = vrot.slane %v192, 1
      %v313 = vsel %vm270, %v311, %v312
      %v314 = vrot.slane %v193, 1
      %v315 = vsel %vm270, %v312, %v314
      %v316 = vrot.slane %v194, 1
      %v317 = vrot.slane %v195, 1
      %v318 = vsel %vm270, %v316, %v317
      %v319 = vrot.slane %v196, 1
      %v320 = vsel %vm270, %v317, %v319
      %v321 = vrot.slane %v197, 1
      %v322 = vrot.slane %v198, 1
      %v323 = vsel %vm270, %v321, %v322
      %v324 = vrot.slane %v199, 1
      %v325 = vsel %vm270, %v322, %v324
      %v326 = vrot.slane %v200, 1
      %v327 = vrot.slane %v201, 1
      %v328 = vsel %vm270, %v326, %v327
      %v329 = vrot.slane %v202, 1
      %v330 = vsel %vm270, %v327, %v329
      %v331 = vrot.slane %v203, 1
      %v332 = vrot.slane %v204, 1
      %v333 = vsel %vm270, %v331, %v332
      %v334 = vrot.slane %v205, 1
      %v335 = vsel %vm270, %v332, %v334
      %v336 = vrot.slane %v206, 1
      %v337 = vrot.slane %v207, 1
      %v338 = vsel %vm270, %v336, %v337
      %v339 = vrot.slane %v208, 1
      %v340 = vsel %vm270, %v337, %v339
      %v341 = vrot.slane %v209, 1
      %v342 = vrot.slane %v210, 1
      %v343 = vsel %vm270, %v341, %v342
      %v344 = vrot.slane %v211, 1
      %v345 = vsel %vm270, %v342, %v344
      %v346 = vrot.slane %v212, 1
      %v347 = vrot.slane %v213, 1
      %v348 = vsel %vm270, %v346, %v347
      %v349 = vrot.slane %v214, 1
      %v350 = vsel %vm270, %v347, %v349
      %s351 = scalar_lea.vmem %s1, 4
      %v352 = vld [vmem:[%s351] sm:$0xf]
      %vm353 = vcmask 31744
      %v354 = vsel %vm353, %v273, 0
      %v356 = vsel %vm353, %v275, 0
      %v358 = vsel %vm353, %v278, 0
      %v360 = vsel %vm353, %v280, 0
      %v362 = vsel %vm353, %v283, 0
      %v364 = vsel %vm353, %v285, 0
      %v366 = vsel %vm353, %v288, 0
      %v368 = vsel %vm353, %v290, 0
      %v370 = vsel %vm353, %v293, 0
      %v372 = vsel %vm353, %v295, 0
      %v374 = vsel %vm353, %v298, 0
      %v376 = vsel %vm353, %v300, 0
      %v378 = vsel %vm353, %v303, 0
      %v380 = vsel %vm353, %v305, 0
      %v382 = vsel %vm353, %v308, 0
      %v384 = vsel %vm353, %v310, 0
      %v386 = vsel %vm353, %v313, 0
      %v388 = vsel %vm353, %v315, 0
      %v390 = vsel %vm353, %v318, 0
      %v392 = vsel %vm353, %v320, 0
      %v394 = vsel %vm353, %v323, 0
      %v396 = vsel %vm353, %v325, 0
      %v398 = vsel %vm353, %v328, 0
      %v400 = vsel %vm353, %v330, 0
      %v402 = vsel %vm353, %v333, 0
      %v404 = vsel %vm353, %v335, 0
      %v406 = vsel %vm353, %v338, 0
      %v408 = vsel %vm353, %v340, 0
      %v410 = vsel %vm353, %v343, 0
      %v412 = vsel %vm353, %v345, 0
      %v414 = vsel %vm353, %v348, 0
      %v416 = vsel %vm353, %v350, 0
      %vm418 = vcmask 1043456
      %v420 = vsel %vm418, %v352, 0
      %422 = vmatpush.msra.mxu0 0.0
      %423 = vmatpush.msra.mxu0 0.0
      %424 = vmatpush.msra.mxu0 0.0
      %425 = vmatpush.msra.mxu0 0.0
      %426 = vmatpush.msra.mxu0 0.0
      %427 = vmatpush.msra.mxu0 0.0
      %428 = vmatpush.msra.mxu0 0.0
      %429 = vmatpush.msra.mxu0 0.0
      %430 = vmatpush.msra.mxu0 0.0
      %431 = vmatpush.msra.mxu0 0.0
      %432 = vmatpush.msra.mxu0 0.0
      %433 = vmatpush.msra.mxu0 0.0
      %434 = vmatpush.msra.mxu0 0.0
      %435 = vmatpush.msra.mxu0 0.0
      %436 = vmatpush.msra.mxu0 0.0
      %437 = vmatpush.msra.mxu0 %v420
      %438 = vmatmul.f32.gmra.mxu0 %v354
      %v439 = vpop.f32.mrf.mxu0
      %v440 = vadd.f32 0.0, %v439
      %441 = vmatmul.f32.gmra.mxu0 %v356
      %v442 = vpop.f32.mrf.mxu0
      %v443 = vadd.f32 0.0, %v442
      %444 = vmatmul.f32.gmra.mxu0 %v358
      %v445 = vpop.f32.mrf.mxu0
      %v446 = vadd.f32 0.0, %v445
      %447 = vmatmul.f32.gmra.mxu0 %v360
      %v448 = vpop.f32.mrf.mxu0
      %v449 = vadd.f32 0.0, %v448
      %450 = vmatmul.f32.gmra.mxu0 %v362
      %v451 = vpop.f32.mrf.mxu0
      %v452 = vadd.f32 0.0, %v451
      %453 = vmatmul.f32.gmra.mxu0 %v364
      %v454 = vpop.f32.mrf.mxu0
      %v455 = vadd.f32 0.0, %v454
      %456 = vmatmul.f32.gmra.mxu0 %v366
      %v457 = vpop.f32.mrf.mxu0
      %v458 = vadd.f32 0.0, %v457
      %459 = vmatmul.f32.gmra.mxu0 %v368
      %v460 = vpop.f32.mrf.mxu0
      %v461 = vadd.f32 0.0, %v460
      %462 = vmatmul.f32.gmra.mxu0 %v370
      %v463 = vpop.f32.mrf.mxu0
      %v464 = vadd.f32 0.0, %v463
      %465 = vmatmul.f32.gmra.mxu0 %v372
      %v466 = vpop.f32.mrf.mxu0
      %v467 = vadd.f32 0.0, %v466
      %468 = vmatmul.f32.gmra.mxu0 %v374
      %v469 = vpop.f32.mrf.mxu0
      %v470 = vadd.f32 0.0, %v469
      %471 = vmatmul.f32.gmra.mxu0 %v376
      %v472 = vpop.f32.mrf.mxu0
      %v473 = vadd.f32 0.0, %v472
      %474 = vmatmul.f32.gmra.mxu0 %v378
      %v475 = vpop.f32.mrf.mxu0
      %v476 = vadd.f32 0.0, %v475
      %477 = vmatmul.f32.gmra.mxu0 %v380
      %v478 = vpop.f32.mrf.mxu0
      %v479 = vadd.f32 0.0, %v478
      %480 = vmatmul.f32.gmra.mxu0 %v382
      %v481 = vpop.f32.mrf.mxu0
      %v482 = vadd.f32 0.0, %v481
      %483 = vmatmul.f32.gmra.mxu0 %v384
      %v484 = vpop.f32.mrf.mxu0
      %v485 = vadd.f32 0.0, %v484
      %486 = vmatmul.f32.gmra.mxu0 %v386
      %v487 = vpop.f32.mrf.mxu0
      %v488 = vadd.f32 0.0, %v487
      %489 = vmatmul.f32.gmra.mxu0 %v388
      %v490 = vpop.f32.mrf.mxu0
      %v491 = vadd.f32 0.0, %v490
      %492 = vmatmul.f32.gmra.mxu0 %v390
      %v493 = vpop.f32.mrf.mxu0
      %v494 = vadd.f32 0.0, %v493
      %495 = vmatmul.f32.gmra.mxu0 %v392
      %v496 = vpop.f32.mrf.mxu0
      %v497 = vadd.f32 0.0, %v496
      %498 = vmatmul.f32.gmra.mxu0 %v394
      %v499 = vpop.f32.mrf.mxu0
      %v500 = vadd.f32 0.0, %v499
      %501 = vmatmul.f32.gmra.mxu0 %v396
      %v502 = vpop.f32.mrf.mxu0
      %v503 = vadd.f32 0.0, %v502
      %504 = vmatmul.f32.gmra.mxu0 %v398
      %v505 = vpop.f32.mrf.mxu0
      %v506 = vadd.f32 0.0, %v505
      %507 = vmatmul.f32.gmra.mxu0 %v400
      %v508 = vpop.f32.mrf.mxu0
      %v509 = vadd.f32 0.0, %v508
      %510 = vmatmul.f32.gmra.mxu0 %v402
      %v511 = vpop.f32.mrf.mxu0
      %v512 = vadd.f32 0.0, %v511
      %513 = vmatmul.f32.gmra.mxu0 %v404
      %v514 = vpop.f32.mrf.mxu0
      %v515 = vadd.f32 0.0, %v514
      %516 = vmatmul.f32.gmra.mxu0 %v406
      %v517 = vpop.f32.mrf.mxu0
      %v518 = vadd.f32 0.0, %v517
      %519 = vmatmul.f32.gmra.mxu0 %v408
      %v520 = vpop.f32.mrf.mxu0
      %v521 = vadd.f32 0.0, %v520
      %522 = vmatmul.f32.gmra.mxu0 %v410
      %v523 = vpop.f32.mrf.mxu0
      %v524 = vadd.f32 0.0, %v523
      %525 = vmatmul.f32.gmra.mxu0 %v412
      %v526 = vpop.f32.mrf.mxu0
      %v527 = vadd.f32 0.0, %v526
      %528 = vmatmul.f32.gmra.mxu0 %v414
      %v529 = vpop.f32.mrf.mxu0
      %v530 = vadd.f32 0.0, %v529
      %531 = vmatmul.f32.gmra.mxu0 %v416
      %v532 = vpop.f32.mrf.mxu0
      %v533 = vadd.f32 0.0, %v532
      %534 = vdwg.mxu0
      %v535 = vsel %vm353, %v167, 0
      %v537 = vsel %vm353, %v168, 0
      %v539 = vsel %vm353, %v170, 0
      %v541 = vsel %vm353, %v171, 0
      %v543 = vsel %vm353, %v173, 0
      %v545 = vsel %vm353, %v174, 0
      %v547 = vsel %vm353, %v176, 0
      %v549 = vsel %vm353, %v177, 0
      %v551 = vsel %vm353, %v179, 0
      %v553 = vsel %vm353, %v180, 0
      %v555 = vsel %vm353, %v182, 0
      %v557 = vsel %vm353, %v183, 0
      %v559 = vsel %vm353, %v185, 0
      %v561 = vsel %vm353, %v186, 0
      %v563 = vsel %vm353, %v188, 0
      %v565 = vsel %vm353, %v189, 0
      %v567 = vsel %vm353, %v191, 0
      %v569 = vsel %vm353, %v192, 0
      %v571 = vsel %vm353, %v194, 0
      %v573 = vsel %vm353, %v195, 0
      %v575 = vsel %vm353, %v197, 0
      %v577 = vsel %vm353, %v198, 0
      %v579 = vsel %vm353, %v200, 0
      %v581 = vsel %vm353, %v201, 0
      %v583 = vsel %vm353, %v203, 0
      %v585 = vsel %vm353, %v204, 0
      %v587 = vsel %vm353, %v206, 0
      %v589 = vsel %vm353, %v207, 0
      %v591 = vsel %vm353, %v209, 0
      %v593 = vsel %vm353, %v210, 0
      %v595 = vsel %vm353, %v212, 0
      %v597 = vsel %vm353, %v213, 0
      %v600 = vsel %vm418, %v221, 0
      %602 = vmatpush.msra.mxu0 0.0
      %603 = vmatpush.msra.mxu0 0.0
      %604 = vmatpush.msra.mxu0 0.0
      %605 = vmatpush.msra.mxu0 0.0
      %606 = vmatpush.msra.mxu0 0.0
      %607 = vmatpush.msra.mxu0 0.0
      %608 = vmatpush.msra.mxu0 0.0
      %609 = vmatpush.msra.mxu0 0.0
      %610 = vmatpush.msra.mxu0 0.0
      %611 = vmatpush.msra.mxu0 0.0
      %612 = vmatpush.msra.mxu0 0.0
      %613 = vmatpush.msra.mxu0 0.0
      %614 = vmatpush.msra.mxu0 0.0
      %615 = vmatpush.msra.mxu0 0.0
      %616 = vmatpush.msra.mxu0 0.0
      %617 = vmatpush.msra.mxu0 %v600
      %618 = vmatmul.f32.gmra.mxu0 %v535
      %v619 = vpop.f32.mrf.mxu0
      %v620 = vadd.f32 %v440, %v619
      %621 = vmatmul.f32.gmra.mxu0 %v537
      %v622 = vpop.f32.mrf.mxu0
      %v623 = vadd.f32 %v443, %v622
      %624 = vmatmul.f32.gmra.mxu0 %v539
      %v625 = vpop.f32.mrf.mxu0
      %v626 = vadd.f32 %v446, %v625
      %627 = vmatmul.f32.gmra.mxu0 %v541
      %v628 = vpop.f32.mrf.mxu0
      %v629 = vadd.f32 %v449, %v628
      %630 = vmatmul.f32.gmra.mxu0 %v543
      %v631 = vpop.f32.mrf.mxu0
      %v632 = vadd.f32 %v452, %v631
      %633 = vmatmul.f32.gmra.mxu0 %v545
      %v634 = vpop.f32.mrf.mxu0
      %v635 = vadd.f32 %v455, %v634
      %636 = vmatmul.f32.gmra.mxu0 %v547
      %v637 = vpop.f32.mrf.mxu0
      %v638 = vadd.f32 %v458, %v637
      %639 = vmatmul.f32.gmra.mxu0 %v549
      %v640 = vpop.f32.mrf.mxu0
      %v641 = vadd.f32 %v461, %v640
      %642 = vmatmul.f32.gmra.mxu0 %v551
      %v643 = vpop.f32.mrf.mxu0
      %v644 = vadd.f32 %v464, %v643
      %645 = vmatmul.f32.gmra.mxu0 %v553
      %v646 = vpop.f32.mrf.mxu0
      %v647 = vadd.f32 %v467, %v646
      %648 = vmatmul.f32.gmra.mxu0 %v555
      %v649 = vpop.f32.mrf.mxu0
      %v650 = vadd.f32 %v470, %v649
      %651 = vmatmul.f32.gmra.mxu0 %v557
      %v652 = vpop.f32.mrf.mxu0
      %v653 = vadd.f32 %v473, %v652
      %654 = vmatmul.f32.gmra.mxu0 %v559
      %v655 = vpop.f32.mrf.mxu0
      %v656 = vadd.f32 %v476, %v655
      %657 = vmatmul.f32.gmra.mxu0 %v561
      %v658 = vpop.f32.mrf.mxu0
      %v659 = vadd.f32 %v479, %v658
      %660 = vmatmul.f32.gmra.mxu0 %v563
      %v661 = vpop.f32.mrf.mxu0
      %v662 = vadd.f32 %v482, %v661
      %663 = vmatmul.f32.gmra.mxu0 %v565
      %v664 = vpop.f32.mrf.mxu0
      %v665 = vadd.f32 %v485, %v664
      %666 = vmatmul.f32.gmra.mxu0 %v567
      %v667 = vpop.f32.mrf.mxu0
      %v668 = vadd.f32 %v488, %v667
      %669 = vmatmul.f32.gmra.mxu0 %v569
      %v670 = vpop.f32.mrf.mxu0
      %v671 = vadd.f32 %v491, %v670
      %672 = vmatmul.f32.gmra.mxu0 %v571
      %v673 = vpop.f32.mrf.mxu0
      %v674 = vadd.f32 %v494, %v673
      %675 = vmatmul.f32.gmra.mxu0 %v573
      %v676 = vpop.f32.mrf.mxu0
      %v677 = vadd.f32 %v497, %v676
      %678 = vmatmul.f32.gmra.mxu0 %v575
      %v679 = vpop.f32.mrf.mxu0
      %v680 = vadd.f32 %v500, %v679
      %681 = vmatmul.f32.gmra.mxu0 %v577
      %v682 = vpop.f32.mrf.mxu0
      %v683 = vadd.f32 %v503, %v682
      %684 = vmatmul.f32.gmra.mxu0 %v579
      %v685 = vpop.f32.mrf.mxu0
      %v686 = vadd.f32 %v506, %v685
      %687 = vmatmul.f32.gmra.mxu0 %v581
      %v688 = vpop.f32.mrf.mxu0
      %v689 = vadd.f32 %v509, %v688
      %690 = vmatmul.f32.gmra.mxu0 %v583
      %v691 = vpop.f32.mrf.mxu0
      %v692 = vadd.f32 %v512, %v691
      %693 = vmatmul.f32.gmra.mxu0 %v585
      %v694 = vpop.f32.mrf.mxu0
      %v695 = vadd.f32 %v515, %v694
      %696 = vmatmul.f32.gmra.mxu0 %v587
      %v697 = vpop.f32.mrf.mxu0
      %v698 = vadd.f32 %v518, %v697
      %699 = vmatmul.f32.gmra.mxu0 %v589
      %v700 = vpop.f32.mrf.mxu0
      %v701 = vadd.f32 %v521, %v700
      %702 = vmatmul.f32.gmra.mxu0 %v591
      %v703 = vpop.f32.mrf.mxu0
      %v704 = vadd.f32 %v524, %v703
      %705 = vmatmul.f32.gmra.mxu0 %v593
      %v706 = vpop.f32.mrf.mxu0
      %v707 = vadd.f32 %v527, %v706
      %708 = vmatmul.f32.gmra.mxu0 %v595
      %v709 = vpop.f32.mrf.mxu0
      %v710 = vadd.f32 %v530, %v709
      %711 = vmatmul.f32.gmra.mxu0 %v597
      %v712 = vpop.f32.mrf.mxu0
      %v713 = vadd.f32 %v533, %v712
      %714 = vdwg.mxu0
      %vm715 = vcmask 1045504
      %v716 = vrot.slane %v167, 2
      %v717 = vrot.slane %v168, 2
      %v718 = vsel %vm715, %v716, %v717
      %v719 = vrot.slane %v169, 2
      %v720 = vsel %vm715, %v717, %v719
      %v721 = vrot.slane %v170, 2
      %v722 = vrot.slane %v171, 2
      %v723 = vsel %vm715, %v721, %v722
      %v724 = vrot.slane %v172, 2
      %v725 = vsel %vm715, %v722, %v724
      %v726 = vrot.slane %v173, 2
      %v727 = vrot.slane %v174, 2
      %v728 = vsel %vm715, %v726, %v727
      %v729 = vrot.slane %v175, 2
      %v730 = vsel %vm715, %v727, %v729
      %v731 = vrot.slane %v176, 2
      %v732 = vrot.slane %v177, 2
      %v733 = vsel %vm715, %v731, %v732
      %v734 = vrot.slane %v178, 2
      %v735 = vsel %vm715, %v732, %v734
      %v736 = vrot.slane %v179, 2
      %v737 = vrot.slane %v180, 2
      %v738 = vsel %vm715, %v736, %v737
      %v739 = vrot.slane %v181, 2
      %v740 = vsel %vm715, %v737, %v739
      %v741 = vrot.slane %v182, 2
      %v742 = vrot.slane %v183, 2
      %v743 = vsel %vm715, %v741, %v742
      %v744 = vrot.slane %v184, 2
      %v745 = vsel %vm715, %v742, %v744
      %v746 = vrot.slane %v185, 2
      %v747 = vrot.slane %v186, 2
      %v748 = vsel %vm715, %v746, %v747
      %v749 = vrot.slane %v187, 2
      %v750 = vsel %vm715, %v747, %v749
      %v751 = vrot.slane %v188, 2
      %v752 = vrot.slane %v189, 2
      %v753 = vsel %vm715, %v751, %v752
      %v754 = vrot.slane %v190, 2
      %v755 = vsel %vm715, %v752, %v754
      %v756 = vrot.slane %v191, 2
      %v757 = vrot.slane %v192, 2
      %v758 = vsel %vm715, %v756, %v757
      %v759 = vrot.slane %v193, 2
      %v760 = vsel %vm715, %v757, %v759
      %v761 = vrot.slane %v194, 2
      %v762 = vrot.slane %v195, 2
      %v763 = vsel %vm715, %v761, %v762
      %v764 = vrot.slane %v196, 2
      %v765 = vsel %vm715, %v762, %v764
      %v766 = vrot.slane %v197, 2
      %v767 = vrot.slane %v198, 2
      %v768 = vsel %vm715, %v766, %v767
      %v769 = vrot.slane %v199, 2
      %v770 = vsel %vm715, %v767, %v769
      %v771 = vrot.slane %v200, 2
      %v772 = vrot.slane %v201, 2
      %v773 = vsel %vm715, %v771, %v772
      %v774 = vrot.slane %v202, 2
      %v775 = vsel %vm715, %v772, %v774
      %v776 = vrot.slane %v203, 2
      %v777 = vrot.slane %v204, 2
      %v778 = vsel %vm715, %v776, %v777
      %v779 = vrot.slane %v205, 2
      %v780 = vsel %vm715, %v777, %v779
      %v781 = vrot.slane %v206, 2
      %v782 = vrot.slane %v207, 2
      %v783 = vsel %vm715, %v781, %v782
      %v784 = vrot.slane %v208, 2
      %v785 = vsel %vm715, %v782, %v784
      %v786 = vrot.slane %v209, 2
      %v787 = vrot.slane %v210, 2
      %v788 = vsel %vm715, %v786, %v787
      %v789 = vrot.slane %v211, 2
      %v790 = vsel %vm715, %v787, %v789
      %v791 = vrot.slane %v212, 2
      %v792 = vrot.slane %v213, 2
      %v793 = vsel %vm715, %v791, %v792
      %v794 = vrot.slane %v214, 2
      %v795 = vsel %vm715, %v792, %v794
      %s796 = scalar_lea.vmem %s1, 8
      %v797 = vld [vmem:[%s796] sm:$0xf]
      %v798 = vsel %vm353, %v718, 0
      %v800 = vsel %vm353, %v720, 0
      %v802 = vsel %vm353, %v723, 0
      %v804 = vsel %vm353, %v725, 0
      %v806 = vsel %vm353, %v728, 0
      %v808 = vsel %vm353, %v730, 0
      %v810 = vsel %vm353, %v733, 0
      %v812 = vsel %vm353, %v735, 0
      %v814 = vsel %vm353, %v738, 0
      %v816 = vsel %vm353, %v740, 0
      %v818 = vsel %vm353, %v743, 0
      %v820 = vsel %vm353, %v745, 0
      %v822 = vsel %vm353, %v748, 0
      %v824 = vsel %vm353, %v750, 0
      %v826 = vsel %vm353, %v753, 0
      %v828 = vsel %vm353, %v755, 0
      %v830 = vsel %vm353, %v758, 0
      %v832 = vsel %vm353, %v760, 0
      %v834 = vsel %vm353, %v763, 0
      %v836 = vsel %vm353, %v765, 0
      %v838 = vsel %vm353, %v768, 0
      %v840 = vsel %vm353, %v770, 0
      %v842 = vsel %vm353, %v773, 0
      %v844 = vsel %vm353, %v775, 0
      %v846 = vsel %vm353, %v778, 0
      %v848 = vsel %vm353, %v780, 0
      %v850 = vsel %vm353, %v783, 0
      %v852 = vsel %vm353, %v785, 0
      %v854 = vsel %vm353, %v788, 0
      %v856 = vsel %vm353, %v790, 0
      %v858 = vsel %vm353, %v793, 0
      %v860 = vsel %vm353, %v795, 0
      %v863 = vsel %vm418, %v797, 0
      %865 = vmatpush.msra.mxu0 0.0
      %866 = vmatpush.msra.mxu0 0.0
      %867 = vmatpush.msra.mxu0 0.0
      %868 = vmatpush.msra.mxu0 0.0
      %869 = vmatpush.msra.mxu0 0.0
      %870 = vmatpush.msra.mxu0 0.0
      %871 = vmatpush.msra.mxu0 0.0
      %872 = vmatpush.msra.mxu0 0.0
      %873 = vmatpush.msra.mxu0 0.0
      %874 = vmatpush.msra.mxu0 0.0
      %875 = vmatpush.msra.mxu0 0.0
      %876 = vmatpush.msra.mxu0 0.0
      %877 = vmatpush.msra.mxu0 0.0
      %878 = vmatpush.msra.mxu0 0.0
      %879 = vmatpush.msra.mxu0 0.0
      %880 = vmatpush.msra.mxu0 %v863
      %881 = vmatmul.f32.gmra.mxu0 %v798
      %v882 = vpop.f32.mrf.mxu0
      %v883 = vadd.f32 0.0, %v882
      %884 = vmatmul.f32.gmra.mxu0 %v800
      %v885 = vpop.f32.mrf.mxu0
      %v886 = vadd.f32 0.0, %v885
      %887 = vmatmul.f32.gmra.mxu0 %v802
      %v888 = vpop.f32.mrf.mxu0
      %v889 = vadd.f32 0.0, %v888
      %890 = vmatmul.f32.gmra.mxu0 %v804
      %v891 = vpop.f32.mrf.mxu0
      %v892 = vadd.f32 0.0, %v891
      %893 = vmatmul.f32.gmra.mxu0 %v806
      %v894 = vpop.f32.mrf.mxu0
      %v895 = vadd.f32 0.0, %v894
      %896 = vmatmul.f32.gmra.mxu0 %v808
      %v897 = vpop.f32.mrf.mxu0
      %v898 = vadd.f32 0.0, %v897
      %899 = vmatmul.f32.gmra.mxu0 %v810
      %v900 = vpop.f32.mrf.mxu0
      %v901 = vadd.f32 0.0, %v900
      %902 = vmatmul.f32.gmra.mxu0 %v812
      %v903 = vpop.f32.mrf.mxu0
      %v904 = vadd.f32 0.0, %v903
      %905 = vmatmul.f32.gmra.mxu0 %v814
      %v906 = vpop.f32.mrf.mxu0
      %v907 = vadd.f32 0.0, %v906
      %908 = vmatmul.f32.gmra.mxu0 %v816
      %v909 = vpop.f32.mrf.mxu0
      %v910 = vadd.f32 0.0, %v909
      %911 = vmatmul.f32.gmra.mxu0 %v818
      %v912 = vpop.f32.mrf.mxu0
      %v913 = vadd.f32 0.0, %v912
      %914 = vmatmul.f32.gmra.mxu0 %v820
      %v915 = vpop.f32.mrf.mxu0
      %v916 = vadd.f32 0.0, %v915
      %917 = vmatmul.f32.gmra.mxu0 %v822
      %v918 = vpop.f32.mrf.mxu0
      %v919 = vadd.f32 0.0, %v918
      %920 = vmatmul.f32.gmra.mxu0 %v824
      %v921 = vpop.f32.mrf.mxu0
      %v922 = vadd.f32 0.0, %v921
      %923 = vmatmul.f32.gmra.mxu0 %v826
      %v924 = vpop.f32.mrf.mxu0
      %v925 = vadd.f32 0.0, %v924
      %926 = vmatmul.f32.gmra.mxu0 %v828
      %v927 = vpop.f32.mrf.mxu0
      %v928 = vadd.f32 0.0, %v927
      %929 = vmatmul.f32.gmra.mxu0 %v830
      %v930 = vpop.f32.mrf.mxu0
      %v931 = vadd.f32 0.0, %v930
      %932 = vmatmul.f32.gmra.mxu0 %v832
      %v933 = vpop.f32.mrf.mxu0
      %v934 = vadd.f32 0.0, %v933
      %935 = vmatmul.f32.gmra.mxu0 %v834
      %v936 = vpop.f32.mrf.mxu0
      %v937 = vadd.f32 0.0, %v936
      %938 = vmatmul.f32.gmra.mxu0 %v836
      %v939 = vpop.f32.mrf.mxu0
      %v940 = vadd.f32 0.0, %v939
      %941 = vmatmul.f32.gmra.mxu0 %v838
      %v942 = vpop.f32.mrf.mxu0
      %v943 = vadd.f32 0.0, %v942
      %944 = vmatmul.f32.gmra.mxu0 %v840
      %v945 = vpop.f32.mrf.mxu0
      %v946 = vadd.f32 0.0, %v945
      %947 = vmatmul.f32.gmra.mxu0 %v842
      %v948 = vpop.f32.mrf.mxu0
      %v949 = vadd.f32 0.0, %v948
      %950 = vmatmul.f32.gmra.mxu0 %v844
      %v951 = vpop.f32.mrf.mxu0
      %v952 = vadd.f32 0.0, %v951
      %953 = vmatmul.f32.gmra.mxu0 %v846
      %v954 = vpop.f32.mrf.mxu0
      %v955 = vadd.f32 0.0, %v954
      %956 = vmatmul.f32.gmra.mxu0 %v848
      %v957 = vpop.f32.mrf.mxu0
      %v958 = vadd.f32 0.0, %v957
      %959 = vmatmul.f32.gmra.mxu0 %v850
      %v960 = vpop.f32.mrf.mxu0
      %v961 = vadd.f32 0.0, %v960
      %962 = vmatmul.f32.gmra.mxu0 %v852
      %v963 = vpop.f32.mrf.mxu0
      %v964 = vadd.f32 0.0, %v963
      %965 = vmatmul.f32.gmra.mxu0 %v854
      %v966 = vpop.f32.mrf.mxu0
      %v967 = vadd.f32 0.0, %v966
      %968 = vmatmul.f32.gmra.mxu0 %v856
      %v969 = vpop.f32.mrf.mxu0
      %v970 = vadd.f32 0.0, %v969
      %971 = vmatmul.f32.gmra.mxu0 %v858
      %v972 = vpop.f32.mrf.mxu0
      %v973 = vadd.f32 0.0, %v972
      %974 = vmatmul.f32.gmra.mxu0 %v860
      %v975 = vpop.f32.mrf.mxu0
      %v976 = vadd.f32 0.0, %v975
      %977 = vdwg.mxu0
      %v978 = vadd.f32 %v620, %v883
      %v979 = vadd.f32 %v623, %v886
      %v980 = vadd.f32 %v626, %v889
      %v981 = vadd.f32 %v629, %v892
      %v982 = vadd.f32 %v632, %v895
      %v983 = vadd.f32 %v635, %v898
      %v984 = vadd.f32 %v638, %v901
      %v985 = vadd.f32 %v641, %v904
      %v986 = vadd.f32 %v644, %v907
      %v987 = vadd.f32 %v647, %v910
      %v988 = vadd.f32 %v650, %v913
      %v989 = vadd.f32 %v653, %v916
      %v990 = vadd.f32 %v656, %v919
      %v991 = vadd.f32 %v659, %v922
      %v992 = vadd.f32 %v662, %v925
      %v993 = vadd.f32 %v665, %v928
      %v994 = vadd.f32 %v668, %v931
      %v995 = vadd.f32 %v671, %v934
      %v996 = vadd.f32 %v674, %v937
      %v997 = vadd.f32 %v677, %v940
      %v998 = vadd.f32 %v680, %v943
      %v999 = vadd.f32 %v683, %v946
      %v1000 = vadd.f32 %v686, %v949
      %v1001 = vadd.f32 %v689, %v952
      %v1002 = vadd.f32 %v692, %v955
      %v1003 = vadd.f32 %v695, %v958
      %v1004 = vadd.f32 %v698, %v961
      %v1005 = vadd.f32 %v701, %v964
      %v1006 = vadd.f32 %v704, %v967
      %v1007 = vadd.f32 %v707, %v970
      %v1008 = vadd.f32 %v710, %v973
      %v1009 = vadd.f32 %v713, %v976
      %s1010 = scalar_lea.vmem %s1, 12
      %v1011 = vld [vmem:[%s1010] sm:$0xf]
      %v1013 = vsel %vm353, %v215, 0
      %v1016 = vsel %vm353, %v216, 0
      %v1019 = vsel %vm418, %v1011, 0
      %1021 = vmatpush.msra.mxu0 0.0
      %1022 = vmatpush.msra.mxu0 0.0
      %1023 = vmatpush.msra.mxu0 0.0
      %1024 = vmatpush.msra.mxu0 0.0
      %1025 = vmatpush.msra.mxu0 0.0
      %1026 = vmatpush.msra.mxu0 0.0
      %1027 = vmatpush.msra.mxu0 0.0
      %1028 = vmatpush.msra.mxu0 0.0
      %1029 = vmatpush.msra.mxu0 0.0
      %1030 = vmatpush.msra.mxu0 0.0
      %1031 = vmatpush.msra.mxu0 0.0
      %1032 = vmatpush.msra.mxu0 0.0
      %1033 = vmatpush.msra.mxu0 0.0
      %1034 = vmatpush.msra.mxu0 0.0
      %1035 = vmatpush.msra.mxu0 0.0
      %1036 = vmatpush.msra.mxu0 %v1019
      %1037 = vmatmul.f32.gmra.mxu0 %v539
      %v1038 = vpop.f32.mrf.mxu0
      %v1039 = vadd.f32 0.0, %v1038
      %1040 = vmatmul.f32.gmra.mxu0 %v541
      %v1041 = vpop.f32.mrf.mxu0
      %v1042 = vadd.f32 0.0, %v1041
      %1043 = vmatmul.f32.gmra.mxu0 %v543
      %v1044 = vpop.f32.mrf.mxu0
      %v1045 = vadd.f32 0.0, %v1044
      %1046 = vmatmul.f32.gmra.mxu0 %v545
      %v1047 = vpop.f32.mrf.mxu0
      %v1048 = vadd.f32 0.0, %v1047
      %1049 = vmatmul.f32.gmra.mxu0 %v547
      %v1050 = vpop.f32.mrf.mxu0
      %v1051 = vadd.f32 0.0, %v1050
      %1052 = vmatmul.f32.gmra.mxu0 %v549
      %v1053 = vpop.f32.mrf.mxu0
      %v1054 = vadd.f32 0.0, %v1053
      %1055 = vmatmul.f32.gmra.mxu0 %v551
      %v1056 = vpop.f32.mrf.mxu0
      %v1057 = vadd.f32 0.0, %v1056
      %1058 = vmatmul.f32.gmra.mxu0 %v553
      %v1059 = vpop.f32.mrf.mxu0
      %v1060 = vadd.f32 0.0, %v1059
      %1061 = vmatmul.f32.gmra.mxu0 %v555
      %v1062 = vpop.f32.mrf.mxu0
      %v1063 = vadd.f32 0.0, %v1062
      %1064 = vmatmul.f32.gmra.mxu0 %v557
      %v1065 = vpop.f32.mrf.mxu0
      %v1066 = vadd.f32 0.0, %v1065
      %1067 = vmatmul.f32.gmra.mxu0 %v559
      %v1068 = vpop.f32.mrf.mxu0
      %v1069 = vadd.f32 0.0, %v1068
      %1070 = vmatmul.f32.gmra.mxu0 %v561
      %v1071 = vpop.f32.mrf.mxu0
      %v1072 = vadd.f32 0.0, %v1071
      %1073 = vmatmul.f32.gmra.mxu0 %v563
      %v1074 = vpop.f32.mrf.mxu0
      %v1075 = vadd.f32 0.0, %v1074
      %1076 = vmatmul.f32.gmra.mxu0 %v565
      %v1077 = vpop.f32.mrf.mxu0
      %v1078 = vadd.f32 0.0, %v1077
      %1079 = vmatmul.f32.gmra.mxu0 %v567
      %v1080 = vpop.f32.mrf.mxu0
      %v1081 = vadd.f32 0.0, %v1080
      %1082 = vmatmul.f32.gmra.mxu0 %v569
      %v1083 = vpop.f32.mrf.mxu0
      %v1084 = vadd.f32 0.0, %v1083
      %1085 = vmatmul.f32.gmra.mxu0 %v571
      %v1086 = vpop.f32.mrf.mxu0
      %v1087 = vadd.f32 0.0, %v1086
      %1088 = vmatmul.f32.gmra.mxu0 %v573
      %v1089 = vpop.f32.mrf.mxu0
      %v1090 = vadd.f32 0.0, %v1089
      %1091 = vmatmul.f32.gmra.mxu0 %v575
      %v1092 = vpop.f32.mrf.mxu0
      %v1093 = vadd.f32 0.0, %v1092
      %1094 = vmatmul.f32.gmra.mxu0 %v577
      %v1095 = vpop.f32.mrf.mxu0
      %v1096 = vadd.f32 0.0, %v1095
      %1097 = vmatmul.f32.gmra.mxu0 %v579
      %v1098 = vpop.f32.mrf.mxu0
      %v1099 = vadd.f32 0.0, %v1098
      %1100 = vmatmul.f32.gmra.mxu0 %v581
      %v1101 = vpop.f32.mrf.mxu0
      %v1102 = vadd.f32 0.0, %v1101
      %1103 = vmatmul.f32.gmra.mxu0 %v583
      %v1104 = vpop.f32.mrf.mxu0
      %v1105 = vadd.f32 0.0, %v1104
      %1106 = vmatmul.f32.gmra.mxu0 %v585
      %v1107 = vpop.f32.mrf.mxu0
      %v1108 = vadd.f32 0.0, %v1107
      %1109 = vmatmul.f32.gmra.mxu0 %v587
      %v1110 = vpop.f32.mrf.mxu0
      %v1111 = vadd.f32 0.0, %v1110
      %1112 = vmatmul.f32.gmra.mxu0 %v589
      %v1113 = vpop.f32.mrf.mxu0
      %v1114 = vadd.f32 0.0, %v1113
      %1115 = vmatmul.f32.gmra.mxu0 %v591
      %v1116 = vpop.f32.mrf.mxu0
      %v1117 = vadd.f32 0.0, %v1116
      %1118 = vmatmul.f32.gmra.mxu0 %v593
      %v1119 = vpop.f32.mrf.mxu0
      %v1120 = vadd.f32 0.0, %v1119
      %1121 = vmatmul.f32.gmra.mxu0 %v595
      %v1122 = vpop.f32.mrf.mxu0
      %v1123 = vadd.f32 0.0, %v1122
      %1124 = vmatmul.f32.gmra.mxu0 %v597
      %v1125 = vpop.f32.mrf.mxu0
      %v1126 = vadd.f32 0.0, %v1125
      %1127 = vmatmul.f32.gmra.mxu0 %v1013
      %v1128 = vpop.f32.mrf.mxu0
      %v1129 = vadd.f32 0.0, %v1128
      %1130 = vmatmul.f32.gmra.mxu0 %v1016
      %v1131 = vpop.f32.mrf.mxu0
      %v1132 = vadd.f32 0.0, %v1131
      %1133 = vdwg.mxu0
      %v1134 = vadd.f32 %v978, %v1039
      %v1135 = vadd.f32 %v979, %v1042
      %v1136 = vadd.f32 %v980, %v1045
      %v1137 = vadd.f32 %v981, %v1048
      %v1138 = vadd.f32 %v982, %v1051
      %v1139 = vadd.f32 %v983, %v1054
      %v1140 = vadd.f32 %v984, %v1057
      %v1141 = vadd.f32 %v985, %v1060
      %v1142 = vadd.f32 %v986, %v1063
      %v1143 = vadd.f32 %v987, %v1066
      %v1144 = vadd.f32 %v988, %v1069
      %v1145 = vadd.f32 %v989, %v1072
      %v1146 = vadd.f32 %v990, %v1075
      %v1147 = vadd.f32 %v991, %v1078
      %v1148 = vadd.f32 %v992, %v1081
      %v1149 = vadd.f32 %v993, %v1084
      %v1150 = vadd.f32 %v994, %v1087
      %v1151 = vadd.f32 %v995, %v1090
      %v1152 = vadd.f32 %v996, %v1093
      %v1153 = vadd.f32 %v997, %v1096
      %v1154 = vadd.f32 %v998, %v1099
      %v1155 = vadd.f32 %v999, %v1102
      %v1156 = vadd.f32 %v1000, %v1105
      %v1157 = vadd.f32 %v1001, %v1108
      %v1158 = vadd.f32 %v1002, %v1111
      %v1159 = vadd.f32 %v1003, %v1114
      %v1160 = vadd.f32 %v1004, %v1117
      %v1161 = vadd.f32 %v1005, %v1120
      %v1162 = vadd.f32 %v1006, %v1123
      %v1163 = vadd.f32 %v1007, %v1126
      %v1164 = vadd.f32 %v1008, %v1129
      %v1165 = vadd.f32 %v1009, %v1132
      %v1167 = vrot.slane %v215, 1
      %v1168 = vrot.slane %v216, 1
      %v1169 = vsel %vm270, %v1167, %v1168
      %v1170 = vrot.slane %v217, 1
      %v1171 = vsel %vm270, %v1168, %v1170
      %s1172 = scalar_lea.vmem %s1, 16
      %v1173 = vld [vmem:[%s1172] sm:$0xf]
      %v1174 = vsel %vm353, %v1169, 0
      %v1176 = vsel %vm353, %v1171, 0
      %v1179 = vsel %vm418, %v1173, 0
      %1181 = vmatpush.msra.mxu0 0.0
      %1182 = vmatpush.msra.mxu0 0.0
      %1183 = vmatpush.msra.mxu0 0.0
      %1184 = vmatpush.msra.mxu0 0.0
      %1185 = vmatpush.msra.mxu0 0.0
      %1186 = vmatpush.msra.mxu0 0.0
      %1187 = vmatpush.msra.mxu0 0.0
      %1188 = vmatpush.msra.mxu0 0.0
      %1189 = vmatpush.msra.mxu0 0.0
      %1190 = vmatpush.msra.mxu0 0.0
      %1191 = vmatpush.msra.mxu0 0.0
      %1192 = vmatpush.msra.mxu0 0.0
      %1193 = vmatpush.msra.mxu0 0.0
      %1194 = vmatpush.msra.mxu0 0.0
      %1195 = vmatpush.msra.mxu0 0.0
      %1196 = vmatpush.msra.mxu0 %v1179
      %1197 = vmatmul.f32.gmra.mxu0 %v358
      %v1198 = vpop.f32.mrf.mxu0
      %v1199 = vadd.f32 0.0, %v1198
      %1200 = vmatmul.f32.gmra.mxu0 %v360
      %v1201 = vpop.f32.mrf.mxu0
      %v1202 = vadd.f32 0.0, %v1201
      %1203 = vmatmul.f32.gmra.mxu0 %v362
      %v1204 = vpop.f32.mrf.mxu0
      %v1205 = vadd.f32 0.0, %v1204
      %1206 = vmatmul.f32.gmra.mxu0 %v364
      %v1207 = vpop.f32.mrf.mxu0
      %v1208 = vadd.f32 0.0, %v1207
      %1209 = vmatmul.f32.gmra.mxu0 %v366
      %v1210 = vpop.f32.mrf.mxu0
      %v1211 = vadd.f32 0.0, %v1210
      %1212 = vmatmul.f32.gmra.mxu0 %v368
      %v1213 = vpop.f32.mrf.mxu0
      %v1214 = vadd.f32 0.0, %v1213
      %1215 = vmatmul.f32.gmra.mxu0 %v370
      %v1216 = vpop.f32.mrf.mxu0
      %v1217 = vadd.f32 0.0, %v1216
      %1218 = vmatmul.f32.gmra.mxu0 %v372
      %v1219 = vpop.f32.mrf.mxu0
      %v1220 = vadd.f32 0.0, %v1219
      %1221 = vmatmul.f32.gmra.mxu0 %v374
      %v1222 = vpop.f32.mrf.mxu0
      %v1223 = vadd.f32 0.0, %v1222
      %1224 = vmatmul.f32.gmra.mxu0 %v376
      %v1225 = vpop.f32.mrf.mxu0
      %v1226 = vadd.f32 0.0, %v1225
      %1227 = vmatmul.f32.gmra.mxu0 %v378
      %v1228 = vpop.f32.mrf.mxu0
      %v1229 = vadd.f32 0.0, %v1228
      %1230 = vmatmul.f32.gmra.mxu0 %v380
      %v1231 = vpop.f32.mrf.mxu0
      %v1232 = vadd.f32 0.0, %v1231
      %1233 = vmatmul.f32.gmra.mxu0 %v382
      %v1234 = vpop.f32.mrf.mxu0
      %v1235 = vadd.f32 0.0, %v1234
      %1236 = vmatmul.f32.gmra.mxu0 %v384
      %v1237 = vpop.f32.mrf.mxu0
      %v1238 = vadd.f32 0.0, %v1237
      %1239 = vmatmul.f32.gmra.mxu0 %v386
      %v1240 = vpop.f32.mrf.mxu0
      %v1241 = vadd.f32 0.0, %v1240
      %1242 = vmatmul.f32.gmra.mxu0 %v388
      %v1243 = vpop.f32.mrf.mxu0
      %v1244 = vadd.f32 0.0, %v1243
      %1245 = vmatmul.f32.gmra.mxu0 %v390
      %v1246 = vpop.f32.mrf.mxu0
      %v1247 = vadd.f32 0.0, %v1246
      %1248 = vmatmul.f32.gmra.mxu0 %v392
      %v1249 = vpop.f32.mrf.mxu0
      %v1250 = vadd.f32 0.0, %v1249
      %1251 = vmatmul.f32.gmra.mxu0 %v394
      %v1252 = vpop.f32.mrf.mxu0
      %v1253 = vadd.f32 0.0, %v1252
      %1254 = vmatmul.f32.gmra.mxu0 %v396
      %v1255 = vpop.f32.mrf.mxu0
      %v1256 = vadd.f32 0.0, %v1255
      %1257 = vmatmul.f32.gmra.mxu0 %v398
      %v1258 = vpop.f32.mrf.mxu0
      %v1259 = vadd.f32 0.0, %v1258
      %1260 = vmatmul.f32.gmra.mxu0 %v400
      %v1261 = vpop.f32.mrf.mxu0
      %v1262 = vadd.f32 0.0, %v1261
      %1263 = vmatmul.f32.gmra.mxu0 %v402
      %v1264 = vpop.f32.mrf.mxu0
      %v1265 = vadd.f32 0.0, %v1264
      %1266 = vmatmul.f32.gmra.mxu0 %v404
      %v1267 = vpop.f32.mrf.mxu0
      %v1268 = vadd.f32 0.0, %v1267
      %1269 = vmatmul.f32.gmra.mxu0 %v406
      %v1270 = vpop.f32.mrf.mxu0
      %v1271 = vadd.f32 0.0, %v1270
      %1272 = vmatmul.f32.gmra.mxu0 %v408
      %v1273 = vpop.f32.mrf.mxu0
      %v1274 = vadd.f32 0.0, %v1273
      %1275 = vmatmul.f32.gmra.mxu0 %v410
      %v1276 = vpop.f32.mrf.mxu0
      %v1277 = vadd.f32 0.0, %v1276
      %1278 = vmatmul.f32.gmra.mxu0 %v412
      %v1279 = vpop.f32.mrf.mxu0
      %v1280 = vadd.f32 0.0, %v1279
      %1281 = vmatmul.f32.gmra.mxu0 %v414
      %v1282 = vpop.f32.mrf.mxu0
      %v1283 = vadd.f32 0.0, %v1282
      %1284 = vmatmul.f32.gmra.mxu0 %v416
      %v1285 = vpop.f32.mrf.mxu0
      %v1286 = vadd.f32 0.0, %v1285
      %1287 = vmatmul.f32.gmra.mxu0 %v1174
      %v1288 = vpop.f32.mrf.mxu0
      %v1289 = vadd.f32 0.0, %v1288
      %1290 = vmatmul.f32.gmra.mxu0 %v1176
      %v1291 = vpop.f32.mrf.mxu0
      %v1292 = vadd.f32 0.0, %v1291
      %1293 = vdwg.mxu0
      %v1294 = vadd.f32 %v1134, %v1199
      %v1295 = vadd.f32 %v1135, %v1202
      %v1296 = vadd.f32 %v1136, %v1205
      %v1297 = vadd.f32 %v1137, %v1208
      %v1298 = vadd.f32 %v1138, %v1211
      %v1299 = vadd.f32 %v1139, %v1214
      %v1300 = vadd.f32 %v1140, %v1217
      %v1301 = vadd.f32 %v1141, %v1220
      %v1302 = vadd.f32 %v1142, %v1223
      %v1303 = vadd.f32 %v1143, %v1226
      %v1304 = vadd.f32 %v1144, %v1229
      %v1305 = vadd.f32 %v1145, %v1232
      %v1306 = vadd.f32 %v1146, %v1235
      %v1307 = vadd.f32 %v1147, %v1238
      %v1308 = vadd.f32 %v1148, %v1241
      %v1309 = vadd.f32 %v1149, %v1244
      %v1310 = vadd.f32 %v1150, %v1247
      %v1311 = vadd.f32 %v1151, %v1250
      %v1312 = vadd.f32 %v1152, %v1253
      %v1313 = vadd.f32 %v1153, %v1256
      %v1314 = vadd.f32 %v1154, %v1259
      %v1315 = vadd.f32 %v1155, %v1262
      %v1316 = vadd.f32 %v1156, %v1265
      %v1317 = vadd.f32 %v1157, %v1268
      %v1318 = vadd.f32 %v1158, %v1271
      %v1319 = vadd.f32 %v1159, %v1274
      %v1320 = vadd.f32 %v1160, %v1277
      %v1321 = vadd.f32 %v1161, %v1280
      %v1322 = vadd.f32 %v1162, %v1283
      %v1323 = vadd.f32 %v1163, %v1286
      %v1324 = vadd.f32 %v1164, %v1289
      %v1325 = vadd.f32 %v1165, %v1292
      %v1326 = vrot.slane %v215, 2
      %v1327 = vrot.slane %v216, 2
      %v1328 = vsel %vm715, %v1326, %v1327
      %v1329 = vrot.slane %v217, 2
      %v1330 = vsel %vm715, %v1327, %v1329
      %s1331 = scalar_lea.vmem %s1, 20
      %v1332 = vld [vmem:[%s1331] sm:$0xf]
      %v1333 = vsel %vm353, %v1328, 0
      %v1335 = vsel %vm353, %v1330, 0
      %v1338 = vsel %vm418, %v1332, 0
      %1340 = vmatpush.msra.mxu0 0.0
      %1341 = vmatpush.msra.mxu0 0.0
      %1342 = vmatpush.msra.mxu0 0.0
      %1343 = vmatpush.msra.mxu0 0.0
      %1344 = vmatpush.msra.mxu0 0.0
      %1345 = vmatpush.msra.mxu0 0.0
      %1346 = vmatpush.msra.mxu0 0.0
      %1347 = vmatpush.msra.mxu0 0.0
      %1348 = vmatpush.msra.mxu0 0.0
      %1349 = vmatpush.msra.mxu0 0.0
      %1350 = vmatpush.msra.mxu0 0.0
      %1351 = vmatpush.msra.mxu0 0.0
      %1352 = vmatpush.msra.mxu0 0.0
      %1353 = vmatpush.msra.mxu0 0.0
      %1354 = vmatpush.msra.mxu0 0.0
      %1355 = vmatpush.msra.mxu0 %v1338
      %1356 = vmatmul.f32.gmra.mxu0 %v802
      %v1357 = vpop.f32.mrf.mxu0
      %v1358 = vadd.f32 0.0, %v1357
      %1359 = vmatmul.f32.gmra.mxu0 %v804
      %v1360 = vpop.f32.mrf.mxu0
      %v1361 = vadd.f32 0.0, %v1360
      %1362 = vmatmul.f32.gmra.mxu0 %v806
      %v1363 = vpop.f32.mrf.mxu0
      %v1364 = vadd.f32 0.0, %v1363
      %1365 = vmatmul.f32.gmra.mxu0 %v808
      %v1366 = vpop.f32.mrf.mxu0
      %v1367 = vadd.f32 0.0, %v1366
      %1368 = vmatmul.f32.gmra.mxu0 %v810
      %v1369 = vpop.f32.mrf.mxu0
      %v1370 = vadd.f32 0.0, %v1369
      %1371 = vmatmul.f32.gmra.mxu0 %v812
      %v1372 = vpop.f32.mrf.mxu0
      %v1373 = vadd.f32 0.0, %v1372
      %1374 = vmatmul.f32.gmra.mxu0 %v814
      %v1375 = vpop.f32.mrf.mxu0
      %v1376 = vadd.f32 0.0, %v1375
      %1377 = vmatmul.f32.gmra.mxu0 %v816
      %v1378 = vpop.f32.mrf.mxu0
      %v1379 = vadd.f32 0.0, %v1378
      %1380 = vmatmul.f32.gmra.mxu0 %v818
      %v1381 = vpop.f32.mrf.mxu0
      %v1382 = vadd.f32 0.0, %v1381
      %1383 = vmatmul.f32.gmra.mxu0 %v820
      %v1384 = vpop.f32.mrf.mxu0
      %v1385 = vadd.f32 0.0, %v1384
      %1386 = vmatmul.f32.gmra.mxu0 %v822
      %v1387 = vpop.f32.mrf.mxu0
      %v1388 = vadd.f32 0.0, %v1387
      %1389 = vmatmul.f32.gmra.mxu0 %v824
      %v1390 = vpop.f32.mrf.mxu0
      %v1391 = vadd.f32 0.0, %v1390
      %1392 = vmatmul.f32.gmra.mxu0 %v826
      %v1393 = vpop.f32.mrf.mxu0
      %v1394 = vadd.f32 0.0, %v1393
      %1395 = vmatmul.f32.gmra.mxu0 %v828
      %v1396 = vpop.f32.mrf.mxu0
      %v1397 = vadd.f32 0.0, %v1396
      %1398 = vmatmul.f32.gmra.mxu0 %v830
      %v1399 = vpop.f32.mrf.mxu0
      %v1400 = vadd.f32 0.0, %v1399
      %1401 = vmatmul.f32.gmra.mxu0 %v832
      %v1402 = vpop.f32.mrf.mxu0
      %v1403 = vadd.f32 0.0, %v1402
      %1404 = vmatmul.f32.gmra.mxu0 %v834
      %v1405 = vpop.f32.mrf.mxu0
      %v1406 = vadd.f32 0.0, %v1405
      %1407 = vmatmul.f32.gmra.mxu0 %v836
      %v1408 = vpop.f32.mrf.mxu0
      %v1409 = vadd.f32 0.0, %v1408
      %1410 = vmatmul.f32.gmra.mxu0 %v838
      %v1411 = vpop.f32.mrf.mxu0
      %v1412 = vadd.f32 0.0, %v1411
      %1413 = vmatmul.f32.gmra.mxu0 %v840
      %v1414 = vpop.f32.mrf.mxu0
      %v1415 = vadd.f32 0.0, %v1414
      %1416 = vmatmul.f32.gmra.mxu0 %v842
      %v1417 = vpop.f32.mrf.mxu0
      %v1418 = vadd.f32 0.0, %v1417
      %1419 = vmatmul.f32.gmra.mxu0 %v844
      %v1420 = vpop.f32.mrf.mxu0
      %v1421 = vadd.f32 0.0, %v1420
      %1422 = vmatmul.f32.gmra.mxu0 %v846
      %v1423 = vpop.f32.mrf.mxu0
      %v1424 = vadd.f32 0.0, %v1423
      %1425 = vmatmul.f32.gmra.mxu0 %v848
      %v1426 = vpop.f32.mrf.mxu0
      %v1427 = vadd.f32 0.0, %v1426
      %1428 = vmatmul.f32.gmra.mxu0 %v850
      %v1429 = vpop.f32.mrf.mxu0
      %v1430 = vadd.f32 0.0, %v1429
      %1431 = vmatmul.f32.gmra.mxu0 %v852
      %v1432 = vpop.f32.mrf.mxu0
      %v1433 = vadd.f32 0.0, %v1432
      %1434 = vmatmul.f32.gmra.mxu0 %v854
      %v1435 = vpop.f32.mrf.mxu0
      %v1436 = vadd.f32 0.0, %v1435
      %1437 = vmatmul.f32.gmra.mxu0 %v856
      %v1438 = vpop.f32.mrf.mxu0
      %v1439 = vadd.f32 0.0, %v1438
      %1440 = vmatmul.f32.gmra.mxu0 %v858
      %v1441 = vpop.f32.mrf.mxu0
      %v1442 = vadd.f32 0.0, %v1441
      %1443 = vmatmul.f32.gmra.mxu0 %v860
      %v1444 = vpop.f32.mrf.mxu0
      %v1445 = vadd.f32 0.0, %v1444
      %1446 = vmatmul.f32.gmra.mxu0 %v1333
      %v1447 = vpop.f32.mrf.mxu0
      %v1448 = vadd.f32 0.0, %v1447
      %1449 = vmatmul.f32.gmra.mxu0 %v1335
      %v1450 = vpop.f32.mrf.mxu0
      %v1451 = vadd.f32 0.0, %v1450
      %1452 = vdwg.mxu0
      %v1453 = vadd.f32 %v1294, %v1358
      %v1454 = vadd.f32 %v1295, %v1361
      %v1455 = vadd.f32 %v1296, %v1364
      %v1456 = vadd.f32 %v1297, %v1367
      %v1457 = vadd.f32 %v1298, %v1370
      %v1458 = vadd.f32 %v1299, %v1373
      %v1459 = vadd.f32 %v1300, %v1376
      %v1460 = vadd.f32 %v1301, %v1379
      %v1461 = vadd.f32 %v1302, %v1382
      %v1462 = vadd.f32 %v1303, %v1385
      %v1463 = vadd.f32 %v1304, %v1388
      %v1464 = vadd.f32 %v1305, %v1391
      %v1465 = vadd.f32 %v1306, %v1394
      %v1466 = vadd.f32 %v1307, %v1397
      %v1467 = vadd.f32 %v1308, %v1400
      %v1468 = vadd.f32 %v1309, %v1403
      %v1469 = vadd.f32 %v1310, %v1406
      %v1470 = vadd.f32 %v1311, %v1409
      %v1471 = vadd.f32 %v1312, %v1412
      %v1472 = vadd.f32 %v1313, %v1415
      %v1473 = vadd.f32 %v1314, %v1418
      %v1474 = vadd.f32 %v1315, %v1421
      %v1475 = vadd.f32 %v1316, %v1424
      %v1476 = vadd.f32 %v1317, %v1427
      %v1477 = vadd.f32 %v1318, %v1430
      %v1478 = vadd.f32 %v1319, %v1433
      %v1479 = vadd.f32 %v1320, %v1436
      %v1480 = vadd.f32 %v1321, %v1439
      %v1481 = vadd.f32 %v1322, %v1442
      %v1482 = vadd.f32 %v1323, %v1445
      %v1483 = vadd.f32 %v1324, %v1448
      %v1484 = vadd.f32 %v1325, %v1451
      %s1485 = scalar_lea.vmem %s1, 24
      %v1486 = vld [vmem:[%s1485] sm:$0xf]
      %v1488 = vsel %vm353, %v218, 0
      %v1491 = vsel %vm353, %v219, 0
      %v1494 = vsel %vm418, %v1486, 0
      %1496 = vmatpush.msra.mxu0 0.0
      %1497 = vmatpush.msra.mxu0 0.0
      %1498 = vmatpush.msra.mxu0 0.0
      %1499 = vmatpush.msra.mxu0 0.0
      %1500 = vmatpush.msra.mxu0 0.0
      %1501 = vmatpush.msra.mxu0 0.0
      %1502 = vmatpush.msra.mxu0 0.0
      %1503 = vmatpush.msra.mxu0 0.0
      %1504 = vmatpush.msra.mxu0 0.0
      %1505 = vmatpush.msra.mxu0 0.0
      %1506 = vmatpush.msra.mxu0 0.0
      %1507 = vmatpush.msra.mxu0 0.0
      %1508 = vmatpush.msra.mxu0 0.0
      %1509 = vmatpush.msra.mxu0 0.0
      %1510 = vmatpush.msra.mxu0 0.0
      %1511 = vmatpush.msra.mxu0 %v1494
      %1512 = vmatmul.f32.gmra.mxu0 %v543
      %v1513 = vpop.f32.mrf.mxu0
      %v1514 = vadd.f32 0.0, %v1513
      %1515 = vmatmul.f32.gmra.mxu0 %v545
      %v1516 = vpop.f32.mrf.mxu0
      %v1517 = vadd.f32 0.0, %v1516
      %1518 = vmatmul.f32.gmra.mxu0 %v547
      %v1519 = vpop.f32.mrf.mxu0
      %v1520 = vadd.f32 0.0, %v1519
      %1521 = vmatmul.f32.gmra.mxu0 %v549
      %v1522 = vpop.f32.mrf.mxu0
      %v1523 = vadd.f32 0.0, %v1522
      %1524 = vmatmul.f32.gmra.mxu0 %v551
      %v1525 = vpop.f32.mrf.mxu0
      %v1526 = vadd.f32 0.0, %v1525
      %1527 = vmatmul.f32.gmra.mxu0 %v553
      %v1528 = vpop.f32.mrf.mxu0
      %v1529 = vadd.f32 0.0, %v1528
      %1530 = vmatmul.f32.gmra.mxu0 %v555
      %v1531 = vpop.f32.mrf.mxu0
      %v1532 = vadd.f32 0.0, %v1531
      %1533 = vmatmul.f32.gmra.mxu0 %v557
      %v1534 = vpop.f32.mrf.mxu0
      %v1535 = vadd.f32 0.0, %v1534
      %1536 = vmatmul.f32.gmra.mxu0 %v559
      %v1537 = vpop.f32.mrf.mxu0
      %v1538 = vadd.f32 0.0, %v1537
      %1539 = vmatmul.f32.gmra.mxu0 %v561
      %v1540 = vpop.f32.mrf.mxu0
      %v1541 = vadd.f32 0.0, %v1540
      %1542 = vmatmul.f32.gmra.mxu0 %v563
      %v1543 = vpop.f32.mrf.mxu0
      %v1544 = vadd.f32 0.0, %v1543
      %1545 = vmatmul.f32.gmra.mxu0 %v565
      %v1546 = vpop.f32.mrf.mxu0
      %v1547 = vadd.f32 0.0, %v1546
      %1548 = vmatmul.f32.gmra.mxu0 %v567
      %v1549 = vpop.f32.mrf.mxu0
      %v1550 = vadd.f32 0.0, %v1549
      %1551 = vmatmul.f32.gmra.mxu0 %v569
      %v1552 = vpop.f32.mrf.mxu0
      %v1553 = vadd.f32 0.0, %v1552
      %1554 = vmatmul.f32.gmra.mxu0 %v571
      %v1555 = vpop.f32.mrf.mxu0
      %v1556 = vadd.f32 0.0, %v1555
      %1557 = vmatmul.f32.gmra.mxu0 %v573
      %v1558 = vpop.f32.mrf.mxu0
      %v1559 = vadd.f32 0.0, %v1558
      %1560 = vmatmul.f32.gmra.mxu0 %v575
      %v1561 = vpop.f32.mrf.mxu0
      %v1562 = vadd.f32 0.0, %v1561
      %1563 = vmatmul.f32.gmra.mxu0 %v577
      %v1564 = vpop.f32.mrf.mxu0
      %v1565 = vadd.f32 0.0, %v1564
      %1566 = vmatmul.f32.gmra.mxu0 %v579
      %v1567 = vpop.f32.mrf.mxu0
      %v1568 = vadd.f32 0.0, %v1567
      %1569 = vmatmul.f32.gmra.mxu0 %v581
      %v1570 = vpop.f32.mrf.mxu0
      %v1571 = vadd.f32 0.0, %v1570
      %1572 = vmatmul.f32.gmra.mxu0 %v583
      %v1573 = vpop.f32.mrf.mxu0
      %v1574 = vadd.f32 0.0, %v1573
      %1575 = vmatmul.f32.gmra.mxu0 %v585
      %v1576 = vpop.f32.mrf.mxu0
      %v1577 = vadd.f32 0.0, %v1576
      %1578 = vmatmul.f32.gmra.mxu0 %v587
      %v1579 = vpop.f32.mrf.mxu0
      %v1580 = vadd.f32 0.0, %v1579
      %1581 = vmatmul.f32.gmra.mxu0 %v589
      %v1582 = vpop.f32.mrf.mxu0
      %v1583 = vadd.f32 0.0, %v1582
      %1584 = vmatmul.f32.gmra.mxu0 %v591
      %v1585 = vpop.f32.mrf.mxu0
      %v1586 = vadd.f32 0.0, %v1585
      %1587 = vmatmul.f32.gmra.mxu0 %v593
      %v1588 = vpop.f32.mrf.mxu0
      %v1589 = vadd.f32 0.0, %v1588
      %1590 = vmatmul.f32.gmra.mxu0 %v595
      %v1591 = vpop.f32.mrf.mxu0
      %v1592 = vadd.f32 0.0, %v1591
      %1593 = vmatmul.f32.gmra.mxu0 %v597
      %v1594 = vpop.f32.mrf.mxu0
      %v1595 = vadd.f32 0.0, %v1594
      %1596 = vmatmul.f32.gmra.mxu0 %v1013
      %v1597 = vpop.f32.mrf.mxu0
      %v1598 = vadd.f32 0.0, %v1597
      %1599 = vmatmul.f32.gmra.mxu0 %v1016
      %v1600 = vpop.f32.mrf.mxu0
      %v1601 = vadd.f32 0.0, %v1600
      %1602 = vmatmul.f32.gmra.mxu0 %v1488
      %v1603 = vpop.f32.mrf.mxu0
      %v1604 = vadd.f32 0.0, %v1603
      %1605 = vmatmul.f32.gmra.mxu0 %v1491
      %v1606 = vpop.f32.mrf.mxu0
      %v1607 = vadd.f32 0.0, %v1606
      %1608 = vdwg.mxu0
      %v1609 = vadd.f32 %v1453, %v1514
      %v1610 = vadd.f32 %v1454, %v1517
      %v1611 = vadd.f32 %v1455, %v1520
      %v1612 = vadd.f32 %v1456, %v1523
      %v1613 = vadd.f32 %v1457, %v1526
      %v1614 = vadd.f32 %v1458, %v1529
      %v1615 = vadd.f32 %v1459, %v1532
      %v1616 = vadd.f32 %v1460, %v1535
      %v1617 = vadd.f32 %v1461, %v1538
      %v1618 = vadd.f32 %v1462, %v1541
      %v1619 = vadd.f32 %v1463, %v1544
      %v1620 = vadd.f32 %v1464, %v1547
      %v1621 = vadd.f32 %v1465, %v1550
      %v1622 = vadd.f32 %v1466, %v1553
      %v1623 = vadd.f32 %v1467, %v1556
      %v1624 = vadd.f32 %v1468, %v1559
      %v1625 = vadd.f32 %v1469, %v1562
      %v1626 = vadd.f32 %v1470, %v1565
      %v1627 = vadd.f32 %v1471, %v1568
      %v1628 = vadd.f32 %v1472, %v1571
      %v1629 = vadd.f32 %v1473, %v1574
      %v1630 = vadd.f32 %v1474, %v1577
      %v1631 = vadd.f32 %v1475, %v1580
      %v1632 = vadd.f32 %v1476, %v1583
      %v1633 = vadd.f32 %v1477, %v1586
      %v1634 = vadd.f32 %v1478, %v1589
      %v1635 = vadd.f32 %v1479, %v1592
      %v1636 = vadd.f32 %v1480, %v1595
      %v1637 = vadd.f32 %v1481, %v1598
      %v1638 = vadd.f32 %v1482, %v1601
      %v1639 = vadd.f32 %v1483, %v1604
      %v1640 = vadd.f32 %v1484, %v1607
      %v1642 = vrot.slane %v218, 1
      %v1643 = vrot.slane %v219, 1
      %v1644 = vsel %vm270, %v1642, %v1643
      %v1645 = vrot.slane %v220, 1
      %v1646 = vsel %vm270, %v1643, %v1645
      %s1647 = scalar_lea.vmem %s1, 28
      %v1648 = vld [vmem:[%s1647] sm:$0xf]
      %v1649 = vsel %vm353, %v1644, 0
      %v1651 = vsel %vm353, %v1646, 0
      %v1654 = vsel %vm418, %v1648, 0
      %1656 = vmatpush.msra.mxu0 0.0
      %1657 = vmatpush.msra.mxu0 0.0
      %1658 = vmatpush.msra.mxu0 0.0
      %1659 = vmatpush.msra.mxu0 0.0
      %1660 = vmatpush.msra.mxu0 0.0
      %1661 = vmatpush.msra.mxu0 0.0
      %1662 = vmatpush.msra.mxu0 0.0
      %1663 = vmatpush.msra.mxu0 0.0
      %1664 = vmatpush.msra.mxu0 0.0
      %1665 = vmatpush.msra.mxu0 0.0
      %1666 = vmatpush.msra.mxu0 0.0
      %1667 = vmatpush.msra.mxu0 0.0
      %1668 = vmatpush.msra.mxu0 0.0
      %1669 = vmatpush.msra.mxu0 0.0
      %1670 = vmatpush.msra.mxu0 0.0
      %1671 = vmatpush.msra.mxu0 %v1654
      %1672 = vmatmul.f32.gmra.mxu0 %v362
      %v1673 = vpop.f32.mrf.mxu0
      %v1674 = vadd.f32 0.0, %v1673
      %1675 = vmatmul.f32.gmra.mxu0 %v364
      %v1676 = vpop.f32.mrf.mxu0
      %v1677 = vadd.f32 0.0, %v1676
      %1678 = vmatmul.f32.gmra.mxu0 %v366
      %v1679 = vpop.f32.mrf.mxu0
      %v1680 = vadd.f32 0.0, %v1679
      %1681 = vmatmul.f32.gmra.mxu0 %v368
      %v1682 = vpop.f32.mrf.mxu0
      %v1683 = vadd.f32 0.0, %v1682
      %1684 = vmatmul.f32.gmra.mxu0 %v370
      %v1685 = vpop.f32.mrf.mxu0
      %v1686 = vadd.f32 0.0, %v1685
      %1687 = vmatmul.f32.gmra.mxu0 %v372
      %v1688 = vpop.f32.mrf.mxu0
      %v1689 = vadd.f32 0.0, %v1688
      %1690 = vmatmul.f32.gmra.mxu0 %v374
      %v1691 = vpop.f32.mrf.mxu0
      %v1692 = vadd.f32 0.0, %v1691
      %1693 = vmatmul.f32.gmra.mxu0 %v376
      %v1694 = vpop.f32.mrf.mxu0
      %v1695 = vadd.f32 0.0, %v1694
      %1696 = vmatmul.f32.gmra.mxu0 %v378
      %v1697 = vpop.f32.mrf.mxu0
      %v1698 = vadd.f32 0.0, %v1697
      %1699 = vmatmul.f32.gmra.mxu0 %v380
      %v1700 = vpop.f32.mrf.mxu0
      %v1701 = vadd.f32 0.0, %v1700
      %1702 = vmatmul.f32.gmra.mxu0 %v382
      %v1703 = vpop.f32.mrf.mxu0
      %v1704 = vadd.f32 0.0, %v1703
      %1705 = vmatmul.f32.gmra.mxu0 %v384
      %v1706 = vpop.f32.mrf.mxu0
      %v1707 = vadd.f32 0.0, %v1706
      %1708 = vmatmul.f32.gmra.mxu0 %v386
      %v1709 = vpop.f32.mrf.mxu0
      %v1710 = vadd.f32 0.0, %v1709
      %1711 = vmatmul.f32.gmra.mxu0 %v388
      %v1712 = vpop.f32.mrf.mxu0
      %v1713 = vadd.f32 0.0, %v1712
      %1714 = vmatmul.f32.gmra.mxu0 %v390
      %v1715 = vpop.f32.mrf.mxu0
      %v1716 = vadd.f32 0.0, %v1715
      %1717 = vmatmul.f32.gmra.mxu0 %v392
      %v1718 = vpop.f32.mrf.mxu0
      %v1719 = vadd.f32 0.0, %v1718
      %1720 = vmatmul.f32.gmra.mxu0 %v394
      %v1721 = vpop.f32.mrf.mxu0
      %v1722 = vadd.f32 0.0, %v1721
      %1723 = vmatmul.f32.gmra.mxu0 %v396
      %v1724 = vpop.f32.mrf.mxu0
      %v1725 = vadd.f32 0.0, %v1724
      %1726 = vmatmul.f32.gmra.mxu0 %v398
      %v1727 = vpop.f32.mrf.mxu0
      %v1728 = vadd.f32 0.0, %v1727
      %1729 = vmatmul.f32.gmra.mxu0 %v400
      %v1730 = vpop.f32.mrf.mxu0
      %v1731 = vadd.f32 0.0, %v1730
      %1732 = vmatmul.f32.gmra.mxu0 %v402
      %v1733 = vpop.f32.mrf.mxu0
      %v1734 = vadd.f32 0.0, %v1733
      %1735 = vmatmul.f32.gmra.mxu0 %v404
      %v1736 = vpop.f32.mrf.mxu0
      %v1737 = vadd.f32 0.0, %v1736
      %1738 = vmatmul.f32.gmra.mxu0 %v406
      %v1739 = vpop.f32.mrf.mxu0
      %v1740 = vadd.f32 0.0, %v1739
      %1741 = vmatmul.f32.gmra.mxu0 %v408
      %v1742 = vpop.f32.mrf.mxu0
      %v1743 = vadd.f32 0.0, %v1742
      %1744 = vmatmul.f32.gmra.mxu0 %v410
      %v1745 = vpop.f32.mrf.mxu0
      %v1746 = vadd.f32 0.0, %v1745
      %1747 = vmatmul.f32.gmra.mxu0 %v412
      %v1748 = vpop.f32.mrf.mxu0
      %v1749 = vadd.f32 0.0, %v1748
      %1750 = vmatmul.f32.gmra.mxu0 %v414
      %v1751 = vpop.f32.mrf.mxu0
      %v1752 = vadd.f32 0.0, %v1751
      %1753 = vmatmul.f32.gmra.mxu0 %v416
      %v1754 = vpop.f32.mrf.mxu0
      %v1755 = vadd.f32 0.0, %v1754
      %1756 = vmatmul.f32.gmra.mxu0 %v1174
      %v1757 = vpop.f32.mrf.mxu0
      %v1758 = vadd.f32 0.0, %v1757
      %1759 = vmatmul.f32.gmra.mxu0 %v1176
      %v1760 = vpop.f32.mrf.mxu0
      %v1761 = vadd.f32 0.0, %v1760
      %1762 = vmatmul.f32.gmra.mxu0 %v1649
      %v1763 = vpop.f32.mrf.mxu0
      %v1764 = vadd.f32 0.0, %v1763
      %1765 = vmatmul.f32.gmra.mxu0 %v1651
      %v1766 = vpop.f32.mrf.mxu0
      %v1767 = vadd.f32 0.0, %v1766
      %1768 = vdwg.mxu0
      %v1769 = vadd.f32 %v1609, %v1674
      %v1770 = vadd.f32 %v1610, %v1677
      %v1771 = vadd.f32 %v1611, %v1680
      %v1772 = vadd.f32 %v1612, %v1683
      %v1773 = vadd.f32 %v1613, %v1686
      %v1774 = vadd.f32 %v1614, %v1689
      %v1775 = vadd.f32 %v1615, %v1692
      %v1776 = vadd.f32 %v1616, %v1695
      %v1777 = vadd.f32 %v1617, %v1698
      %v1778 = vadd.f32 %v1618, %v1701
      %v1779 = vadd.f32 %v1619, %v1704
      %v1780 = vadd.f32 %v1620, %v1707
      %v1781 = vadd.f32 %v1621, %v1710
      %v1782 = vadd.f32 %v1622, %v1713
      %v1783 = vadd.f32 %v1623, %v1716
      %v1784 = vadd.f32 %v1624, %v1719
      %v1785 = vadd.f32 %v1625, %v1722
      %v1786 = vadd.f32 %v1626, %v1725
      %v1787 = vadd.f32 %v1627, %v1728
      %v1788 = vadd.f32 %v1628, %v1731
      %v1789 = vadd.f32 %v1629, %v1734
      %v1790 = vadd.f32 %v1630, %v1737
      %v1791 = vadd.f32 %v1631, %v1740
      %v1792 = vadd.f32 %v1632, %v1743
      %v1793 = vadd.f32 %v1633, %v1746
      %v1794 = vadd.f32 %v1634, %v1749
      %v1795 = vadd.f32 %v1635, %v1752
      %v1796 = vadd.f32 %v1636, %v1755
      %v1797 = vadd.f32 %v1637, %v1758
      %v1798 = vadd.f32 %v1638, %v1761
      %v1799 = vadd.f32 %v1639, %v1764
      %v1800 = vadd.f32 %v1640, %v1767
      %v1801 = vrot.slane %v218, 2
      %v1802 = vrot.slane %v219, 2
      %v1803 = vsel %vm715, %v1801, %v1802
      %v1804 = vrot.slane %v220, 2
      %v1805 = vsel %vm715, %v1802, %v1804
      %s1806 = scalar_lea.vmem %s1, 32
      %v1807 = vld [vmem:[%s1806] sm:$0xf]
      %v1808 = vsel %vm353, %v1803, 0
      %v1810 = vsel %vm353, %v1805, 0
      %v1813 = vsel %vm418, %v1807, 0
      %1815 = vmatpush.msra.mxu0 0.0
      %1816 = vmatpush.msra.mxu0 0.0
      %1817 = vmatpush.msra.mxu0 0.0
      %1818 = vmatpush.msra.mxu0 0.0
      %1819 = vmatpush.msra.mxu0 0.0
      %1820 = vmatpush.msra.mxu0 0.0
      %1821 = vmatpush.msra.mxu0 0.0
      %1822 = vmatpush.msra.mxu0 0.0
      %1823 = vmatpush.msra.mxu0 0.0
      %1824 = vmatpush.msra.mxu0 0.0
      %1825 = vmatpush.msra.mxu0 0.0
      %1826 = vmatpush.msra.mxu0 0.0
      %1827 = vmatpush.msra.mxu0 0.0
      %1828 = vmatpush.msra.mxu0 0.0
      %1829 = vmatpush.msra.mxu0 0.0
      %1830 = vmatpush.msra.mxu0 %v1813
      %1831 = vmatmul.f32.gmra.mxu0 %v806
      %v1832 = vpop.f32.mrf.mxu0
      %v1833 = vadd.f32 0.0, %v1832
      %1834 = vmatmul.f32.gmra.mxu0 %v808
      %v1835 = vpop.f32.mrf.mxu0
      %v1836 = vadd.f32 0.0, %v1835
      %1837 = vmatmul.f32.gmra.mxu0 %v810
      %v1838 = vpop.f32.mrf.mxu0
      %v1839 = vadd.f32 0.0, %v1838
      %1840 = vmatmul.f32.gmra.mxu0 %v812
      %v1841 = vpop.f32.mrf.mxu0
      %v1842 = vadd.f32 0.0, %v1841
      %1843 = vmatmul.f32.gmra.mxu0 %v814
      %v1844 = vpop.f32.mrf.mxu0
      %v1845 = vadd.f32 0.0, %v1844
      %1846 = vmatmul.f32.gmra.mxu0 %v816
      %v1847 = vpop.f32.mrf.mxu0
      %v1848 = vadd.f32 0.0, %v1847
      %1849 = vmatmul.f32.gmra.mxu0 %v818
      %v1850 = vpop.f32.mrf.mxu0
      %v1851 = vadd.f32 0.0, %v1850
      %1852 = vmatmul.f32.gmra.mxu0 %v820
      %v1853 = vpop.f32.mrf.mxu0
      %v1854 = vadd.f32 0.0, %v1853
      %1855 = vmatmul.f32.gmra.mxu0 %v822
      %v1856 = vpop.f32.mrf.mxu0
      %v1857 = vadd.f32 0.0, %v1856
      %1858 = vmatmul.f32.gmra.mxu0 %v824
      %v1859 = vpop.f32.mrf.mxu0
      %v1860 = vadd.f32 0.0, %v1859
      %1861 = vmatmul.f32.gmra.mxu0 %v826
      %v1862 = vpop.f32.mrf.mxu0
      %v1863 = vadd.f32 0.0, %v1862
      %1864 = vmatmul.f32.gmra.mxu0 %v828
      %v1865 = vpop.f32.mrf.mxu0
      %v1866 = vadd.f32 0.0, %v1865
      %1867 = vmatmul.f32.gmra.mxu0 %v830
      %v1868 = vpop.f32.mrf.mxu0
      %v1869 = vadd.f32 0.0, %v1868
      %1870 = vmatmul.f32.gmra.mxu0 %v832
      %v1871 = vpop.f32.mrf.mxu0
      %v1872 = vadd.f32 0.0, %v1871
      %1873 = vmatmul.f32.gmra.mxu0 %v834
      %v1874 = vpop.f32.mrf.mxu0
      %v1875 = vadd.f32 0.0, %v1874
      %1876 = vmatmul.f32.gmra.mxu0 %v836
      %v1877 = vpop.f32.mrf.mxu0
      %v1878 = vadd.f32 0.0, %v1877
      %1879 = vmatmul.f32.gmra.mxu0 %v838
      %v1880 = vpop.f32.mrf.mxu0
      %v1881 = vadd.f32 0.0, %v1880
      %1882 = vmatmul.f32.gmra.mxu0 %v840
      %v1883 = vpop.f32.mrf.mxu0
      %v1884 = vadd.f32 0.0, %v1883
      %1885 = vmatmul.f32.gmra.mxu0 %v842
      %v1886 = vpop.f32.mrf.mxu0
      %v1887 = vadd.f32 0.0, %v1886
      %1888 = vmatmul.f32.gmra.mxu0 %v844
      %v1889 = vpop.f32.mrf.mxu0
      %v1890 = vadd.f32 0.0, %v1889
      %1891 = vmatmul.f32.gmra.mxu0 %v846
      %v1892 = vpop.f32.mrf.mxu0
      %v1893 = vadd.f32 0.0, %v1892
      %1894 = vmatmul.f32.gmra.mxu0 %v848
      %v1895 = vpop.f32.mrf.mxu0
      %v1896 = vadd.f32 0.0, %v1895
      %1897 = vmatmul.f32.gmra.mxu0 %v850
      %v1898 = vpop.f32.mrf.mxu0
      %v1899 = vadd.f32 0.0, %v1898
      %1900 = vmatmul.f32.gmra.mxu0 %v852
      %v1901 = vpop.f32.mrf.mxu0
      %v1902 = vadd.f32 0.0, %v1901
      %1903 = vmatmul.f32.gmra.mxu0 %v854
      %v1904 = vpop.f32.mrf.mxu0
      %v1905 = vadd.f32 0.0, %v1904
      %1906 = vmatmul.f32.gmra.mxu0 %v856
      %v1907 = vpop.f32.mrf.mxu0
      %v1908 = vadd.f32 0.0, %v1907
      %1909 = vmatmul.f32.gmra.mxu0 %v858
      %v1910 = vpop.f32.mrf.mxu0
      %v1911 = vadd.f32 0.0, %v1910
      %1912 = vmatmul.f32.gmra.mxu0 %v860
      %v1913 = vpop.f32.mrf.mxu0
      %v1914 = vadd.f32 0.0, %v1913
      %1915 = vmatmul.f32.gmra.mxu0 %v1333
      %v1916 = vpop.f32.mrf.mxu0
      %v1917 = vadd.f32 0.0, %v1916
      %1918 = vmatmul.f32.gmra.mxu0 %v1335
      %v1919 = vpop.f32.mrf.mxu0
      %v1920 = vadd.f32 0.0, %v1919
      %1921 = vmatmul.f32.gmra.mxu0 %v1808
      %v1922 = vpop.f32.mrf.mxu0
      %v1923 = vadd.f32 0.0, %v1922
      %1924 = vmatmul.f32.gmra.mxu0 %v1810
      %v1925 = vpop.f32.mrf.mxu0
      %v1926 = vadd.f32 0.0, %v1925
      %1927 = vdwg.mxu0
      %v1928 = vadd.f32 %v1769, %v1833
      %v1929 = vadd.f32 %v1770, %v1836
      %v1930 = vadd.f32 %v1771, %v1839
      %v1931 = vadd.f32 %v1772, %v1842
      %v1932 = vadd.f32 %v1773, %v1845
      %v1933 = vadd.f32 %v1774, %v1848
      %v1934 = vadd.f32 %v1775, %v1851
      %v1935 = vadd.f32 %v1776, %v1854
      %v1936 = vadd.f32 %v1777, %v1857
      %v1937 = vadd.f32 %v1778, %v1860
      %v1938 = vadd.f32 %v1779, %v1863
      %v1939 = vadd.f32 %v1780, %v1866
      %v1940 = vadd.f32 %v1781, %v1869
      %v1941 = vadd.f32 %v1782, %v1872
      %v1942 = vadd.f32 %v1783, %v1875
      %v1943 = vadd.f32 %v1784, %v1878
      %v1944 = vadd.f32 %v1785, %v1881
      %v1945 = vadd.f32 %v1786, %v1884
      %v1946 = vadd.f32 %v1787, %v1887
      %v1947 = vadd.f32 %v1788, %v1890
      %v1948 = vadd.f32 %v1789, %v1893
      %v1949 = vadd.f32 %v1790, %v1896
      %v1950 = vadd.f32 %v1791, %v1899
      %v1951 = vadd.f32 %v1792, %v1902
      %v1952 = vadd.f32 %v1793, %v1905
      %v1953 = vadd.f32 %v1794, %v1908
      %v1954 = vadd.f32 %v1795, %v1911
      %v1955 = vadd.f32 %v1796, %v1914
      %v1956 = vadd.f32 %v1797, %v1917
      %v1957 = vadd.f32 %v1798, %v1920
      %v1958 = vadd.f32 %v1799, %v1923
      %v1959 = vadd.f32 %v1800, %v1926
      %v1960 = vld [vmem:[%s160] sm:$0x1]
      %vm1961 = vcmask 64512
      %v1962 = vsel %vm1961, %v1928, 0.0
      %v1963 = vsel %vm1961, %v1929, 0.0
      %v1964 = vadd.f32 %v1962, %v1963
      %v1965 = vsel %vm1961, %v1930, 0.0
      %v1966 = vadd.f32 %v1964, %v1965
      %v1967 = vsel %vm1961, %v1931, 0.0
      %v1968 = vadd.f32 %v1966, %v1967
      %v1969 = vsel %vm1961, %v1932, 0.0
      %v1970 = vadd.f32 %v1968, %v1969
      %v1971 = vsel %vm1961, %v1933, 0.0
      %v1972 = vadd.f32 %v1970, %v1971
      %v1973 = vsel %vm1961, %v1934, 0.0
      %v1974 = vadd.f32 %v1972, %v1973
      %v1975 = vsel %vm1961, %v1935, 0.0
      %v1976 = vadd.f32 %v1974, %v1975
      %v1977 = vsel %vm1961, %v1936, 0.0
      %v1978 = vadd.f32 %v1976, %v1977
      %v1979 = vsel %vm1961, %v1937, 0.0
      %v1980 = vadd.f32 %v1978, %v1979
      %v1981 = vsel %vm1961, %v1938, 0.0
      %v1982 = vadd.f32 %v1980, %v1981
      %v1983 = vsel %vm1961, %v1939, 0.0
      %v1984 = vadd.f32 %v1982, %v1983
      %v1985 = vsel %vm1961, %v1940, 0.0
      %v1986 = vadd.f32 %v1984, %v1985
      %v1987 = vsel %vm1961, %v1941, 0.0
      %v1988 = vadd.f32 %v1986, %v1987
      %v1989 = vsel %vm1961, %v1942, 0.0
      %v1990 = vadd.f32 %v1988, %v1989
      %v1991 = vsel %vm1961, %v1943, 0.0
      %v1992 = vadd.f32 %v1990, %v1991
      %v1993 = vsel %vm1961, %v1944, 0.0
      %v1994 = vadd.f32 %v1992, %v1993
      %v1995 = vsel %vm1961, %v1945, 0.0
      %v1996 = vadd.f32 %v1994, %v1995
      %v1997 = vsel %vm1961, %v1946, 0.0
      %v1998 = vadd.f32 %v1996, %v1997
      %v1999 = vsel %vm1961, %v1947, 0.0
      %v2000 = vadd.f32 %v1998, %v1999
      %v2001 = vsel %vm1961, %v1948, 0.0
      %v2002 = vadd.f32 %v2000, %v2001
      %v2003 = vsel %vm1961, %v1949, 0.0
      %v2004 = vadd.f32 %v2002, %v2003
      %v2005 = vsel %vm1961, %v1950, 0.0
      %v2006 = vadd.f32 %v2004, %v2005
      %v2007 = vsel %vm1961, %v1951, 0.0
      %v2008 = vadd.f32 %v2006, %v2007
      %v2009 = vsel %vm1961, %v1952, 0.0
      %v2010 = vadd.f32 %v2008, %v2009
      %v2011 = vsel %vm1961, %v1953, 0.0
      %v2012 = vadd.f32 %v2010, %v2011
      %v2013 = vsel %vm1961, %v1954, 0.0
      %v2014 = vadd.f32 %v2012, %v2013
      %v2015 = vsel %vm1961, %v1955, 0.0
      %v2016 = vadd.f32 %v2014, %v2015
      %v2017 = vsel %vm1961, %v1956, 0.0
      %v2018 = vadd.f32 %v2016, %v2017
      %v2019 = vsel %vm1961, %v1957, 0.0
      %v2020 = vadd.f32 %v2018, %v2019
      %v2021 = vsel %vm1961, %v1958, 0.0
      %v2022 = vadd.f32 %v2020, %v2021
      %v2023 = vsel %vm1961, %v1959, 0.0
      %v2024 = vadd.f32 %v2022, %v2023
      %v2025 = vrot.slane %v2024, 4
      %v2026 = vadd.f32 %v2024, %v2025
      %v2027 = vrot.slane %v2026, 2
      %v2028 = vadd.f32 %v2026, %v2027
      %v2029 = vrot.slane %v2028, 1
      %v2030 = vadd.f32 %v2028, %v2029
      %v2031 = vadd.f32 %v1960, %v2030
      %vm2032 = vcmask 57344
      %2033 = vst.msk [vmem:[%s160] sm:$0x1] %vm2032, %v2031
      %v2034 = vld [vmem:[%s160 + $0x1] sm:$0x1]
      %v2035 = vmul.f32 %v1928, %v1928
      %v2036 = vmul.f32 %v1929, %v1929
      %v2037 = vmul.f32 %v1930, %v1930
      %v2038 = vmul.f32 %v1931, %v1931
      %v2039 = vmul.f32 %v1932, %v1932
      %v2040 = vmul.f32 %v1933, %v1933
      %v2041 = vmul.f32 %v1934, %v1934
      %v2042 = vmul.f32 %v1935, %v1935
      %v2043 = vmul.f32 %v1936, %v1936
      %v2044 = vmul.f32 %v1937, %v1937
      %v2045 = vmul.f32 %v1938, %v1938
      %v2046 = vmul.f32 %v1939, %v1939
      %v2047 = vmul.f32 %v1940, %v1940
      %v2048 = vmul.f32 %v1941, %v1941
      %v2049 = vmul.f32 %v1942, %v1942
      %v2050 = vmul.f32 %v1943, %v1943
      %v2051 = vmul.f32 %v1944, %v1944
      %v2052 = vmul.f32 %v1945, %v1945
      %v2053 = vmul.f32 %v1946, %v1946
      %v2054 = vmul.f32 %v1947, %v1947
      %v2055 = vmul.f32 %v1948, %v1948
      %v2056 = vmul.f32 %v1949, %v1949
      %v2057 = vmul.f32 %v1950, %v1950
      %v2058 = vmul.f32 %v1951, %v1951
      %v2059 = vmul.f32 %v1952, %v1952
      %v2060 = vmul.f32 %v1953, %v1953
      %v2061 = vmul.f32 %v1954, %v1954
      %v2062 = vmul.f32 %v1955, %v1955
      %v2063 = vmul.f32 %v1956, %v1956
      %v2064 = vmul.f32 %v1957, %v1957
      %v2065 = vmul.f32 %v1958, %v1958
      %v2066 = vmul.f32 %v1959, %v1959
      %v2067 = vsel %vm1961, %v2035, 0.0
      %v2068 = vsel %vm1961, %v2036, 0.0
      %v2069 = vadd.f32 %v2067, %v2068
      %v2070 = vsel %vm1961, %v2037, 0.0
      %v2071 = vadd.f32 %v2069, %v2070
      %v2072 = vsel %vm1961, %v2038, 0.0
      %v2073 = vadd.f32 %v2071, %v2072
      %v2074 = vsel %vm1961, %v2039, 0.0
      %v2075 = vadd.f32 %v2073, %v2074
      %v2076 = vsel %vm1961, %v2040, 0.0
      %v2077 = vadd.f32 %v2075, %v2076
      %v2078 = vsel %vm1961, %v2041, 0.0
      %v2079 = vadd.f32 %v2077, %v2078
      %v2080 = vsel %vm1961, %v2042, 0.0
      %v2081 = vadd.f32 %v2079, %v2080
      %v2082 = vsel %vm1961, %v2043, 0.0
      %v2083 = vadd.f32 %v2081, %v2082
      %v2084 = vsel %vm1961, %v2044, 0.0
      %v2085 = vadd.f32 %v2083, %v2084
      %v2086 = vsel %vm1961, %v2045, 0.0
      %v2087 = vadd.f32 %v2085, %v2086
      %v2088 = vsel %vm1961, %v2046, 0.0
      %v2089 = vadd.f32 %v2087, %v2088
      %v2090 = vsel %vm1961, %v2047, 0.0
      %v2091 = vadd.f32 %v2089, %v2090
      %v2092 = vsel %vm1961, %v2048, 0.0
      %v2093 = vadd.f32 %v2091, %v2092
      %v2094 = vsel %vm1961, %v2049, 0.0
      %v2095 = vadd.f32 %v2093, %v2094
      %v2096 = vsel %vm1961, %v2050, 0.0
      %v2097 = vadd.f32 %v2095, %v2096
      %v2098 = vsel %vm1961, %v2051, 0.0
      %v2099 = vadd.f32 %v2097, %v2098
      %v2100 = vsel %vm1961, %v2052, 0.0
      %v2101 = vadd.f32 %v2099, %v2100
      %v2102 = vsel %vm1961, %v2053, 0.0
      %v2103 = vadd.f32 %v2101, %v2102
      %v2104 = vsel %vm1961, %v2054, 0.0
      %v2105 = vadd.f32 %v2103, %v2104
      %v2106 = vsel %vm1961, %v2055, 0.0
      %v2107 = vadd.f32 %v2105, %v2106
      %v2108 = vsel %vm1961, %v2056, 0.0
      %v2109 = vadd.f32 %v2107, %v2108
      %v2110 = vsel %vm1961, %v2057, 0.0
      %v2111 = vadd.f32 %v2109, %v2110
      %v2112 = vsel %vm1961, %v2058, 0.0
      %v2113 = vadd.f32 %v2111, %v2112
      %v2114 = vsel %vm1961, %v2059, 0.0
      %v2115 = vadd.f32 %v2113, %v2114
      %v2116 = vsel %vm1961, %v2060, 0.0
      %v2117 = vadd.f32 %v2115, %v2116
      %v2118 = vsel %vm1961, %v2061, 0.0
      %v2119 = vadd.f32 %v2117, %v2118
      %v2120 = vsel %vm1961, %v2062, 0.0
      %v2121 = vadd.f32 %v2119, %v2120
      %v2122 = vsel %vm1961, %v2063, 0.0
      %v2123 = vadd.f32 %v2121, %v2122
      %v2124 = vsel %vm1961, %v2064, 0.0
      %v2125 = vadd.f32 %v2123, %v2124
      %v2126 = vsel %vm1961, %v2065, 0.0
      %v2127 = vadd.f32 %v2125, %v2126
      %v2128 = vsel %vm1961, %v2066, 0.0
      %v2129 = vadd.f32 %v2127, %v2128
      %v2130 = vrot.slane %v2129, 4
      %v2131 = vadd.f32 %v2129, %v2130
      %v2132 = vrot.slane %v2131, 2
      %v2133 = vadd.f32 %v2131, %v2132
      %v2134 = vrot.slane %v2133, 1
      %v2135 = vadd.f32 %v2133, %v2134
      %v2136 = vadd.f32 %v2034, %v2135
      %2137 = vst.msk [vmem:[%s160 + $0x1] sm:$0x1] %vm2032, %v2136
      %p2138 = scmp.lt.s32.totalorder %s17, 1
      %s2139 = scalar_select %p2138, %s17, 1
      %s2140 = smul.addr %s2139, 2
      %s2141 = scalar_lea.vmem %s2, %s2140
      // Predicated region
      $region33: #{cnn_unit_forward.2} parent=27 // pred_check
        %p2142 = pneg %p92
      $region34: #{cnn_unit_forward.2} parent=27 // pred_check_branch
        %2144 = sbr.rel (%p2142) target = $region36
      $region35: #{cnn_unit_forward.2} parent=27 // pred_region
        _
      $region36: #{cnn_unit_forward.2} parent=27 // pred_fallthru
        _
    $region28: #{cnn_unit_forward.2} parent=5 // pred_fallthru
      _
    %p2145 = scmp.le.s32.totalorder 2, %s8
    // Predicated region
    $region37: #{cnn_unit_forward.2} parent=5 // pred_check
      %p2146 = pneg %p2145
    $region38: #{cnn_unit_forward.2} parent=5 // pred_check_branch
      %2148 = sbr.rel (%p2146) target = $region40
    $region39: #{cnn_unit_forward.2} parent=5 // pred_region
      %s2149 = ssub.s32 %s8, 2
      // Predicated region
      $region41: #{cnn_unit_forward.2} parent=39 // pred_check
        %p2150 = pneg %p98
      $region42: #{cnn_unit_forward.2} parent=39 // pred_check_branch
        %2152 = sbr.rel (%p2150) target = $region44
      $region43: #{cnn_unit_forward.2} parent=39 // pred_region
        %p2153 = scmp.lt.s32.totalorder %s19, 1
        %s2154 = scalar_select %p2153, %s19, 1
        %s2155 = smul.addr %s2154, 2
        %s2156 = scalar_lea.vmem %s2, %s2155
      $region44: #{cnn_unit_forward.2} parent=39 // pred_fallthru
        _
    $region40: #{cnn_unit_forward.2} parent=5 // pred_fallthru
      _
  $region6: #{cnn_unit_forward.2} parent=0 // loop_footer
    %s12 = sadd.s32 1, %s8
  $region7: #{cnn_unit_forward.2} parent=0 // loop_footer_branch
    %7 = sbr.rel target = $region3
  $region8: #{cnn_unit_forward.2} parent=0 // loop_exit
    _

// kernel: cnn_unit_forward.3
$region0: #{cnn_unit_forward.3}
  #allocation0 [shape = 'u32[]', space=smem, size = 0x4, offset = 0x4, fixed_abs, tag = 'smem constant byte address 0x4 - core index']
  #allocation1 [shape = 'u32[72,128]{1,0:T(1,128)}', space=vmem, size = 0x9000, scoped, tag = 'internal scratch']
  %s0 = inlined_call_operand.vmem [shape: f32[2,18,18,4], index: 0, kind: input, shape index: {}]
  %s1 = inlined_call_operand.vmem [shape: f32[3,3,4,8], index: 1, kind: input, shape index: {}]
  %s2 = inlined_call_operand.vmem [shape: f32[2,8], index: 2, kind: input, shape index: {}]
  %s3 = inlined_call_operand.vmem [shape: f32[2,256,8], index: 3, kind: output, shape index: {}]
  %s4 = sld [smem:[#allocation0]]
  $region45: #{cnn_unit_forward.3} parent=0
    _
  %s6 = ssub.s32 1, %s4
  %s7 = scalar_select 0, %s6, %s4
  loop: start=0, step=1, limit=4
  $region2: #{cnn_unit_forward.3} parent=0 // loop_pre_header
    _
  $region3: #{cnn_unit_forward.3} parent=0 // loop_header
    %s9 = sphi 0, %s13
    %p10 = scmp.ge.s32.totalorder %s9, 4
    %s19 = sphi 0, %s21
    %s22 = sphi 0, %s19
    %s23 = sphi 0, %s22
    %s39 = sphi 0, %s23
    %s43 = sphi 0, %s43
    %s45 = sphi 0, %s43
    %s46 = sphi 0, %s45
    %s60 = sphi 0, %s46
    %s64 = sphi 0, %s64
    %s66 = sphi 0, %s64
    %s67 = sphi 0, %s66
    %s81 = sphi 0, %s67
    %s87 = sphi 0, %s89
    %s90 = sphi 0, %s87
    %s91 = sphi 0, %s90
    %s107 = sphi 0, %s91
  $region4: #{cnn_unit_forward.3} parent=0 // loop_header_branch
    %12 = sbr.rel (%p10) target = $region8
  $region5: #{cnn_unit_forward.3} parent=0 // loop_body
    %s14 = ssub.s32 %s9, 1
    %s15 = ssub.s32 %s9, 2
    %s16 = sadd.s32 %s9, 1
    %s17 = ssub.s32 %s9, %s16
    %p18 = scmp.eq.s32.totalorder %s17, 0
    %s20 = sadd.s32 %s19, 1
    %s21 = scalar_select %p18, %s19, %s20
    %p24 = pneg %p18
    %p25 = scmp.eq.s32.totalorder %s9, 1
    %p26 = por %p24, %p25
    %p27 = scmp.ne.s32.totalorder %s19, %s22
    %p28 = scmp.eq.s32.totalorder %s9, 0
    %p29 = por %p27, %p28
    %p30 = scmp.ne.s32.totalorder %s19, %s22
    %p31 = scmp.eq.s32.totalorder %s14, 1
    %p32 = por %p30, %p31
    %p33 = scmp.ne.s32.totalorder %s22, %s23
    %p34 = scmp.eq.s32.totalorder %s14, 0
    %p35 = por %p33, %p34
    %p36 = scmp.ne.s32.totalorder %s22, %s23
    %p37 = scmp.eq.s32.totalorder %s15, 1
    %p38 = por %p36, %p37
    %p40 = scmp.ne.s32.totalorder %s23, %s39
    %p41 = scmp.eq.s32.totalorder %s15, 0
    %p42 = por %p40, %p41
    %s44 = sadd.s32 %s43, 1
    %p47 = scmp.eq.s32.totalorder %s9, 1
    %p48 = scmp.ne.s32.totalorder %s43, %s45
    %p49 = scmp.eq.s32.totalorder %s9, 0
    %p50 = por %p48, %p49
    %p51 = scmp.ne.s32.totalorder %s43, %s45
    %p52 = scmp.eq.s32.totalorder %s14, 1
    %p53 = por %p51, %p52
    %p54 = scmp.ne.s32.totalorder %s45, %s46
    %p55 = scmp.eq.s32.totalorder %s14, 0
    %p56 = por %p54, %p55
    %p57 = scmp.ne.s32.totalorder %s45, %s46
    %p58 = scmp.eq.s32.totalorder %s15, 1
    %p59 = por %p57, %p58
    %p61 = scmp.ne.s32.totalorder %s46, %s60
    %p62 = scmp.eq.s32.totalorder %s15, 0
    %p63 = por %p61, %p62
    %s65 = sadd.s32 %s64, 1
    %p68 = scmp.eq.s32.totalorder %s9, 1
    %p69 = scmp.ne.s32.totalorder %s64, %s66
    %p70 = scmp.eq.s32.totalorder %s9, 0
    %p71 = por %p69, %p70
    %p72 = scmp.ne.s32.totalorder %s64, %s66
    %p73 = scmp.eq.s32.totalorder %s14, 1
    %p74 = por %p72, %p73
    %p75 = scmp.ne.s32.totalorder %s66, %s67
    %p76 = scmp.eq.s32.totalorder %s14, 0
    %p77 = por %p75, %p76
    %p78 = scmp.ne.s32.totalorder %s66, %s67
    %p79 = scmp.eq.s32.totalorder %s15, 1
    %p80 = por %p78, %p79
    %p82 = scmp.ne.s32.totalorder %s67, %s81
    %p83 = scmp.eq.s32.totalorder %s15, 0
    %p84 = por %p82, %p83
    %s85 = ssub.s32 %s9, %s16
    %p86 = scmp.eq.s32.totalorder %s85, 0
    %s88 = sadd.s32 %s87, 1
    %s89 = scalar_select %p86, %s87, %s88
    %p92 = pneg %p86
    %p93 = scmp.eq.s32.totalorder %s9, 1
    %p94 = por %p92, %p93
    %p95 = scmp.ne.s32.totalorder %s87, %s90
    %p96 = scmp.eq.s32.totalorder %s9, 0
    %p97 = por %p95, %p96
    %p98 = scmp.ne.s32.totalorder %s87, %s90
    %p99 = scmp.eq.s32.totalorder %s14, 1
    %p100 = por %p98, %p99
    %p101 = scmp.ne.s32.totalorder %s90, %s91
    %p102 = scmp.eq.s32.totalorder %s14, 0
    %p103 = por %p101, %p102
    %p104 = scmp.ne.s32.totalorder %s90, %s91
    %p105 = scmp.eq.s32.totalorder %s15, 1
    %p106 = por %p104, %p105
    %p108 = scmp.ne.s32.totalorder %s91, %s107
    %p109 = scmp.eq.s32.totalorder %s15, 0
    %p110 = por %p108, %p109
    %p111 = scmp.le.s32.totalorder 1, %s9
    %p112 = scmp.lt.s32.totalorder %s9, 3
    %p113 = pnand %p111, %p112
    %p114 = pneg %p113
    // Predicated region
    $region9: #{cnn_unit_forward.3} parent=5 // pred_check
      _
    $region10: #{cnn_unit_forward.3} parent=5 // pred_check_branch
      %116 = sbr.rel (%p113) target = $region12
    $region11: #{cnn_unit_forward.3} parent=5 // pred_region
      %s117 = ssub.s32 %s9, 1
      // Predicated region
      $region13: #{cnn_unit_forward.3} parent=11 // pred_check
        %p118 = pneg %p56
      $region14: #{cnn_unit_forward.3} parent=11 // pred_check_branch
        %120 = sbr.rel (%p118) target = $region16
      $region15: #{cnn_unit_forward.3} parent=11 // pred_region
        _
      $region16: #{cnn_unit_forward.3} parent=11 // pred_fallthru
        _
      // Predicated region
      $region17: #{cnn_unit_forward.3} parent=11 // pred_check
        %p121 = pneg %p77
      $region18: #{cnn_unit_forward.3} parent=11 // pred_check_branch
        %123 = sbr.rel (%p121) target = $region20
      $region19: #{cnn_unit_forward.3} parent=11 // pred_region
        _
      $region20: #{cnn_unit_forward.3} parent=11 // pred_fallthru
        _
    $region12: #{cnn_unit_forward.3} parent=5 // pred_fallthru
      _
    %p124 = scmp.lt.s32.totalorder %s9, 2
    // Predicated region
    $region21: #{cnn_unit_forward.3} parent=5 // pred_check
      %p125 = pneg %p124
    $region22: #{cnn_unit_forward.3} parent=5 // pred_check_branch
      %127 = sbr.rel (%p125) target = $region24
    $region23: #{cnn_unit_forward.3} parent=5 // pred_region
      // Predicated region
      $region25: #{cnn_unit_forward.3} parent=23 // pred_check
        %p128 = pneg %p29
      $region26: #{cnn_unit_forward.3} parent=23 // pred_check_branch
        %130 = sbr.rel (%p128) target = $region28
      $region27: #{cnn_unit_forward.3} parent=23 // pred_region
        %p131 = scmp.lt.s32.totalorder %s9, 1
        %s132 = scalar_select %p131, %s9, 1
        %s133 = smul.addr %s132, 54
        %s134 = smul.addr %s133, 8
        %s135 = scalar_lea.vmem %s0, %s134
      $region28: #{cnn_unit_forward.3} parent=23 // pred_fallthru
        _
    $region24: #{cnn_unit_forward.3} parent=5 // pred_fallthru
      _
    %p136 = scmp.le.s32.totalorder 1, %s9
    %p137 = scmp.lt.s32.totalorder %s9, 3
    %p138 = pnand %p136, %p137
    %p139 = pneg %p138
    // Predicated region
    $region29: #{cnn_unit_forward.3} parent=5 // pred_check
      _
    $region30: #{cnn_unit_forward.3} parent=5 // pred_check_branch
      %141 = sbr.rel (%p138) target = $region32
    $region31: #{cnn_unit_forward.3} parent=5 // pred_region
      %s142 = ssub.s32 %s9, 1
      %p143 = scmp.lt.s32.totalorder %s14, 1
      %s144 = scalar_select %p143, %s14, 1
      %s145 = smul.addr %s144, 54
      %s146 = smul.addr %s145, 8
      %s147 = scalar_lea.vmem %s0, %s146
      %p148 = pneg %p35
      %p149 = pneg %p32
      %p150 = pneg %p56
      %p151 = pneg %p53
      %p152 = pneg %p77
      %p153 = pneg %p74
      %p154 = pneg %p103
      %p155 = pneg %p100
      %p156 = scmp.lt.s32.totalorder %s14, 1
      %s157 = scalar_select %p156, %s14, 1
      %s158 = smul.addr %s157, 32
      %s159 = smul.addr %s158, 8
      %s160 = scalar_lea.vmem %s3, %s159
      %p161 = scmp.lt.s32.totalorder %s14, 1
      %s162 = scalar_select %p161, %s14, 1
      %s163 = smul.addr %s162, 54
      %s164 = smul.addr %s163, 8
      %s165 = scalar_lea.vmem %s0, %s164
      %p166 = scmp.lt.s32.totalorder %s14, 1
      %s167 = scalar_select %p166, %s14, 1
      %s168 = smul.addr %s167, 32
      %s169 = smul.addr %s168, 8
      %s170 = scalar_lea.vmem %s3, %s169
      %v171 = vld [vmem:[%s165] sm:$0xff]
      %v172 = vld [vmem:[%s165 + $0x8] sm:$0xff]
      %v173 = vld [vmem:[%s165 + $0x10] sm:$0x3]
      %v174 = vld [vmem:[%s165 + $0x18] sm:$0xff]
      %v175 = vld [vmem:[%s165 + $0x20] sm:$0xff]
      %v176 = vld [vmem:[%s165 + $0x28] sm:$0x3]
      %v177 = vld [vmem:[%s165 + $0x30] sm:$0xff]
      %v178 = vld [vmem:[%s165 + $0x38] sm:$0xff]
      %v179 = vld [vmem:[%s165 + $0x40] sm:$0x3]
      %v180 = vld [vmem:[%s165 + $0x48] sm:$0xff]
      %v181 = vld [vmem:[%s165 + $0x50] sm:$0xff]
      %v182 = vld [vmem:[%s165 + $0x58] sm:$0x3]
      %v183 = vld [vmem:[%s165 + $0x60] sm:$0xff]
      %v184 = vld [vmem:[%s165 + $0x68] sm:$0xff]
      %v185 = vld [vmem:[%s165 + $0x70] sm:$0x3]
      %v186 = vld [vmem:[%s165 + $0x78] sm:$0xff]
      %v187 = vld [vmem:[%s165 + $0x80] sm:$0xff]
      %v188 = vld [vmem:[%s165 + $0x88] sm:$0x3]
      %v189 = vld [vmem:[%s165 + $0x90] sm:$0xff]
      %v190 = vld [vmem:[%s165 + $0x98] sm:$0xff]
      %v191 = vld [vmem:[%s165 + $0xa0] sm:$0x3]
      %v192 = vld [vmem:[%s165 + $0xa8] sm:$0xff]
      %v193 = vld [vmem:[%s165 + $0xb0] sm:$0xff]
      %v194 = vld [vmem:[%s165 + $0xb8] sm:$0x3]
      %v195 = vld [vmem:[%s165 + $0xc0] sm:$0xff]
      %v196 = vld [vmem:[%s165 + $0xc8] sm:$0xff]
      %v197 = vld [vmem:[%s165 + $0xd0] sm:$0x3]
      %v198 = vld [vmem:[%s165 + $0xd8] sm:$0xff]
      %v199 = vld [vmem:[%s165 + $0xe0] sm:$0xff]
      %v200 = vld [vmem:[%s165 + $0xe8] sm:$0x3]
      %v201 = vld [vmem:[%s165 + $0xf0] sm:$0xff]
      %v202 = vld [vmem:[%s165 + $0xf8] sm:$0xff]
      %v203 = vld [vmem:[%s165 + $0x100] sm:$0x3]
      %v204 = vld [vmem:[%s165 + $0x108] sm:$0xff]
      %v205 = vld [vmem:[%s165 + $0x110] sm:$0xff]
      %v206 = vld [vmem:[%s165 + $0x118] sm:$0x3]
      %v207 = vld [vmem:[%s165 + $0x120] sm:$0xff]
      %v208 = vld [vmem:[%s165 + $0x128] sm:$0xff]
      %v209 = vld [vmem:[%s165 + $0x130] sm:$0x3]
      %v210 = vld [vmem:[%s165 + $0x138] sm:$0xff]
      %v211 = vld [vmem:[%s165 + $0x140] sm:$0xff]
      %v212 = vld [vmem:[%s165 + $0x148] sm:$0x3]
      %v213 = vld [vmem:[%s165 + $0x150] sm:$0xff]
      %v214 = vld [vmem:[%s165 + $0x158] sm:$0xff]
      %v215 = vld [vmem:[%s165 + $0x160] sm:$0x3]
      %v216 = vld [vmem:[%s165 + $0x168] sm:$0xff]
      %v217 = vld [vmem:[%s165 + $0x170] sm:$0xff]
      %v218 = vld [vmem:[%s165 + $0x178] sm:$0x3]
      %v219 = vld [vmem:[%s165 + $0x180] sm:$0xff]
      %v220 = vld [vmem:[%s165 + $0x188] sm:$0xff]
      %v221 = vld [vmem:[%s165 + $0x190] sm:$0x3]
      %v222 = vld [vmem:[%s165 + $0x198] sm:$0xff]
      %v223 = vld [vmem:[%s165 + $0x1a0] sm:$0xff]
      %v224 = vld [vmem:[%s165 + $0x1a8] sm:$0x3]
      %v225 = vld [vmem:[%s1] sm:$0xf]
      %vm274 = vcmask 1046528
      %v275 = vrot.slane %v171, 1
      %v276 = vrot.slane %v172, 1
      %v277 = vsel %vm274, %v275, %v276
      %v278 = vrot.slane %v173, 1
      %v279 = vsel %vm274, %v276, %v278
      %v280 = vrot.slane %v174, 1
      %v281 = vrot.slane %v175, 1
      %v282 = vsel %vm274, %v280, %v281
      %v283 = vrot.slane %v176, 1
      %v284 = vsel %vm274, %v281, %v283
      %v285 = vrot.slane %v177, 1
      %v286 = vrot.slane %v178, 1
      %v287 = vsel %vm274, %v285, %v286
      %v288 = vrot.slane %v179, 1
      %v289 = vsel %vm274, %v286, %v288
      %v290 = vrot.slane %v180, 1
      %v291 = vrot.slane %v181, 1
      %v292 = vsel %vm274, %v290, %v291
      %v293 = vrot.slane %v182, 1
      %v294 = vsel %vm274, %v291, %v293
      %v295 = vrot.slane %v183, 1
      %v296 = vrot.slane %v184, 1
      %v297 = vsel %vm274, %v295, %v296
      %v298 = vrot.slane %v185, 1
      %v299 = vsel %vm274, %v296, %v298
      %v300 = vrot.slane %v186, 1
      %v301 = vrot.slane %v187, 1
      %v302 = vsel %vm274, %v300, %v301
      %v303 = vrot.slane %v188, 1
      %v304 = vsel %vm274, %v301, %v303
      %v305 = vrot.slane %v189, 1
      %v306 = vrot.slane %v190, 1
      %v307 = vsel %vm274, %v305, %v306
      %v308 = vrot.slane %v191, 1
      %v309 = vsel %vm274, %v306, %v308
      %v310 = vrot.slane %v192, 1
      %v311 = vrot.slane %v193, 1
      %v312 = vsel %vm274, %v310, %v311
      %v313 = vrot.slane %v194, 1
      %v314 = vsel %vm274, %v311, %v313
      %v315 = vrot.slane %v195, 1
      %v316 = vrot.slane %v196, 1
      %v317 = vsel %vm274, %v315, %v316
      %v318 = vrot.slane %v197, 1
      %v319 = vsel %vm274, %v316, %v318
      %v320 = vrot.slane %v198, 1
      %v321 = vrot.slane %v199, 1
      %v322 = vsel %vm274, %v320, %v321
      %v323 = vrot.slane %v200, 1
      %v324 = vsel %vm274, %v321, %v323
      %v325 = vrot.slane %v201, 1
      %v326 = vrot.slane %v202, 1
      %v327 = vsel %vm274, %v325, %v326
      %v328 = vrot.slane %v203, 1
      %v329 = vsel %vm274, %v326, %v328
      %v330 = vrot.slane %v204, 1
      %v331 = vrot.slane %v205, 1
      %v332 = vsel %vm274, %v330, %v331
      %v333 = vrot.slane %v206, 1
      %v334 = vsel %vm274, %v331, %v333
      %v335 = vrot.slane %v207, 1
      %v336 = vrot.slane %v208, 1
      %v337 = vsel %vm274, %v335, %v336
      %v338 = vrot.slane %v209, 1
      %v339 = vsel %vm274, %v336, %v338
      %v340 = vrot.slane %v210, 1
      %v341 = vrot.slane %v211, 1
      %v342 = vsel %vm274, %v340, %v341
      %v343 = vrot.slane %v212, 1
      %v344 = vsel %vm274, %v341, %v343
      %v345 = vrot.slane %v213, 1
      %v346 = vrot.slane %v214, 1
      %v347 = vsel %vm274, %v345, %v346
      %v348 = vrot.slane %v215, 1
      %v349 = vsel %vm274, %v346, %v348
      %v350 = vrot.slane %v216, 1
      %v351 = vrot.slane %v217, 1
      %v352 = vsel %vm274, %v350, %v351
      %v353 = vrot.slane %v218, 1
      %v354 = vsel %vm274, %v351, %v353
      %s355 = scalar_lea.vmem %s1, 4
      %v356 = vld [vmem:[%s355] sm:$0xf]
      %vm357 = vcmask 31744
      %v358 = vsel %vm357, %v277, 0
      %v360 = vsel %vm357, %v279, 0
      %v362 = vsel %vm357, %v282, 0
      %v364 = vsel %vm357, %v284, 0
      %v366 = vsel %vm357, %v287, 0
      %v368 = vsel %vm357, %v289, 0
      %v370 = vsel %vm357, %v292, 0
      %v372 = vsel %vm357, %v294, 0
      %v374 = vsel %vm357, %v297, 0
      %v376 = vsel %vm357, %v299, 0
      %v378 = vsel %vm357, %v302, 0
      %v380 = vsel %vm357, %v304, 0
      %v382 = vsel %vm357, %v307, 0
      %v384 = vsel %vm357, %v309, 0
      %v386 = vsel %vm357, %v312, 0
      %v388 = vsel %vm357, %v314, 0
      %v390 = vsel %vm357, %v317, 0
      %v392 = vsel %vm357, %v319, 0
      %v394 = vsel %vm357, %v322, 0
      %v396 = vsel %vm357, %v324, 0
      %v398 = vsel %vm357, %v327, 0
      %v400 = vsel %vm357, %v329, 0
      %v402 = vsel %vm357, %v332, 0
      %v404 = vsel %vm357, %v334, 0
      %v406 = vsel %vm357, %v337, 0
      %v408 = vsel %vm357, %v339, 0
      %v410 = vsel %vm357, %v342, 0
      %v412 = vsel %vm357, %v344, 0
      %v414 = vsel %vm357, %v347, 0
      %v416 = vsel %vm357, %v349, 0
      %v418 = vsel %vm357, %v352, 0
      %v420 = vsel %vm357, %v354, 0
      %vm422 = vcmask 1043456
      %v424 = vsel %vm422, %v356, 0
      %426 = vmatpush.msra.mxu0 0.0
      %427 = vmatpush.msra.mxu0 0.0
      %428 = vmatpush.msra.mxu0 0.0
      %429 = vmatpush.msra.mxu0 0.0
      %430 = vmatpush.msra.mxu0 0.0
      %431 = vmatpush.msra.mxu0 0.0
      %432 = vmatpush.msra.mxu0 0.0
      %433 = vmatpush.msra.mxu0 0.0
      %434 = vmatpush.msra.mxu0 0.0
      %435 = vmatpush.msra.mxu0 0.0
      %436 = vmatpush.msra.mxu0 0.0
      %437 = vmatpush.msra.mxu0 0.0
      %438 = vmatpush.msra.mxu0 0.0
      %439 = vmatpush.msra.mxu0 0.0
      %440 = vmatpush.msra.mxu0 0.0
      %441 = vmatpush.msra.mxu0 %v424
      %442 = vmatmul.f32.gmra.mxu0 %v358
      %v443 = vpop.f32.mrf.mxu0
      %v444 = vadd.f32 0.0, %v443
      %445 = vmatmul.f32.gmra.mxu0 %v360
      %v446 = vpop.f32.mrf.mxu0
      %v447 = vadd.f32 0.0, %v446
      %448 = vmatmul.f32.gmra.mxu0 %v362
      %v449 = vpop.f32.mrf.mxu0
      %v450 = vadd.f32 0.0, %v449
      %451 = vmatmul.f32.gmra.mxu0 %v364
      %v452 = vpop.f32.mrf.mxu0
      %v453 = vadd.f32 0.0, %v452
      %454 = vmatmul.f32.gmra.mxu0 %v366
      %v455 = vpop.f32.mrf.mxu0
      %v456 = vadd.f32 0.0, %v455
      %457 = vmatmul.f32.gmra.mxu0 %v368
      %v458 = vpop.f32.mrf.mxu0
      %v459 = vadd.f32 0.0, %v458
      %460 = vmatmul.f32.gmra.mxu0 %v370
      %v461 = vpop.f32.mrf.mxu0
      %v462 = vadd.f32 0.0, %v461
      %463 = vmatmul.f32.gmra.mxu0 %v372
      %v464 = vpop.f32.mrf.mxu0
      %v465 = vadd.f32 0.0, %v464
      %466 = vmatmul.f32.gmra.mxu0 %v374
      %v467 = vpop.f32.mrf.mxu0
      %v468 = vadd.f32 0.0, %v467
      %469 = vmatmul.f32.gmra.mxu0 %v376
      %v470 = vpop.f32.mrf.mxu0
      %v471 = vadd.f32 0.0, %v470
      %472 = vmatmul.f32.gmra.mxu0 %v378
      %v473 = vpop.f32.mrf.mxu0
      %v474 = vadd.f32 0.0, %v473
      %475 = vmatmul.f32.gmra.mxu0 %v380
      %v476 = vpop.f32.mrf.mxu0
      %v477 = vadd.f32 0.0, %v476
      %478 = vmatmul.f32.gmra.mxu0 %v382
      %v479 = vpop.f32.mrf.mxu0
      %v480 = vadd.f32 0.0, %v479
      %481 = vmatmul.f32.gmra.mxu0 %v384
      %v482 = vpop.f32.mrf.mxu0
      %v483 = vadd.f32 0.0, %v482
      %484 = vmatmul.f32.gmra.mxu0 %v386
      %v485 = vpop.f32.mrf.mxu0
      %v486 = vadd.f32 0.0, %v485
      %487 = vmatmul.f32.gmra.mxu0 %v388
      %v488 = vpop.f32.mrf.mxu0
      %v489 = vadd.f32 0.0, %v488
      %490 = vmatmul.f32.gmra.mxu0 %v390
      %v491 = vpop.f32.mrf.mxu0
      %v492 = vadd.f32 0.0, %v491
      %493 = vmatmul.f32.gmra.mxu0 %v392
      %v494 = vpop.f32.mrf.mxu0
      %v495 = vadd.f32 0.0, %v494
      %496 = vmatmul.f32.gmra.mxu0 %v394
      %v497 = vpop.f32.mrf.mxu0
      %v498 = vadd.f32 0.0, %v497
      %499 = vmatmul.f32.gmra.mxu0 %v396
      %v500 = vpop.f32.mrf.mxu0
      %v501 = vadd.f32 0.0, %v500
      %502 = vmatmul.f32.gmra.mxu0 %v398
      %v503 = vpop.f32.mrf.mxu0
      %v504 = vadd.f32 0.0, %v503
      %505 = vmatmul.f32.gmra.mxu0 %v400
      %v506 = vpop.f32.mrf.mxu0
      %v507 = vadd.f32 0.0, %v506
      %508 = vmatmul.f32.gmra.mxu0 %v402
      %v509 = vpop.f32.mrf.mxu0
      %v510 = vadd.f32 0.0, %v509
      %511 = vmatmul.f32.gmra.mxu0 %v404
      %v512 = vpop.f32.mrf.mxu0
      %v513 = vadd.f32 0.0, %v512
      %514 = vmatmul.f32.gmra.mxu0 %v406
      %v515 = vpop.f32.mrf.mxu0
      %v516 = vadd.f32 0.0, %v515
      %517 = vmatmul.f32.gmra.mxu0 %v408
      %v518 = vpop.f32.mrf.mxu0
      %v519 = vadd.f32 0.0, %v518
      %520 = vmatmul.f32.gmra.mxu0 %v410
      %v521 = vpop.f32.mrf.mxu0
      %v522 = vadd.f32 0.0, %v521
      %523 = vmatmul.f32.gmra.mxu0 %v412
      %v524 = vpop.f32.mrf.mxu0
      %v525 = vadd.f32 0.0, %v524
      %526 = vmatmul.f32.gmra.mxu0 %v414
      %v527 = vpop.f32.mrf.mxu0
      %v528 = vadd.f32 0.0, %v527
      %529 = vmatmul.f32.gmra.mxu0 %v416
      %v530 = vpop.f32.mrf.mxu0
      %v531 = vadd.f32 0.0, %v530
      %532 = vmatmul.f32.gmra.mxu0 %v418
      %v533 = vpop.f32.mrf.mxu0
      %v534 = vadd.f32 0.0, %v533
      %535 = vmatmul.f32.gmra.mxu0 %v420
      %v536 = vpop.f32.mrf.mxu0
      %v537 = vadd.f32 0.0, %v536
      %538 = vdwg.mxu0
      %v539 = vsel %vm357, %v171, 0
      %v541 = vsel %vm357, %v172, 0
      %v543 = vsel %vm357, %v174, 0
      %v545 = vsel %vm357, %v175, 0
      %v547 = vsel %vm357, %v177, 0
      %v549 = vsel %vm357, %v178, 0
      %v551 = vsel %vm357, %v180, 0
      %v553 = vsel %vm357, %v181, 0
      %v555 = vsel %vm357, %v183, 0
      %v557 = vsel %vm357, %v184, 0
      %v559 = vsel %vm357, %v186, 0
      %v561 = vsel %vm357, %v187, 0
      %v563 = vsel %vm357, %v189, 0
      %v565 = vsel %vm357, %v190, 0
      %v567 = vsel %vm357, %v192, 0
      %v569 = vsel %vm357, %v193, 0
      %v571 = vsel %vm357, %v195, 0
      %v573 = vsel %vm357, %v196, 0
      %v575 = vsel %vm357, %v198, 0
      %v577 = vsel %vm357, %v199, 0
      %v579 = vsel %vm357, %v201, 0
      %v581 = vsel %vm357, %v202, 0
      %v583 = vsel %vm357, %v204, 0
      %v585 = vsel %vm357, %v205, 0
      %v587 = vsel %vm357, %v207, 0
      %v589 = vsel %vm357, %v208, 0
      %v591 = vsel %vm357, %v210, 0
      %v593 = vsel %vm357, %v211, 0
      %v595 = vsel %vm357, %v213, 0
      %v597 = vsel %vm357, %v214, 0
      %v599 = vsel %vm357, %v216, 0
      %v601 = vsel %vm357, %v217, 0
      %v604 = vsel %vm422, %v225, 0
      %606 = vmatpush.msra.mxu0 0.0
      %607 = vmatpush.msra.mxu0 0.0
      %608 = vmatpush.msra.mxu0 0.0
      %609 = vmatpush.msra.mxu0 0.0
      %610 = vmatpush.msra.mxu0 0.0
      %611 = vmatpush.msra.mxu0 0.0
      %612 = vmatpush.msra.mxu0 0.0
      %613 = vmatpush.msra.mxu0 0.0
      %614 = vmatpush.msra.mxu0 0.0
      %615 = vmatpush.msra.mxu0 0.0
      %616 = vmatpush.msra.mxu0 0.0
      %617 = vmatpush.msra.mxu0 0.0
      %618 = vmatpush.msra.mxu0 0.0
      %619 = vmatpush.msra.mxu0 0.0
      %620 = vmatpush.msra.mxu0 0.0
      %621 = vmatpush.msra.mxu0 %v604
      %622 = vmatmul.f32.gmra.mxu0 %v539
      %v623 = vpop.f32.mrf.mxu0
      %v624 = vadd.f32 %v444, %v623
      %625 = vmatmul.f32.gmra.mxu0 %v541
      %v626 = vpop.f32.mrf.mxu0
      %v627 = vadd.f32 %v447, %v626
      %628 = vmatmul.f32.gmra.mxu0 %v543
      %v629 = vpop.f32.mrf.mxu0
      %v630 = vadd.f32 %v450, %v629
      %631 = vmatmul.f32.gmra.mxu0 %v545
      %v632 = vpop.f32.mrf.mxu0
      %v633 = vadd.f32 %v453, %v632
      %634 = vmatmul.f32.gmra.mxu0 %v547
      %v635 = vpop.f32.mrf.mxu0
      %v636 = vadd.f32 %v456, %v635
      %637 = vmatmul.f32.gmra.mxu0 %v549
      %v638 = vpop.f32.mrf.mxu0
      %v639 = vadd.f32 %v459, %v638
      %640 = vmatmul.f32.gmra.mxu0 %v551
      %v641 = vpop.f32.mrf.mxu0
      %v642 = vadd.f32 %v462, %v641
      %643 = vmatmul.f32.gmra.mxu0 %v553
      %v644 = vpop.f32.mrf.mxu0
      %v645 = vadd.f32 %v465, %v644
      %646 = vmatmul.f32.gmra.mxu0 %v555
      %v647 = vpop.f32.mrf.mxu0
      %v648 = vadd.f32 %v468, %v647
      %649 = vmatmul.f32.gmra.mxu0 %v557
      %v650 = vpop.f32.mrf.mxu0
      %v651 = vadd.f32 %v471, %v650
      %652 = vmatmul.f32.gmra.mxu0 %v559
      %v653 = vpop.f32.mrf.mxu0
      %v654 = vadd.f32 %v474, %v653
      %655 = vmatmul.f32.gmra.mxu0 %v561
      %v656 = vpop.f32.mrf.mxu0
      %v657 = vadd.f32 %v477, %v656
      %658 = vmatmul.f32.gmra.mxu0 %v563
      %v659 = vpop.f32.mrf.mxu0
      %v660 = vadd.f32 %v480, %v659
      %661 = vmatmul.f32.gmra.mxu0 %v565
      %v662 = vpop.f32.mrf.mxu0
      %v663 = vadd.f32 %v483, %v662
      %664 = vmatmul.f32.gmra.mxu0 %v567
      %v665 = vpop.f32.mrf.mxu0
      %v666 = vadd.f32 %v486, %v665
      %667 = vmatmul.f32.gmra.mxu0 %v569
      %v668 = vpop.f32.mrf.mxu0
      %v669 = vadd.f32 %v489, %v668
      %670 = vmatmul.f32.gmra.mxu0 %v571
      %v671 = vpop.f32.mrf.mxu0
      %v672 = vadd.f32 %v492, %v671
      %673 = vmatmul.f32.gmra.mxu0 %v573
      %v674 = vpop.f32.mrf.mxu0
      %v675 = vadd.f32 %v495, %v674
      %676 = vmatmul.f32.gmra.mxu0 %v575
      %v677 = vpop.f32.mrf.mxu0
      %v678 = vadd.f32 %v498, %v677
      %679 = vmatmul.f32.gmra.mxu0 %v577
      %v680 = vpop.f32.mrf.mxu0
      %v681 = vadd.f32 %v501, %v680
      %682 = vmatmul.f32.gmra.mxu0 %v579
      %v683 = vpop.f32.mrf.mxu0
      %v684 = vadd.f32 %v504, %v683
      %685 = vmatmul.f32.gmra.mxu0 %v581
      %v686 = vpop.f32.mrf.mxu0
      %v687 = vadd.f32 %v507, %v686
      %688 = vmatmul.f32.gmra.mxu0 %v583
      %v689 = vpop.f32.mrf.mxu0
      %v690 = vadd.f32 %v510, %v689
      %691 = vmatmul.f32.gmra.mxu0 %v585
      %v692 = vpop.f32.mrf.mxu0
      %v693 = vadd.f32 %v513, %v692
      %694 = vmatmul.f32.gmra.mxu0 %v587
      %v695 = vpop.f32.mrf.mxu0
      %v696 = vadd.f32 %v516, %v695
      %697 = vmatmul.f32.gmra.mxu0 %v589
      %v698 = vpop.f32.mrf.mxu0
      %v699 = vadd.f32 %v519, %v698
      %700 = vmatmul.f32.gmra.mxu0 %v591
      %v701 = vpop.f32.mrf.mxu0
      %v702 = vadd.f32 %v522, %v701
      %703 = vmatmul.f32.gmra.mxu0 %v593
      %v704 = vpop.f32.mrf.mxu0
      %v705 = vadd.f32 %v525, %v704
      %706 = vmatmul.f32.gmra.mxu0 %v595
      %v707 = vpop.f32.mrf.mxu0
      %v708 = vadd.f32 %v528, %v707
      %709 = vmatmul.f32.gmra.mxu0 %v597
      %v710 = vpop.f32.mrf.mxu0
      %v711 = vadd.f32 %v531, %v710
      %712 = vmatmul.f32.gmra.mxu0 %v599
      %v713 = vpop.f32.mrf.mxu0
      %v714 = vadd.f32 %v534, %v713
      %715 = vmatmul.f32.gmra.mxu0 %v601
      %v716 = vpop.f32.mrf.mxu0
      %v717 = vadd.f32 %v537, %v716
      %718 = vdwg.mxu0
      %vm719 = vcmask 1045504
      %v720 = vrot.slane %v171, 2
      %v721 = vrot.slane %v172, 2
      %v722 = vsel %vm719, %v720, %v721
      %v723 = vrot.slane %v173, 2
      %v724 = vsel %vm719, %v721, %v723
      %v725 = vrot.slane %v174, 2
      %v726 = vrot.slane %v175, 2
      %v727 = vsel %vm719, %v725, %v726
      %v728 = vrot.slane %v176, 2
      %v729 = vsel %vm719, %v726, %v728
      %v730 = vrot.slane %v177, 2
      %v731 = vrot.slane %v178, 2
      %v732 = vsel %vm719, %v730, %v731
      %v733 = vrot.slane %v179, 2
      %v734 = vsel %vm719, %v731, %v733
      %v735 = vrot.slane %v180, 2
      %v736 = vrot.slane %v181, 2
      %v737 = vsel %vm719, %v735, %v736
      %v738 = vrot.slane %v182, 2
      %v739 = vsel %vm719, %v736, %v738
      %v740 = vrot.slane %v183, 2
      %v741 = vrot.slane %v184, 2
      %v742 = vsel %vm719, %v740, %v741
      %v743 = vrot.slane %v185, 2
      %v744 = vsel %vm719, %v741, %v743
      %v745 = vrot.slane %v186, 2
      %v746 = vrot.slane %v187, 2
      %v747 = vsel %vm719, %v745, %v746
      %v748 = vrot.slane %v188, 2
      %v749 = vsel %vm719, %v746, %v748
      %v750 = vrot.slane %v189, 2
      %v751 = vrot.slane %v190, 2
      %v752 = vsel %vm719, %v750, %v751
      %v753 = vrot.slane %v191, 2
      %v754 = vsel %vm719, %v751, %v753
      %v755 = vrot.slane %v192, 2
      %v756 = vrot.slane %v193, 2
      %v757 = vsel %vm719, %v755, %v756
      %v758 = vrot.slane %v194, 2
      %v759 = vsel %vm719, %v756, %v758
      %v760 = vrot.slane %v195, 2
      %v761 = vrot.slane %v196, 2
      %v762 = vsel %vm719, %v760, %v761
      %v763 = vrot.slane %v197, 2
      %v764 = vsel %vm719, %v761, %v763
      %v765 = vrot.slane %v198, 2
      %v766 = vrot.slane %v199, 2
      %v767 = vsel %vm719, %v765, %v766
      %v768 = vrot.slane %v200, 2
      %v769 = vsel %vm719, %v766, %v768
      %v770 = vrot.slane %v201, 2
      %v771 = vrot.slane %v202, 2
      %v772 = vsel %vm719, %v770, %v771
      %v773 = vrot.slane %v203, 2
      %v774 = vsel %vm719, %v771, %v773
      %v775 = vrot.slane %v204, 2
      %v776 = vrot.slane %v205, 2
      %v777 = vsel %vm719, %v775, %v776
      %v778 = vrot.slane %v206, 2
      %v779 = vsel %vm719, %v776, %v778
      %v780 = vrot.slane %v207, 2
      %v781 = vrot.slane %v208, 2
      %v782 = vsel %vm719, %v780, %v781
      %v783 = vrot.slane %v209, 2
      %v784 = vsel %vm719, %v781, %v783
      %v785 = vrot.slane %v210, 2
      %v786 = vrot.slane %v211, 2
      %v787 = vsel %vm719, %v785, %v786
      %v788 = vrot.slane %v212, 2
      %v789 = vsel %vm719, %v786, %v788
      %v790 = vrot.slane %v213, 2
      %v791 = vrot.slane %v214, 2
      %v792 = vsel %vm719, %v790, %v791
      %v793 = vrot.slane %v215, 2
      %v794 = vsel %vm719, %v791, %v793
      %v795 = vrot.slane %v216, 2
      %v796 = vrot.slane %v217, 2
      %v797 = vsel %vm719, %v795, %v796
      %v798 = vrot.slane %v218, 2
      %v799 = vsel %vm719, %v796, %v798
      %s800 = scalar_lea.vmem %s1, 8
      %v801 = vld [vmem:[%s800] sm:$0xf]
      %v802 = vsel %vm357, %v722, 0
      %v804 = vsel %vm357, %v724, 0
      %v806 = vsel %vm357, %v727, 0
      %v808 = vsel %vm357, %v729, 0
      %v810 = vsel %vm357, %v732, 0
      %v812 = vsel %vm357, %v734, 0
      %v814 = vsel %vm357, %v737, 0
      %v816 = vsel %vm357, %v739, 0
      %v818 = vsel %vm357, %v742, 0
      %v820 = vsel %vm357, %v744, 0
      %v822 = vsel %vm357, %v747, 0
      %v824 = vsel %vm357, %v749, 0
      %v826 = vsel %vm357, %v752, 0
      %v828 = vsel %vm357, %v754, 0
      %v830 = vsel %vm357, %v757, 0
      %v832 = vsel %vm357, %v759, 0
      %v834 = vsel %vm357, %v762, 0
      %v836 = vsel %vm357, %v764, 0
      %v838 = vsel %vm357, %v767, 0
      %v840 = vsel %vm357, %v769, 0
      %v842 = vsel %vm357, %v772, 0
      %v844 = vsel %vm357, %v774, 0
      %v846 = vsel %vm357, %v777, 0
      %v848 = vsel %vm357, %v779, 0
      %v850 = vsel %vm357, %v782, 0
      %v852 = vsel %vm357, %v784, 0
      %v854 = vsel %vm357, %v787, 0
      %v856 = vsel %vm357, %v789, 0
      %v858 = vsel %vm357, %v792, 0
      %v860 = vsel %vm357, %v794, 0
      %v862 = vsel %vm357, %v797, 0
      %v864 = vsel %vm357, %v799, 0
      %v867 = vsel %vm422, %v801, 0
      %869 = vmatpush.msra.mxu0 0.0
      %870 = vmatpush.msra.mxu0 0.0
      %871 = vmatpush.msra.mxu0 0.0
      %872 = vmatpush.msra.mxu0 0.0
      %873 = vmatpush.msra.mxu0 0.0
      %874 = vmatpush.msra.mxu0 0.0
      %875 = vmatpush.msra.mxu0 0.0
      %876 = vmatpush.msra.mxu0 0.0
      %877 = vmatpush.msra.mxu0 0.0
      %878 = vmatpush.msra.mxu0 0.0
      %879 = vmatpush.msra.mxu0 0.0
      %880 = vmatpush.msra.mxu0 0.0
      %881 = vmatpush.msra.mxu0 0.0
      %882 = vmatpush.msra.mxu0 0.0
      %883 = vmatpush.msra.mxu0 0.0
      %884 = vmatpush.msra.mxu0 %v867
      %885 = vmatmul.f32.gmra.mxu0 %v802
      %v886 = vpop.f32.mrf.mxu0
      %v887 = vadd.f32 0.0, %v886
      %888 = vmatmul.f32.gmra.mxu0 %v804
      %v889 = vpop.f32.mrf.mxu0
      %v890 = vadd.f32 0.0, %v889
      %891 = vmatmul.f32.gmra.mxu0 %v806
      %v892 = vpop.f32.mrf.mxu0
      %v893 = vadd.f32 0.0, %v892
      %894 = vmatmul.f32.gmra.mxu0 %v808
      %v895 = vpop.f32.mrf.mxu0
      %v896 = vadd.f32 0.0, %v895
      %897 = vmatmul.f32.gmra.mxu0 %v810
      %v898 = vpop.f32.mrf.mxu0
      %v899 = vadd.f32 0.0, %v898
      %900 = vmatmul.f32.gmra.mxu0 %v812
      %v901 = vpop.f32.mrf.mxu0
      %v902 = vadd.f32 0.0, %v901
      %903 = vmatmul.f32.gmra.mxu0 %v814
      %v904 = vpop.f32.mrf.mxu0
      %v905 = vadd.f32 0.0, %v904
      %906 = vmatmul.f32.gmra.mxu0 %v816
      %v907 = vpop.f32.mrf.mxu0
      %v908 = vadd.f32 0.0, %v907
      %909 = vmatmul.f32.gmra.mxu0 %v818
      %v910 = vpop.f32.mrf.mxu0
      %v911 = vadd.f32 0.0, %v910
      %912 = vmatmul.f32.gmra.mxu0 %v820
      %v913 = vpop.f32.mrf.mxu0
      %v914 = vadd.f32 0.0, %v913
      %915 = vmatmul.f32.gmra.mxu0 %v822
      %v916 = vpop.f32.mrf.mxu0
      %v917 = vadd.f32 0.0, %v916
      %918 = vmatmul.f32.gmra.mxu0 %v824
      %v919 = vpop.f32.mrf.mxu0
      %v920 = vadd.f32 0.0, %v919
      %921 = vmatmul.f32.gmra.mxu0 %v826
      %v922 = vpop.f32.mrf.mxu0
      %v923 = vadd.f32 0.0, %v922
      %924 = vmatmul.f32.gmra.mxu0 %v828
      %v925 = vpop.f32.mrf.mxu0
      %v926 = vadd.f32 0.0, %v925
      %927 = vmatmul.f32.gmra.mxu0 %v830
      %v928 = vpop.f32.mrf.mxu0
      %v929 = vadd.f32 0.0, %v928
      %930 = vmatmul.f32.gmra.mxu0 %v832
      %v931 = vpop.f32.mrf.mxu0
      %v932 = vadd.f32 0.0, %v931
      %933 = vmatmul.f32.gmra.mxu0 %v834
      %v934 = vpop.f32.mrf.mxu0
      %v935 = vadd.f32 0.0, %v934
      %936 = vmatmul.f32.gmra.mxu0 %v836
      %v937 = vpop.f32.mrf.mxu0
      %v938 = vadd.f32 0.0, %v937
      %939 = vmatmul.f32.gmra.mxu0 %v838
      %v940 = vpop.f32.mrf.mxu0
      %v941 = vadd.f32 0.0, %v940
      %942 = vmatmul.f32.gmra.mxu0 %v840
      %v943 = vpop.f32.mrf.mxu0
      %v944 = vadd.f32 0.0, %v943
      %945 = vmatmul.f32.gmra.mxu0 %v842
      %v946 = vpop.f32.mrf.mxu0
      %v947 = vadd.f32 0.0, %v946
      %948 = vmatmul.f32.gmra.mxu0 %v844
      %v949 = vpop.f32.mrf.mxu0
      %v950 = vadd.f32 0.0, %v949
      %951 = vmatmul.f32.gmra.mxu0 %v846
      %v952 = vpop.f32.mrf.mxu0
      %v953 = vadd.f32 0.0, %v952
      %954 = vmatmul.f32.gmra.mxu0 %v848
      %v955 = vpop.f32.mrf.mxu0
      %v956 = vadd.f32 0.0, %v955
      %957 = vmatmul.f32.gmra.mxu0 %v850
      %v958 = vpop.f32.mrf.mxu0
      %v959 = vadd.f32 0.0, %v958
      %960 = vmatmul.f32.gmra.mxu0 %v852
      %v961 = vpop.f32.mrf.mxu0
      %v962 = vadd.f32 0.0, %v961
      %963 = vmatmul.f32.gmra.mxu0 %v854
      %v964 = vpop.f32.mrf.mxu0
      %v965 = vadd.f32 0.0, %v964
      %966 = vmatmul.f32.gmra.mxu0 %v856
      %v967 = vpop.f32.mrf.mxu0
      %v968 = vadd.f32 0.0, %v967
      %969 = vmatmul.f32.gmra.mxu0 %v858
      %v970 = vpop.f32.mrf.mxu0
      %v971 = vadd.f32 0.0, %v970
      %972 = vmatmul.f32.gmra.mxu0 %v860
      %v973 = vpop.f32.mrf.mxu0
      %v974 = vadd.f32 0.0, %v973
      %975 = vmatmul.f32.gmra.mxu0 %v862
      %v976 = vpop.f32.mrf.mxu0
      %v977 = vadd.f32 0.0, %v976
      %978 = vmatmul.f32.gmra.mxu0 %v864
      %v979 = vpop.f32.mrf.mxu0
      %v980 = vadd.f32 0.0, %v979
      %981 = vdwg.mxu0
      %v982 = vadd.f32 %v624, %v887
      %v983 = vadd.f32 %v627, %v890
      %v984 = vadd.f32 %v630, %v893
      %v985 = vadd.f32 %v633, %v896
      %v986 = vadd.f32 %v636, %v899
      %v987 = vadd.f32 %v639, %v902
      %v988 = vadd.f32 %v642, %v905
      %v989 = vadd.f32 %v645, %v908
      %v990 = vadd.f32 %v648, %v911
      %v991 = vadd.f32 %v651, %v914
      %v992 = vadd.f32 %v654, %v917
      %v993 = vadd.f32 %v657, %v920
      %v994 = vadd.f32 %v660, %v923
      %v995 = vadd.f32 %v663, %v926
      %v996 = vadd.f32 %v666, %v929
      %v997 = vadd.f32 %v669, %v932
      %v998 = vadd.f32 %v672, %v935
      %v999 = vadd.f32 %v675, %v938
      %v1000 = vadd.f32 %v678, %v941
      %v1001 = vadd.f32 %v681, %v944
      %v1002 = vadd.f32 %v684, %v947
      %v1003 = vadd.f32 %v687, %v950
      %v1004 = vadd.f32 %v690, %v953
      %v1005 = vadd.f32 %v693, %v956
      %v1006 = vadd.f32 %v696, %v959
      %v1007 = vadd.f32 %v699, %v962
      %v1008 = vadd.f32 %v702, %v965
      %v1009 = vadd.f32 %v705, %v968
      %v1010 = vadd.f32 %v708, %v971
      %v1011 = vadd.f32 %v711, %v974
      %v1012 = vadd.f32 %v714, %v977
      %v1013 = vadd.f32 %v717, %v980
      %s1014 = scalar_lea.vmem %s1, 12
      %v1015 = vld [vmem:[%s1014] sm:$0xf]
      %v1017 = vsel %vm357, %v219, 0
      %v1020 = vsel %vm357, %v220, 0
      %v1023 = vsel %vm422, %v1015, 0
      %1025 = vmatpush.msra.mxu0 0.0
      %1026 = vmatpush.msra.mxu0 0.0
      %1027 = vmatpush.msra.mxu0 0.0
      %1028 = vmatpush.msra.mxu0 0.0
      %1029 = vmatpush.msra.mxu0 0.0
      %1030 = vmatpush.msra.mxu0 0.0
      %1031 = vmatpush.msra.mxu0 0.0
      %1032 = vmatpush.msra.mxu0 0.0
      %1033 = vmatpush.msra.mxu0 0.0
      %1034 = vmatpush.msra.mxu0 0.0
      %1035 = vmatpush.msra.mxu0 0.0
      %1036 = vmatpush.msra.mxu0 0.0
      %1037 = vmatpush.msra.mxu0 0.0
      %1038 = vmatpush.msra.mxu0 0.0
      %1039 = vmatpush.msra.mxu0 0.0
      %1040 = vmatpush.msra.mxu0 %v1023
      %1041 = vmatmul.f32.gmra.mxu0 %v543
      %v1042 = vpop.f32.mrf.mxu0
      %v1043 = vadd.f32 0.0, %v1042
      %1044 = vmatmul.f32.gmra.mxu0 %v545
      %v1045 = vpop.f32.mrf.mxu0
      %v1046 = vadd.f32 0.0, %v1045
      %1047 = vmatmul.f32.gmra.mxu0 %v547
      %v1048 = vpop.f32.mrf.mxu0
      %v1049 = vadd.f32 0.0, %v1048
      %1050 = vmatmul.f32.gmra.mxu0 %v549
      %v1051 = vpop.f32.mrf.mxu0
      %v1052 = vadd.f32 0.0, %v1051
      %1053 = vmatmul.f32.gmra.mxu0 %v551
      %v1054 = vpop.f32.mrf.mxu0
      %v1055 = vadd.f32 0.0, %v1054
      %1056 = vmatmul.f32.gmra.mxu0 %v553
      %v1057 = vpop.f32.mrf.mxu0
      %v1058 = vadd.f32 0.0, %v1057
      %1059 = vmatmul.f32.gmra.mxu0 %v555
      %v1060 = vpop.f32.mrf.mxu0
      %v1061 = vadd.f32 0.0, %v1060
      %1062 = vmatmul.f32.gmra.mxu0 %v557
      %v1063 = vpop.f32.mrf.mxu0
      %v1064 = vadd.f32 0.0, %v1063
      %1065 = vmatmul.f32.gmra.mxu0 %v559
      %v1066 = vpop.f32.mrf.mxu0
      %v1067 = vadd.f32 0.0, %v1066
      %1068 = vmatmul.f32.gmra.mxu0 %v561
      %v1069 = vpop.f32.mrf.mxu0
      %v1070 = vadd.f32 0.0, %v1069
      %1071 = vmatmul.f32.gmra.mxu0 %v563
      %v1072 = vpop.f32.mrf.mxu0
      %v1073 = vadd.f32 0.0, %v1072
      %1074 = vmatmul.f32.gmra.mxu0 %v565
      %v1075 = vpop.f32.mrf.mxu0
      %v1076 = vadd.f32 0.0, %v1075
      %1077 = vmatmul.f32.gmra.mxu0 %v567
      %v1078 = vpop.f32.mrf.mxu0
      %v1079 = vadd.f32 0.0, %v1078
      %1080 = vmatmul.f32.gmra.mxu0 %v569
      %v1081 = vpop.f32.mrf.mxu0
      %v1082 = vadd.f32 0.0, %v1081
      %1083 = vmatmul.f32.gmra.mxu0 %v571
      %v1084 = vpop.f32.mrf.mxu0
      %v1085 = vadd.f32 0.0, %v1084
      %1086 = vmatmul.f32.gmra.mxu0 %v573
      %v1087 = vpop.f32.mrf.mxu0
      %v1088 = vadd.f32 0.0, %v1087
      %1089 = vmatmul.f32.gmra.mxu0 %v575
      %v1090 = vpop.f32.mrf.mxu0
      %v1091 = vadd.f32 0.0, %v1090
      %1092 = vmatmul.f32.gmra.mxu0 %v577
      %v1093 = vpop.f32.mrf.mxu0
      %v1094 = vadd.f32 0.0, %v1093
      %1095 = vmatmul.f32.gmra.mxu0 %v579
      %v1096 = vpop.f32.mrf.mxu0
      %v1097 = vadd.f32 0.0, %v1096
      %1098 = vmatmul.f32.gmra.mxu0 %v581
      %v1099 = vpop.f32.mrf.mxu0
      %v1100 = vadd.f32 0.0, %v1099
      %1101 = vmatmul.f32.gmra.mxu0 %v583
      %v1102 = vpop.f32.mrf.mxu0
      %v1103 = vadd.f32 0.0, %v1102
      %1104 = vmatmul.f32.gmra.mxu0 %v585
      %v1105 = vpop.f32.mrf.mxu0
      %v1106 = vadd.f32 0.0, %v1105
      %1107 = vmatmul.f32.gmra.mxu0 %v587
      %v1108 = vpop.f32.mrf.mxu0
      %v1109 = vadd.f32 0.0, %v1108
      %1110 = vmatmul.f32.gmra.mxu0 %v589
      %v1111 = vpop.f32.mrf.mxu0
      %v1112 = vadd.f32 0.0, %v1111
      %1113 = vmatmul.f32.gmra.mxu0 %v591
      %v1114 = vpop.f32.mrf.mxu0
      %v1115 = vadd.f32 0.0, %v1114
      %1116 = vmatmul.f32.gmra.mxu0 %v593
      %v1117 = vpop.f32.mrf.mxu0
      %v1118 = vadd.f32 0.0, %v1117
      %1119 = vmatmul.f32.gmra.mxu0 %v595
      %v1120 = vpop.f32.mrf.mxu0
      %v1121 = vadd.f32 0.0, %v1120
      %1122 = vmatmul.f32.gmra.mxu0 %v597
      %v1123 = vpop.f32.mrf.mxu0
      %v1124 = vadd.f32 0.0, %v1123
      %1125 = vmatmul.f32.gmra.mxu0 %v599
      %v1126 = vpop.f32.mrf.mxu0
      %v1127 = vadd.f32 0.0, %v1126
      %1128 = vmatmul.f32.gmra.mxu0 %v601
      %v1129 = vpop.f32.mrf.mxu0
      %v1130 = vadd.f32 0.0, %v1129
      %1131 = vmatmul.f32.gmra.mxu0 %v1017
      %v1132 = vpop.f32.mrf.mxu0
      %v1133 = vadd.f32 0.0, %v1132
      %1134 = vmatmul.f32.gmra.mxu0 %v1020
      %v1135 = vpop.f32.mrf.mxu0
      %v1136 = vadd.f32 0.0, %v1135
      %1137 = vdwg.mxu0
      %v1138 = vadd.f32 %v982, %v1043
      %v1139 = vadd.f32 %v983, %v1046
      %v1140 = vadd.f32 %v984, %v1049
      %v1141 = vadd.f32 %v985, %v1052
      %v1142 = vadd.f32 %v986, %v1055
      %v1143 = vadd.f32 %v987, %v1058
      %v1144 = vadd.f32 %v988, %v1061
      %v1145 = vadd.f32 %v989, %v1064
      %v1146 = vadd.f32 %v990, %v1067
      %v1147 = vadd.f32 %v991, %v1070
      %v1148 = vadd.f32 %v992, %v1073
      %v1149 = vadd.f32 %v993, %v1076
      %v1150 = vadd.f32 %v994, %v1079
      %v1151 = vadd.f32 %v995, %v1082
      %v1152 = vadd.f32 %v996, %v1085
      %v1153 = vadd.f32 %v997, %v1088
      %v1154 = vadd.f32 %v998, %v1091
      %v1155 = vadd.f32 %v999, %v1094
      %v1156 = vadd.f32 %v1000, %v1097
      %v1157 = vadd.f32 %v1001, %v1100
      %v1158 = vadd.f32 %v1002, %v1103
      %v1159 = vadd.f32 %v1003, %v1106
      %v1160 = vadd.f32 %v1004, %v1109
      %v1161 = vadd.f32 %v1005, %v1112
      %v1162 = vadd.f32 %v1006, %v1115
      %v1163 = vadd.f32 %v1007, %v1118
      %v1164 = vadd.f32 %v1008, %v1121
      %v1165 = vadd.f32 %v1009, %v1124
      %v1166 = vadd.f32 %v1010, %v1127
      %v1167 = vadd.f32 %v1011, %v1130
      %v1168 = vadd.f32 %v1012, %v1133
      %v1169 = vadd.f32 %v1013, %v1136
      %v1171 = vrot.slane %v219, 1
      %v1172 = vrot.slane %v220, 1
      %v1173 = vsel %vm274, %v1171, %v1172
      %v1174 = vrot.slane %v221, 1
      %v1175 = vsel %vm274, %v1172, %v1174
      %s1176 = scalar_lea.vmem %s1, 16
      %v1177 = vld [vmem:[%s1176] sm:$0xf]
      %v1178 = vsel %vm357, %v1173, 0
      %v1180 = vsel %vm357, %v1175, 0
      %v1183 = vsel %vm422, %v1177, 0
      %1185 = vmatpush.msra.mxu0 0.0
      %1186 = vmatpush.msra.mxu0 0.0
      %1187 = vmatpush.msra.mxu0 0.0
      %1188 = vmatpush.msra.mxu0 0.0
      %1189 = vmatpush.msra.mxu0 0.0
      %1190 = vmatpush.msra.mxu0 0.0
      %1191 = vmatpush.msra.mxu0 0.0
      %1192 = vmatpush.msra.mxu0 0.0
      %1193 = vmatpush.msra.mxu0 0.0
      %1194 = vmatpush.msra.mxu0 0.0
      %1195 = vmatpush.msra.mxu0 0.0
      %1196 = vmatpush.msra.mxu0 0.0
      %1197 = vmatpush.msra.mxu0 0.0
      %1198 = vmatpush.msra.mxu0 0.0
      %1199 = vmatpush.msra.mxu0 0.0
      %1200 = vmatpush.msra.mxu0 %v1183
      %1201 = vmatmul.f32.gmra.mxu0 %v362
      %v1202 = vpop.f32.mrf.mxu0
      %v1203 = vadd.f32 0.0, %v1202
      %1204 = vmatmul.f32.gmra.mxu0 %v364
      %v1205 = vpop.f32.mrf.mxu0
      %v1206 = vadd.f32 0.0, %v1205
      %1207 = vmatmul.f32.gmra.mxu0 %v366
      %v1208 = vpop.f32.mrf.mxu0
      %v1209 = vadd.f32 0.0, %v1208
      %1210 = vmatmul.f32.gmra.mxu0 %v368
      %v1211 = vpop.f32.mrf.mxu0
      %v1212 = vadd.f32 0.0, %v1211
      %1213 = vmatmul.f32.gmra.mxu0 %v370
      %v1214 = vpop.f32.mrf.mxu0
      %v1215 = vadd.f32 0.0, %v1214
      %1216 = vmatmul.f32.gmra.mxu0 %v372
      %v1217 = vpop.f32.mrf.mxu0
      %v1218 = vadd.f32 0.0, %v1217
      %1219 = vmatmul.f32.gmra.mxu0 %v374
      %v1220 = vpop.f32.mrf.mxu0
      %v1221 = vadd.f32 0.0, %v1220
      %1222 = vmatmul.f32.gmra.mxu0 %v376
      %v1223 = vpop.f32.mrf.mxu0
      %v1224 = vadd.f32 0.0, %v1223
      %1225 = vmatmul.f32.gmra.mxu0 %v378
      %v1226 = vpop.f32.mrf.mxu0
      %v1227 = vadd.f32 0.0, %v1226
      %1228 = vmatmul.f32.gmra.mxu0 %v380
      %v1229 = vpop.f32.mrf.mxu0
      %v1230 = vadd.f32 0.0, %v1229
      %1231 = vmatmul.f32.gmra.mxu0 %v382
      %v1232 = vpop.f32.mrf.mxu0
      %v1233 = vadd.f32 0.0, %v1232
      %1234 = vmatmul.f32.gmra.mxu0 %v384
      %v1235 = vpop.f32.mrf.mxu0
      %v1236 = vadd.f32 0.0, %v1235
      %1237 = vmatmul.f32.gmra.mxu0 %v386
      %v1238 = vpop.f32.mrf.mxu0
      %v1239 = vadd.f32 0.0, %v1238
      %1240 = vmatmul.f32.gmra.mxu0 %v388
      %v1241 = vpop.f32.mrf.mxu0
      %v1242 = vadd.f32 0.0, %v1241
      %1243 = vmatmul.f32.gmra.mxu0 %v390
      %v1244 = vpop.f32.mrf.mxu0
      %v1245 = vadd.f32 0.0, %v1244
      %1246 = vmatmul.f32.gmra.mxu0 %v392
      %v1247 = vpop.f32.mrf.mxu0
      %v1248 = vadd.f32 0.0, %v1247
      %1249 = vmatmul.f32.gmra.mxu0 %v394
      %v1250 = vpop.f32.mrf.mxu0
      %v1251 = vadd.f32 0.0, %v1250
      %1252 = vmatmul.f32.gmra.mxu0 %v396
      %v1253 = vpop.f32.mrf.mxu0
      %v1254 = vadd.f32 0.0, %v1253
      %1255 = vmatmul.f32.gmra.mxu0 %v398
      %v1256 = vpop.f32.mrf.mxu0
      %v1257 = vadd.f32 0.0, %v1256
      %1258 = vmatmul.f32.gmra.mxu0 %v400
      %v1259 = vpop.f32.mrf.mxu0
      %v1260 = vadd.f32 0.0, %v1259
      %1261 = vmatmul.f32.gmra.mxu0 %v402
      %v1262 = vpop.f32.mrf.mxu0
      %v1263 = vadd.f32 0.0, %v1262
      %1264 = vmatmul.f32.gmra.mxu0 %v404
      %v1265 = vpop.f32.mrf.mxu0
      %v1266 = vadd.f32 0.0, %v1265
      %1267 = vmatmul.f32.gmra.mxu0 %v406
      %v1268 = vpop.f32.mrf.mxu0
      %v1269 = vadd.f32 0.0, %v1268
      %1270 = vmatmul.f32.gmra.mxu0 %v408
      %v1271 = vpop.f32.mrf.mxu0
      %v1272 = vadd.f32 0.0, %v1271
      %1273 = vmatmul.f32.gmra.mxu0 %v410
      %v1274 = vpop.f32.mrf.mxu0
      %v1275 = vadd.f32 0.0, %v1274
      %1276 = vmatmul.f32.gmra.mxu0 %v412
      %v1277 = vpop.f32.mrf.mxu0
      %v1278 = vadd.f32 0.0, %v1277
      %1279 = vmatmul.f32.gmra.mxu0 %v414
      %v1280 = vpop.f32.mrf.mxu0
      %v1281 = vadd.f32 0.0, %v1280
      %1282 = vmatmul.f32.gmra.mxu0 %v416
      %v1283 = vpop.f32.mrf.mxu0
      %v1284 = vadd.f32 0.0, %v1283
      %1285 = vmatmul.f32.gmra.mxu0 %v418
      %v1286 = vpop.f32.mrf.mxu0
      %v1287 = vadd.f32 0.0, %v1286
      %1288 = vmatmul.f32.gmra.mxu0 %v420
      %v1289 = vpop.f32.mrf.mxu0
      %v1290 = vadd.f32 0.0, %v1289
      %1291 = vmatmul.f32.gmra.mxu0 %v1178
      %v1292 = vpop.f32.mrf.mxu0
      %v1293 = vadd.f32 0.0, %v1292
      %1294 = vmatmul.f32.gmra.mxu0 %v1180
      %v1295 = vpop.f32.mrf.mxu0
      %v1296 = vadd.f32 0.0, %v1295
      %1297 = vdwg.mxu0
      %v1298 = vadd.f32 %v1138, %v1203
      %v1299 = vadd.f32 %v1139, %v1206
      %v1300 = vadd.f32 %v1140, %v1209
      %v1301 = vadd.f32 %v1141, %v1212
      %v1302 = vadd.f32 %v1142, %v1215
      %v1303 = vadd.f32 %v1143, %v1218
      %v1304 = vadd.f32 %v1144, %v1221
      %v1305 = vadd.f32 %v1145, %v1224
      %v1306 = vadd.f32 %v1146, %v1227
      %v1307 = vadd.f32 %v1147, %v1230
      %v1308 = vadd.f32 %v1148, %v1233
      %v1309 = vadd.f32 %v1149, %v1236
      %v1310 = vadd.f32 %v1150, %v1239
      %v1311 = vadd.f32 %v1151, %v1242
      %v1312 = vadd.f32 %v1152, %v1245
      %v1313 = vadd.f32 %v1153, %v1248
      %v1314 = vadd.f32 %v1154, %v1251
      %v1315 = vadd.f32 %v1155, %v1254
      %v1316 = vadd.f32 %v1156, %v1257
      %v1317 = vadd.f32 %v1157, %v1260
      %v1318 = vadd.f32 %v1158, %v1263
      %v1319 = vadd.f32 %v1159, %v1266
      %v1320 = vadd.f32 %v1160, %v1269
      %v1321 = vadd.f32 %v1161, %v1272
      %v1322 = vadd.f32 %v1162, %v1275
      %v1323 = vadd.f32 %v1163, %v1278
      %v1324 = vadd.f32 %v1164, %v1281
      %v1325 = vadd.f32 %v1165, %v1284
      %v1326 = vadd.f32 %v1166, %v1287
      %v1327 = vadd.f32 %v1167, %v1290
      %v1328 = vadd.f32 %v1168, %v1293
      %v1329 = vadd.f32 %v1169, %v1296
      %v1330 = vrot.slane %v219, 2
      %v1331 = vrot.slane %v220, 2
      %v1332 = vsel %vm719, %v1330, %v1331
      %v1333 = vrot.slane %v221, 2
      %v1334 = vsel %vm719, %v1331, %v1333
      %s1335 = scalar_lea.vmem %s1, 20
      %v1336 = vld [vmem:[%s1335] sm:$0xf]
      %v1337 = vsel %vm357, %v1332, 0
      %v1339 = vsel %vm357, %v1334, 0
      %v1342 = vsel %vm422, %v1336, 0
      %1344 = vmatpush.msra.mxu0 0.0
      %1345 = vmatpush.msra.mxu0 0.0
      %1346 = vmatpush.msra.mxu0 0.0
      %1347 = vmatpush.msra.mxu0 0.0
      %1348 = vmatpush.msra.mxu0 0.0
      %1349 = vmatpush.msra.mxu0 0.0
      %1350 = vmatpush.msra.mxu0 0.0
      %1351 = vmatpush.msra.mxu0 0.0
      %1352 = vmatpush.msra.mxu0 0.0
      %1353 = vmatpush.msra.mxu0 0.0
      %1354 = vmatpush.msra.mxu0 0.0
      %1355 = vmatpush.msra.mxu0 0.0
      %1356 = vmatpush.msra.mxu0 0.0
      %1357 = vmatpush.msra.mxu0 0.0
      %1358 = vmatpush.msra.mxu0 0.0
      %1359 = vmatpush.msra.mxu0 %v1342
      %1360 = vmatmul.f32.gmra.mxu0 %v806
      %v1361 = vpop.f32.mrf.mxu0
      %v1362 = vadd.f32 0.0, %v1361
      %1363 = vmatmul.f32.gmra.mxu0 %v808
      %v1364 = vpop.f32.mrf.mxu0
      %v1365 = vadd.f32 0.0, %v1364
      %1366 = vmatmul.f32.gmra.mxu0 %v810
      %v1367 = vpop.f32.mrf.mxu0
      %v1368 = vadd.f32 0.0, %v1367
      %1369 = vmatmul.f32.gmra.mxu0 %v812
      %v1370 = vpop.f32.mrf.mxu0
      %v1371 = vadd.f32 0.0, %v1370
      %1372 = vmatmul.f32.gmra.mxu0 %v814
      %v1373 = vpop.f32.mrf.mxu0
      %v1374 = vadd.f32 0.0, %v1373
      %1375 = vmatmul.f32.gmra.mxu0 %v816
      %v1376 = vpop.f32.mrf.mxu0
      %v1377 = vadd.f32 0.0, %v1376
      %1378 = vmatmul.f32.gmra.mxu0 %v818
      %v1379 = vpop.f32.mrf.mxu0
      %v1380 = vadd.f32 0.0, %v1379
      %1381 = vmatmul.f32.gmra.mxu0 %v820
      %v1382 = vpop.f32.mrf.mxu0
      %v1383 = vadd.f32 0.0, %v1382
      %1384 = vmatmul.f32.gmra.mxu0 %v822
      %v1385 = vpop.f32.mrf.mxu0
      %v1386 = vadd.f32 0.0, %v1385
      %1387 = vmatmul.f32.gmra.mxu0 %v824
      %v1388 = vpop.f32.mrf.mxu0
      %v1389 = vadd.f32 0.0, %v1388
      %1390 = vmatmul.f32.gmra.mxu0 %v826
      %v1391 = vpop.f32.mrf.mxu0
      %v1392 = vadd.f32 0.0, %v1391
      %1393 = vmatmul.f32.gmra.mxu0 %v828
      %v1394 = vpop.f32.mrf.mxu0
      %v1395 = vadd.f32 0.0, %v1394
      %1396 = vmatmul.f32.gmra.mxu0 %v830
      %v1397 = vpop.f32.mrf.mxu0
      %v1398 = vadd.f32 0.0, %v1397
      %1399 = vmatmul.f32.gmra.mxu0 %v832
      %v1400 = vpop.f32.mrf.mxu0
      %v1401 = vadd.f32 0.0, %v1400
      %1402 = vmatmul.f32.gmra.mxu0 %v834
      %v1403 = vpop.f32.mrf.mxu0
      %v1404 = vadd.f32 0.0, %v1403
      %1405 = vmatmul.f32.gmra.mxu0 %v836
      %v1406 = vpop.f32.mrf.mxu0
      %v1407 = vadd.f32 0.0, %v1406
      %1408 = vmatmul.f32.gmra.mxu0 %v838
      %v1409 = vpop.f32.mrf.mxu0
      %v1410 = vadd.f32 0.0, %v1409
      %1411 = vmatmul.f32.gmra.mxu0 %v840
      %v1412 = vpop.f32.mrf.mxu0
      %v1413 = vadd.f32 0.0, %v1412
      %1414 = vmatmul.f32.gmra.mxu0 %v842
      %v1415 = vpop.f32.mrf.mxu0
      %v1416 = vadd.f32 0.0, %v1415
      %1417 = vmatmul.f32.gmra.mxu0 %v844
      %v1418 = vpop.f32.mrf.mxu0
      %v1419 = vadd.f32 0.0, %v1418
      %1420 = vmatmul.f32.gmra.mxu0 %v846
      %v1421 = vpop.f32.mrf.mxu0
      %v1422 = vadd.f32 0.0, %v1421
      %1423 = vmatmul.f32.gmra.mxu0 %v848
      %v1424 = vpop.f32.mrf.mxu0
      %v1425 = vadd.f32 0.0, %v1424
      %1426 = vmatmul.f32.gmra.mxu0 %v850
      %v1427 = vpop.f32.mrf.mxu0
      %v1428 = vadd.f32 0.0, %v1427
      %1429 = vmatmul.f32.gmra.mxu0 %v852
      %v1430 = vpop.f32.mrf.mxu0
      %v1431 = vadd.f32 0.0, %v1430
      %1432 = vmatmul.f32.gmra.mxu0 %v854
      %v1433 = vpop.f32.mrf.mxu0
      %v1434 = vadd.f32 0.0, %v1433
      %1435 = vmatmul.f32.gmra.mxu0 %v856
      %v1436 = vpop.f32.mrf.mxu0
      %v1437 = vadd.f32 0.0, %v1436
      %1438 = vmatmul.f32.gmra.mxu0 %v858
      %v1439 = vpop.f32.mrf.mxu0
      %v1440 = vadd.f32 0.0, %v1439
      %1441 = vmatmul.f32.gmra.mxu0 %v860
      %v1442 = vpop.f32.mrf.mxu0
      %v1443 = vadd.f32 0.0, %v1442
      %1444 = vmatmul.f32.gmra.mxu0 %v862
      %v1445 = vpop.f32.mrf.mxu0
      %v1446 = vadd.f32 0.0, %v1445
      %1447 = vmatmul.f32.gmra.mxu0 %v864
      %v1448 = vpop.f32.mrf.mxu0
      %v1449 = vadd.f32 0.0, %v1448
      %1450 = vmatmul.f32.gmra.mxu0 %v1337
      %v1451 = vpop.f32.mrf.mxu0
      %v1452 = vadd.f32 0.0, %v1451
      %1453 = vmatmul.f32.gmra.mxu0 %v1339
      %v1454 = vpop.f32.mrf.mxu0
      %v1455 = vadd.f32 0.0, %v1454
      %1456 = vdwg.mxu0
      %v1457 = vadd.f32 %v1298, %v1362
      %v1458 = vadd.f32 %v1299, %v1365
      %v1459 = vadd.f32 %v1300, %v1368
      %v1460 = vadd.f32 %v1301, %v1371
      %v1461 = vadd.f32 %v1302, %v1374
      %v1462 = vadd.f32 %v1303, %v1377
      %v1463 = vadd.f32 %v1304, %v1380
      %v1464 = vadd.f32 %v1305, %v1383
      %v1465 = vadd.f32 %v1306, %v1386
      %v1466 = vadd.f32 %v1307, %v1389
      %v1467 = vadd.f32 %v1308, %v1392
      %v1468 = vadd.f32 %v1309, %v1395
      %v1469 = vadd.f32 %v1310, %v1398
      %v1470 = vadd.f32 %v1311, %v1401
      %v1471 = vadd.f32 %v1312, %v1404
      %v1472 = vadd.f32 %v1313, %v1407
      %v1473 = vadd.f32 %v1314, %v1410
      %v1474 = vadd.f32 %v1315, %v1413
      %v1475 = vadd.f32 %v1316, %v1416
      %v1476 = vadd.f32 %v1317, %v1419
      %v1477 = vadd.f32 %v1318, %v1422
      %v1478 = vadd.f32 %v1319, %v1425
      %v1479 = vadd.f32 %v1320, %v1428
      %v1480 = vadd.f32 %v1321, %v1431
      %v1481 = vadd.f32 %v1322, %v1434
      %v1482 = vadd.f32 %v1323, %v1437
      %v1483 = vadd.f32 %v1324, %v1440
      %v1484 = vadd.f32 %v1325, %v1443
      %v1485 = vadd.f32 %v1326, %v1446
      %v1486 = vadd.f32 %v1327, %v1449
      %v1487 = vadd.f32 %v1328, %v1452
      %v1488 = vadd.f32 %v1329, %v1455
      %s1489 = scalar_lea.vmem %s1, 24
      %v1490 = vld [vmem:[%s1489] sm:$0xf]
      %v1492 = vsel %vm357, %v222, 0
      %v1495 = vsel %vm357, %v223, 0
      %v1498 = vsel %vm422, %v1490, 0
      %1500 = vmatpush.msra.mxu0 0.0
      %1501 = vmatpush.msra.mxu0 0.0
      %1502 = vmatpush.msra.mxu0 0.0
      %1503 = vmatpush.msra.mxu0 0.0
      %1504 = vmatpush.msra.mxu0 0.0
      %1505 = vmatpush.msra.mxu0 0.0
      %1506 = vmatpush.msra.mxu0 0.0
      %1507 = vmatpush.msra.mxu0 0.0
      %1508 = vmatpush.msra.mxu0 0.0
      %1509 = vmatpush.msra.mxu0 0.0
      %1510 = vmatpush.msra.mxu0 0.0
      %1511 = vmatpush.msra.mxu0 0.0
      %1512 = vmatpush.msra.mxu0 0.0
      %1513 = vmatpush.msra.mxu0 0.0
      %1514 = vmatpush.msra.mxu0 0.0
      %1515 = vmatpush.msra.mxu0 %v1498
      %1516 = vmatmul.f32.gmra.mxu0 %v547
      %v1517 = vpop.f32.mrf.mxu0
      %v1518 = vadd.f32 0.0, %v1517
      %1519 = vmatmul.f32.gmra.mxu0 %v549
      %v1520 = vpop.f32.mrf.mxu0
      %v1521 = vadd.f32 0.0, %v1520
      %1522 = vmatmul.f32.gmra.mxu0 %v551
      %v1523 = vpop.f32.mrf.mxu0
      %v1524 = vadd.f32 0.0, %v1523
      %1525 = vmatmul.f32.gmra.mxu0 %v553
      %v1526 = vpop.f32.mrf.mxu0
      %v1527 = vadd.f32 0.0, %v1526
      %1528 = vmatmul.f32.gmra.mxu0 %v555
      %v1529 = vpop.f32.mrf.mxu0
      %v1530 = vadd.f32 0.0, %v1529
      %1531 = vmatmul.f32.gmra.mxu0 %v557
      %v1532 = vpop.f32.mrf.mxu0
      %v1533 = vadd.f32 0.0, %v1532
      %1534 = vmatmul.f32.gmra.mxu0 %v559
      %v1535 = vpop.f32.mrf.mxu0
      %v1536 = vadd.f32 0.0, %v1535
      %1537 = vmatmul.f32.gmra.mxu0 %v561
      %v1538 = vpop.f32.mrf.mxu0
      %v1539 = vadd.f32 0.0, %v1538
      %1540 = vmatmul.f32.gmra.mxu0 %v563
      %v1541 = vpop.f32.mrf.mxu0
      %v1542 = vadd.f32 0.0, %v1541
      %1543 = vmatmul.f32.gmra.mxu0 %v565
      %v1544 = vpop.f32.mrf.mxu0
      %v1545 = vadd.f32 0.0, %v1544
      %1546 = vmatmul.f32.gmra.mxu0 %v567
      %v1547 = vpop.f32.mrf.mxu0
      %v1548 = vadd.f32 0.0, %v1547
      %1549 = vmatmul.f32.gmra.mxu0 %v569
      %v1550 = vpop.f32.mrf.mxu0
      %v1551 = vadd.f32 0.0, %v1550
      %1552 = vmatmul.f32.gmra.mxu0 %v571
      %v1553 = vpop.f32.mrf.mxu0
      %v1554 = vadd.f32 0.0, %v1553
      %1555 = vmatmul.f32.gmra.mxu0 %v573
      %v1556 = vpop.f32.mrf.mxu0
      %v1557 = vadd.f32 0.0, %v1556
      %1558 = vmatmul.f32.gmra.mxu0 %v575
      %v1559 = vpop.f32.mrf.mxu0
      %v1560 = vadd.f32 0.0, %v1559
      %1561 = vmatmul.f32.gmra.mxu0 %v577
      %v1562 = vpop.f32.mrf.mxu0
      %v1563 = vadd.f32 0.0, %v1562
      %1564 = vmatmul.f32.gmra.mxu0 %v579
      %v1565 = vpop.f32.mrf.mxu0
      %v1566 = vadd.f32 0.0, %v1565
      %1567 = vmatmul.f32.gmra.mxu0 %v581
      %v1568 = vpop.f32.mrf.mxu0
      %v1569 = vadd.f32 0.0, %v1568
      %1570 = vmatmul.f32.gmra.mxu0 %v583
      %v1571 = vpop.f32.mrf.mxu0
      %v1572 = vadd.f32 0.0, %v1571
      %1573 = vmatmul.f32.gmra.mxu0 %v585
      %v1574 = vpop.f32.mrf.mxu0
      %v1575 = vadd.f32 0.0, %v1574
      %1576 = vmatmul.f32.gmra.mxu0 %v587
      %v1577 = vpop.f32.mrf.mxu0
      %v1578 = vadd.f32 0.0, %v1577
      %1579 = vmatmul.f32.gmra.mxu0 %v589
      %v1580 = vpop.f32.mrf.mxu0
      %v1581 = vadd.f32 0.0, %v1580
      %1582 = vmatmul.f32.gmra.mxu0 %v591
      %v1583 = vpop.f32.mrf.mxu0
      %v1584 = vadd.f32 0.0, %v1583
      %1585 = vmatmul.f32.gmra.mxu0 %v593
      %v1586 = vpop.f32.mrf.mxu0
      %v1587 = vadd.f32 0.0, %v1586
      %1588 = vmatmul.f32.gmra.mxu0 %v595
      %v1589 = vpop.f32.mrf.mxu0
      %v1590 = vadd.f32 0.0, %v1589
      %1591 = vmatmul.f32.gmra.mxu0 %v597
      %v1592 = vpop.f32.mrf.mxu0
      %v1593 = vadd.f32 0.0, %v1592
      %1594 = vmatmul.f32.gmra.mxu0 %v599
      %v1595 = vpop.f32.mrf.mxu0
      %v1596 = vadd.f32 0.0, %v1595
      %1597 = vmatmul.f32.gmra.mxu0 %v601
      %v1598 = vpop.f32.mrf.mxu0
      %v1599 = vadd.f32 0.0, %v1598
      %1600 = vmatmul.f32.gmra.mxu0 %v1017
      %v1601 = vpop.f32.mrf.mxu0
      %v1602 = vadd.f32 0.0, %v1601
      %1603 = vmatmul.f32.gmra.mxu0 %v1020
      %v1604 = vpop.f32.mrf.mxu0
      %v1605 = vadd.f32 0.0, %v1604
      %1606 = vmatmul.f32.gmra.mxu0 %v1492
      %v1607 = vpop.f32.mrf.mxu0
      %v1608 = vadd.f32 0.0, %v1607
      %1609 = vmatmul.f32.gmra.mxu0 %v1495
      %v1610 = vpop.f32.mrf.mxu0
      %v1611 = vadd.f32 0.0, %v1610
      %1612 = vdwg.mxu0
      %v1613 = vadd.f32 %v1457, %v1518
      %v1614 = vadd.f32 %v1458, %v1521
      %v1615 = vadd.f32 %v1459, %v1524
      %v1616 = vadd.f32 %v1460, %v1527
      %v1617 = vadd.f32 %v1461, %v1530
      %v1618 = vadd.f32 %v1462, %v1533
      %v1619 = vadd.f32 %v1463, %v1536
      %v1620 = vadd.f32 %v1464, %v1539
      %v1621 = vadd.f32 %v1465, %v1542
      %v1622 = vadd.f32 %v1466, %v1545
      %v1623 = vadd.f32 %v1467, %v1548
      %v1624 = vadd.f32 %v1468, %v1551
      %v1625 = vadd.f32 %v1469, %v1554
      %v1626 = vadd.f32 %v1470, %v1557
      %v1627 = vadd.f32 %v1471, %v1560
      %v1628 = vadd.f32 %v1472, %v1563
      %v1629 = vadd.f32 %v1473, %v1566
      %v1630 = vadd.f32 %v1474, %v1569
      %v1631 = vadd.f32 %v1475, %v1572
      %v1632 = vadd.f32 %v1476, %v1575
      %v1633 = vadd.f32 %v1477, %v1578
      %v1634 = vadd.f32 %v1478, %v1581
      %v1635 = vadd.f32 %v1479, %v1584
      %v1636 = vadd.f32 %v1480, %v1587
      %v1637 = vadd.f32 %v1481, %v1590
      %v1638 = vadd.f32 %v1482, %v1593
      %v1639 = vadd.f32 %v1483, %v1596
      %v1640 = vadd.f32 %v1484, %v1599
      %v1641 = vadd.f32 %v1485, %v1602
      %v1642 = vadd.f32 %v1486, %v1605
      %v1643 = vadd.f32 %v1487, %v1608
      %v1644 = vadd.f32 %v1488, %v1611
      %v1646 = vrot.slane %v222, 1
      %v1647 = vrot.slane %v223, 1
      %v1648 = vsel %vm274, %v1646, %v1647
      %v1649 = vrot.slane %v224, 1
      %v1650 = vsel %vm274, %v1647, %v1649
      %s1651 = scalar_lea.vmem %s1, 28
      %v1652 = vld [vmem:[%s1651] sm:$0xf]
      %v1653 = vsel %vm357, %v1648, 0
      %v1655 = vsel %vm357, %v1650, 0
      %v1658 = vsel %vm422, %v1652, 0
      %1660 = vmatpush.msra.mxu0 0.0
      %1661 = vmatpush.msra.mxu0 0.0
      %1662 = vmatpush.msra.mxu0 0.0
      %1663 = vmatpush.msra.mxu0 0.0
      %1664 = vmatpush.msra.mxu0 0.0
      %1665 = vmatpush.msra.mxu0 0.0
      %1666 = vmatpush.msra.mxu0 0.0
      %1667 = vmatpush.msra.mxu0 0.0
      %1668 = vmatpush.msra.mxu0 0.0
      %1669 = vmatpush.msra.mxu0 0.0
      %1670 = vmatpush.msra.mxu0 0.0
      %1671 = vmatpush.msra.mxu0 0.0
      %1672 = vmatpush.msra.mxu0 0.0
      %1673 = vmatpush.msra.mxu0 0.0
      %1674 = vmatpush.msra.mxu0 0.0
      %1675 = vmatpush.msra.mxu0 %v1658
      %1676 = vmatmul.f32.gmra.mxu0 %v366
      %v1677 = vpop.f32.mrf.mxu0
      %v1678 = vadd.f32 0.0, %v1677
      %1679 = vmatmul.f32.gmra.mxu0 %v368
      %v1680 = vpop.f32.mrf.mxu0
      %v1681 = vadd.f32 0.0, %v1680
      %1682 = vmatmul.f32.gmra.mxu0 %v370
      %v1683 = vpop.f32.mrf.mxu0
      %v1684 = vadd.f32 0.0, %v1683
      %1685 = vmatmul.f32.gmra.mxu0 %v372
      %v1686 = vpop.f32.mrf.mxu0
      %v1687 = vadd.f32 0.0, %v1686
      %1688 = vmatmul.f32.gmra.mxu0 %v374
      %v1689 = vpop.f32.mrf.mxu0
      %v1690 = vadd.f32 0.0, %v1689
      %1691 = vmatmul.f32.gmra.mxu0 %v376
      %v1692 = vpop.f32.mrf.mxu0
      %v1693 = vadd.f32 0.0, %v1692
      %1694 = vmatmul.f32.gmra.mxu0 %v378
      %v1695 = vpop.f32.mrf.mxu0
      %v1696 = vadd.f32 0.0, %v1695
      %1697 = vmatmul.f32.gmra.mxu0 %v380
      %v1698 = vpop.f32.mrf.mxu0
      %v1699 = vadd.f32 0.0, %v1698
      %1700 = vmatmul.f32.gmra.mxu0 %v382
      %v1701 = vpop.f32.mrf.mxu0
      %v1702 = vadd.f32 0.0, %v1701
      %1703 = vmatmul.f32.gmra.mxu0 %v384
      %v1704 = vpop.f32.mrf.mxu0
      %v1705 = vadd.f32 0.0, %v1704
      %1706 = vmatmul.f32.gmra.mxu0 %v386
      %v1707 = vpop.f32.mrf.mxu0
      %v1708 = vadd.f32 0.0, %v1707
      %1709 = vmatmul.f32.gmra.mxu0 %v388
      %v1710 = vpop.f32.mrf.mxu0
      %v1711 = vadd.f32 0.0, %v1710
      %1712 = vmatmul.f32.gmra.mxu0 %v390
      %v1713 = vpop.f32.mrf.mxu0
      %v1714 = vadd.f32 0.0, %v1713
      %1715 = vmatmul.f32.gmra.mxu0 %v392
      %v1716 = vpop.f32.mrf.mxu0
      %v1717 = vadd.f32 0.0, %v1716
      %1718 = vmatmul.f32.gmra.mxu0 %v394
      %v1719 = vpop.f32.mrf.mxu0
      %v1720 = vadd.f32 0.0, %v1719
      %1721 = vmatmul.f32.gmra.mxu0 %v396
      %v1722 = vpop.f32.mrf.mxu0
      %v1723 = vadd.f32 0.0, %v1722
      %1724 = vmatmul.f32.gmra.mxu0 %v398
      %v1725 = vpop.f32.mrf.mxu0
      %v1726 = vadd.f32 0.0, %v1725
      %1727 = vmatmul.f32.gmra.mxu0 %v400
      %v1728 = vpop.f32.mrf.mxu0
      %v1729 = vadd.f32 0.0, %v1728
      %1730 = vmatmul.f32.gmra.mxu0 %v402
      %v1731 = vpop.f32.mrf.mxu0
      %v1732 = vadd.f32 0.0, %v1731
      %1733 = vmatmul.f32.gmra.mxu0 %v404
      %v1734 = vpop.f32.mrf.mxu0
      %v1735 = vadd.f32 0.0, %v1734
      %1736 = vmatmul.f32.gmra.mxu0 %v406
      %v1737 = vpop.f32.mrf.mxu0
      %v1738 = vadd.f32 0.0, %v1737
      %1739 = vmatmul.f32.gmra.mxu0 %v408
      %v1740 = vpop.f32.mrf.mxu0
      %v1741 = vadd.f32 0.0, %v1740
      %1742 = vmatmul.f32.gmra.mxu0 %v410
      %v1743 = vpop.f32.mrf.mxu0
      %v1744 = vadd.f32 0.0, %v1743
      %1745 = vmatmul.f32.gmra.mxu0 %v412
      %v1746 = vpop.f32.mrf.mxu0
      %v1747 = vadd.f32 0.0, %v1746
      %1748 = vmatmul.f32.gmra.mxu0 %v414
      %v1749 = vpop.f32.mrf.mxu0
      %v1750 = vadd.f32 0.0, %v1749
      %1751 = vmatmul.f32.gmra.mxu0 %v416
      %v1752 = vpop.f32.mrf.mxu0
      %v1753 = vadd.f32 0.0, %v1752
      %1754 = vmatmul.f32.gmra.mxu0 %v418
      %v1755 = vpop.f32.mrf.mxu0
      %v1756 = vadd.f32 0.0, %v1755
      %1757 = vmatmul.f32.gmra.mxu0 %v420
      %v1758 = vpop.f32.mrf.mxu0
      %v1759 = vadd.f32 0.0, %v1758
      %1760 = vmatmul.f32.gmra.mxu0 %v1178
      %v1761 = vpop.f32.mrf.mxu0
      %v1762 = vadd.f32 0.0, %v1761
      %1763 = vmatmul.f32.gmra.mxu0 %v1180
      %v1764 = vpop.f32.mrf.mxu0
      %v1765 = vadd.f32 0.0, %v1764
      %1766 = vmatmul.f32.gmra.mxu0 %v1653
      %v1767 = vpop.f32.mrf.mxu0
      %v1768 = vadd.f32 0.0, %v1767
      %1769 = vmatmul.f32.gmra.mxu0 %v1655
      %v1770 = vpop.f32.mrf.mxu0
      %v1771 = vadd.f32 0.0, %v1770
      %1772 = vdwg.mxu0
      %v1773 = vadd.f32 %v1613, %v1678
      %v1774 = vadd.f32 %v1614, %v1681
      %v1775 = vadd.f32 %v1615, %v1684
      %v1776 = vadd.f32 %v1616, %v1687
      %v1777 = vadd.f32 %v1617, %v1690
      %v1778 = vadd.f32 %v1618, %v1693
      %v1779 = vadd.f32 %v1619, %v1696
      %v1780 = vadd.f32 %v1620, %v1699
      %v1781 = vadd.f32 %v1621, %v1702
      %v1782 = vadd.f32 %v1622, %v1705
      %v1783 = vadd.f32 %v1623, %v1708
      %v1784 = vadd.f32 %v1624, %v1711
      %v1785 = vadd.f32 %v1625, %v1714
      %v1786 = vadd.f32 %v1626, %v1717
      %v1787 = vadd.f32 %v1627, %v1720
      %v1788 = vadd.f32 %v1628, %v1723
      %v1789 = vadd.f32 %v1629, %v1726
      %v1790 = vadd.f32 %v1630, %v1729
      %v1791 = vadd.f32 %v1631, %v1732
      %v1792 = vadd.f32 %v1632, %v1735
      %v1793 = vadd.f32 %v1633, %v1738
      %v1794 = vadd.f32 %v1634, %v1741
      %v1795 = vadd.f32 %v1635, %v1744
      %v1796 = vadd.f32 %v1636, %v1747
      %v1797 = vadd.f32 %v1637, %v1750
      %v1798 = vadd.f32 %v1638, %v1753
      %v1799 = vadd.f32 %v1639, %v1756
      %v1800 = vadd.f32 %v1640, %v1759
      %v1801 = vadd.f32 %v1641, %v1762
      %v1802 = vadd.f32 %v1642, %v1765
      %v1803 = vadd.f32 %v1643, %v1768
      %v1804 = vadd.f32 %v1644, %v1771
      %v1805 = vrot.slane %v222, 2
      %v1806 = vrot.slane %v223, 2
      %v1807 = vsel %vm719, %v1805, %v1806
      %v1808 = vrot.slane %v224, 2
      %v1809 = vsel %vm719, %v1806, %v1808
      %s1810 = scalar_lea.vmem %s1, 32
      %v1811 = vld [vmem:[%s1810] sm:$0xf]
      %v1812 = vsel %vm357, %v1807, 0
      %v1814 = vsel %vm357, %v1809, 0
      %v1817 = vsel %vm422, %v1811, 0
      %1819 = vmatpush.msra.mxu0 0.0
      %1820 = vmatpush.msra.mxu0 0.0
      %1821 = vmatpush.msra.mxu0 0.0
      %1822 = vmatpush.msra.mxu0 0.0
      %1823 = vmatpush.msra.mxu0 0.0
      %1824 = vmatpush.msra.mxu0 0.0
      %1825 = vmatpush.msra.mxu0 0.0
      %1826 = vmatpush.msra.mxu0 0.0
      %1827 = vmatpush.msra.mxu0 0.0
      %1828 = vmatpush.msra.mxu0 0.0
      %1829 = vmatpush.msra.mxu0 0.0
      %1830 = vmatpush.msra.mxu0 0.0
      %1831 = vmatpush.msra.mxu0 0.0
      %1832 = vmatpush.msra.mxu0 0.0
      %1833 = vmatpush.msra.mxu0 0.0
      %1834 = vmatpush.msra.mxu0 %v1817
      %1835 = vmatmul.f32.gmra.mxu0 %v810
      %v1836 = vpop.f32.mrf.mxu0
      %v1837 = vadd.f32 0.0, %v1836
      %1838 = vmatmul.f32.gmra.mxu0 %v812
      %v1839 = vpop.f32.mrf.mxu0
      %v1840 = vadd.f32 0.0, %v1839
      %1841 = vmatmul.f32.gmra.mxu0 %v814
      %v1842 = vpop.f32.mrf.mxu0
      %v1843 = vadd.f32 0.0, %v1842
      %1844 = vmatmul.f32.gmra.mxu0 %v816
      %v1845 = vpop.f32.mrf.mxu0
      %v1846 = vadd.f32 0.0, %v1845
      %1847 = vmatmul.f32.gmra.mxu0 %v818
      %v1848 = vpop.f32.mrf.mxu0
      %v1849 = vadd.f32 0.0, %v1848
      %1850 = vmatmul.f32.gmra.mxu0 %v820
      %v1851 = vpop.f32.mrf.mxu0
      %v1852 = vadd.f32 0.0, %v1851
      %1853 = vmatmul.f32.gmra.mxu0 %v822
      %v1854 = vpop.f32.mrf.mxu0
      %v1855 = vadd.f32 0.0, %v1854
      %1856 = vmatmul.f32.gmra.mxu0 %v824
      %v1857 = vpop.f32.mrf.mxu0
      %v1858 = vadd.f32 0.0, %v1857
      %1859 = vmatmul.f32.gmra.mxu0 %v826
      %v1860 = vpop.f32.mrf.mxu0
      %v1861 = vadd.f32 0.0, %v1860
      %1862 = vmatmul.f32.gmra.mxu0 %v828
      %v1863 = vpop.f32.mrf.mxu0
      %v1864 = vadd.f32 0.0, %v1863
      %1865 = vmatmul.f32.gmra.mxu0 %v830
      %v1866 = vpop.f32.mrf.mxu0
      %v1867 = vadd.f32 0.0, %v1866
      %1868 = vmatmul.f32.gmra.mxu0 %v832
      %v1869 = vpop.f32.mrf.mxu0
      %v1870 = vadd.f32 0.0, %v1869
      %1871 = vmatmul.f32.gmra.mxu0 %v834
      %v1872 = vpop.f32.mrf.mxu0
      %v1873 = vadd.f32 0.0, %v1872
      %1874 = vmatmul.f32.gmra.mxu0 %v836
      %v1875 = vpop.f32.mrf.mxu0
      %v1876 = vadd.f32 0.0, %v1875
      %1877 = vmatmul.f32.gmra.mxu0 %v838
      %v1878 = vpop.f32.mrf.mxu0
      %v1879 = vadd.f32 0.0, %v1878
      %1880 = vmatmul.f32.gmra.mxu0 %v840
      %v1881 = vpop.f32.mrf.mxu0
      %v1882 = vadd.f32 0.0, %v1881
      %1883 = vmatmul.f32.gmra.mxu0 %v842
      %v1884 = vpop.f32.mrf.mxu0
      %v1885 = vadd.f32 0.0, %v1884
      %1886 = vmatmul.f32.gmra.mxu0 %v844
      %v1887 = vpop.f32.mrf.mxu0
      %v1888 = vadd.f32 0.0, %v1887
      %1889 = vmatmul.f32.gmra.mxu0 %v846
      %v1890 = vpop.f32.mrf.mxu0
      %v1891 = vadd.f32 0.0, %v1890
      %1892 = vmatmul.f32.gmra.mxu0 %v848
      %v1893 = vpop.f32.mrf.mxu0
      %v1894 = vadd.f32 0.0, %v1893
      %1895 = vmatmul.f32.gmra.mxu0 %v850
      %v1896 = vpop.f32.mrf.mxu0
      %v1897 = vadd.f32 0.0, %v1896
      %1898 = vmatmul.f32.gmra.mxu0 %v852
      %v1899 = vpop.f32.mrf.mxu0
      %v1900 = vadd.f32 0.0, %v1899
      %1901 = vmatmul.f32.gmra.mxu0 %v854
      %v1902 = vpop.f32.mrf.mxu0
      %v1903 = vadd.f32 0.0, %v1902
      %1904 = vmatmul.f32.gmra.mxu0 %v856
      %v1905 = vpop.f32.mrf.mxu0
      %v1906 = vadd.f32 0.0, %v1905
      %1907 = vmatmul.f32.gmra.mxu0 %v858
      %v1908 = vpop.f32.mrf.mxu0
      %v1909 = vadd.f32 0.0, %v1908
      %1910 = vmatmul.f32.gmra.mxu0 %v860
      %v1911 = vpop.f32.mrf.mxu0
      %v1912 = vadd.f32 0.0, %v1911
      %1913 = vmatmul.f32.gmra.mxu0 %v862
      %v1914 = vpop.f32.mrf.mxu0
      %v1915 = vadd.f32 0.0, %v1914
      %1916 = vmatmul.f32.gmra.mxu0 %v864
      %v1917 = vpop.f32.mrf.mxu0
      %v1918 = vadd.f32 0.0, %v1917
      %1919 = vmatmul.f32.gmra.mxu0 %v1337
      %v1920 = vpop.f32.mrf.mxu0
      %v1921 = vadd.f32 0.0, %v1920
      %1922 = vmatmul.f32.gmra.mxu0 %v1339
      %v1923 = vpop.f32.mrf.mxu0
      %v1924 = vadd.f32 0.0, %v1923
      %1925 = vmatmul.f32.gmra.mxu0 %v1812
      %v1926 = vpop.f32.mrf.mxu0
      %v1927 = vadd.f32 0.0, %v1926
      %1928 = vmatmul.f32.gmra.mxu0 %v1814
      %v1929 = vpop.f32.mrf.mxu0
      %v1930 = vadd.f32 0.0, %v1929
      %1931 = vdwg.mxu0
      %v1932 = vadd.f32 %v1773, %v1837
      %v1933 = vadd.f32 %v1774, %v1840
      %v1934 = vadd.f32 %v1775, %v1843
      %v1935 = vadd.f32 %v1776, %v1846
      %v1936 = vadd.f32 %v1777, %v1849
      %v1937 = vadd.f32 %v1778, %v1852
      %v1938 = vadd.f32 %v1779, %v1855
      %v1939 = vadd.f32 %v1780, %v1858
      %v1940 = vadd.f32 %v1781, %v1861
      %v1941 = vadd.f32 %v1782, %v1864
      %v1942 = vadd.f32 %v1783, %v1867
      %v1943 = vadd.f32 %v1784, %v1870
      %v1944 = vadd.f32 %v1785, %v1873
      %v1945 = vadd.f32 %v1786, %v1876
      %v1946 = vadd.f32 %v1787, %v1879
      %v1947 = vadd.f32 %v1788, %v1882
      %v1948 = vadd.f32 %v1789, %v1885
      %v1949 = vadd.f32 %v1790, %v1888
      %v1950 = vadd.f32 %v1791, %v1891
      %v1951 = vadd.f32 %v1792, %v1894
      %v1952 = vadd.f32 %v1793, %v1897
      %v1953 = vadd.f32 %v1794, %v1900
      %v1954 = vadd.f32 %v1795, %v1903
      %v1955 = vadd.f32 %v1796, %v1906
      %v1956 = vadd.f32 %v1797, %v1909
      %v1957 = vadd.f32 %v1798, %v1912
      %v1958 = vadd.f32 %v1799, %v1915
      %v1959 = vadd.f32 %v1800, %v1918
      %v1960 = vadd.f32 %v1801, %v1921
      %v1961 = vadd.f32 %v1802, %v1924
      %v1962 = vadd.f32 %v1803, %v1927
      %v1963 = vadd.f32 %v1804, %v1930
      %v1964 = vld [vmem:[%s2] sm:$0x1]
      %v1965 = vperm.slane %v1964, 0
      %v1966 = vmul.f32 %v1932, %v1965
      %v1967 = vmul.f32 %v1933, %v1965
      %v1968 = vmul.f32 %v1934, %v1965
      %v1969 = vmul.f32 %v1935, %v1965
      %v1970 = vmul.f32 %v1936, %v1965
      %v1971 = vmul.f32 %v1937, %v1965
      %v1972 = vmul.f32 %v1938, %v1965
      %v1973 = vmul.f32 %v1939, %v1965
      %v1974 = vmul.f32 %v1940, %v1965
      %v1975 = vmul.f32 %v1941, %v1965
      %v1976 = vmul.f32 %v1942, %v1965
      %v1977 = vmul.f32 %v1943, %v1965
      %v1978 = vmul.f32 %v1944, %v1965
      %v1979 = vmul.f32 %v1945, %v1965
      %v1980 = vmul.f32 %v1946, %v1965
      %v1981 = vmul.f32 %v1947, %v1965
      %v1982 = vmul.f32 %v1948, %v1965
      %v1983 = vmul.f32 %v1949, %v1965
      %v1984 = vmul.f32 %v1950, %v1965
      %v1985 = vmul.f32 %v1951, %v1965
      %v1986 = vmul.f32 %v1952, %v1965
      %v1987 = vmul.f32 %v1953, %v1965
      %v1988 = vmul.f32 %v1954, %v1965
      %v1989 = vmul.f32 %v1955, %v1965
      %v1990 = vmul.f32 %v1956, %v1965
      %v1991 = vmul.f32 %v1957, %v1965
      %v1992 = vmul.f32 %v1958, %v1965
      %v1993 = vmul.f32 %v1959, %v1965
      %v1994 = vmul.f32 %v1960, %v1965
      %v1995 = vmul.f32 %v1961, %v1965
      %v1996 = vmul.f32 %v1962, %v1965
      %v1997 = vmul.f32 %v1963, %v1965
      %v1998 = vld [vmem:[%s2 + $0x1] sm:$0x1]
      %v1999 = vperm.slane %v1998, 0
      %v2000 = vadd.f32 %v1966, %v1999
      %v2001 = vadd.f32 %v1967, %v1999
      %v2002 = vadd.f32 %v1968, %v1999
      %v2003 = vadd.f32 %v1969, %v1999
      %v2004 = vadd.f32 %v1970, %v1999
      %v2005 = vadd.f32 %v1971, %v1999
      %v2006 = vadd.f32 %v1972, %v1999
      %v2007 = vadd.f32 %v1973, %v1999
      %v2008 = vadd.f32 %v1974, %v1999
      %v2009 = vadd.f32 %v1975, %v1999
      %v2010 = vadd.f32 %v1976, %v1999
      %v2011 = vadd.f32 %v1977, %v1999
      %v2012 = vadd.f32 %v1978, %v1999
      %v2013 = vadd.f32 %v1979, %v1999
      %v2014 = vadd.f32 %v1980, %v1999
      %v2015 = vadd.f32 %v1981, %v1999
      %v2016 = vadd.f32 %v1982, %v1999
      %v2017 = vadd.f32 %v1983, %v1999
      %v2018 = vadd.f32 %v1984, %v1999
      %v2019 = vadd.f32 %v1985, %v1999
      %v2020 = vadd.f32 %v1986, %v1999
      %v2021 = vadd.f32 %v1987, %v1999
      %v2022 = vadd.f32 %v1988, %v1999
      %v2023 = vadd.f32 %v1989, %v1999
      %v2024 = vadd.f32 %v1990, %v1999
      %v2025 = vadd.f32 %v1991, %v1999
      %v2026 = vadd.f32 %v1992, %v1999
      %v2027 = vadd.f32 %v1993, %v1999
      %v2028 = vadd.f32 %v1994, %v1999
      %v2029 = vadd.f32 %v1995, %v1999
      %v2030 = vadd.f32 %v1996, %v1999
      %v2031 = vadd.f32 %v1997, %v1999
      %vm2032 = vcmp.gt.f32.partialorder %v2000, 0.0
      %vm2033 = vcmp.gt.f32.partialorder %v2001, 0.0
      %vm2034 = vcmp.gt.f32.partialorder %v2002, 0.0
      %vm2035 = vcmp.gt.f32.partialorder %v2003, 0.0
      %vm2036 = vcmp.gt.f32.partialorder %v2004, 0.0
      %vm2037 = vcmp.gt.f32.partialorder %v2005, 0.0
      %vm2038 = vcmp.gt.f32.partialorder %v2006, 0.0
      %vm2039 = vcmp.gt.f32.partialorder %v2007, 0.0
      %vm2040 = vcmp.gt.f32.partialorder %v2008, 0.0
      %vm2041 = vcmp.gt.f32.partialorder %v2009, 0.0
      %vm2042 = vcmp.gt.f32.partialorder %v2010, 0.0
      %vm2043 = vcmp.gt.f32.partialorder %v2011, 0.0
      %vm2044 = vcmp.gt.f32.partialorder %v2012, 0.0
      %vm2045 = vcmp.gt.f32.partialorder %v2013, 0.0
      %vm2046 = vcmp.gt.f32.partialorder %v2014, 0.0
      %vm2047 = vcmp.gt.f32.partialorder %v2015, 0.0
      %vm2048 = vcmp.gt.f32.partialorder %v2016, 0.0
      %vm2049 = vcmp.gt.f32.partialorder %v2017, 0.0
      %vm2050 = vcmp.gt.f32.partialorder %v2018, 0.0
      %vm2051 = vcmp.gt.f32.partialorder %v2019, 0.0
      %vm2052 = vcmp.gt.f32.partialorder %v2020, 0.0
      %vm2053 = vcmp.gt.f32.partialorder %v2021, 0.0
      %vm2054 = vcmp.gt.f32.partialorder %v2022, 0.0
      %vm2055 = vcmp.gt.f32.partialorder %v2023, 0.0
      %vm2056 = vcmp.gt.f32.partialorder %v2024, 0.0
      %vm2057 = vcmp.gt.f32.partialorder %v2025, 0.0
      %vm2058 = vcmp.gt.f32.partialorder %v2026, 0.0
      %vm2059 = vcmp.gt.f32.partialorder %v2027, 0.0
      %vm2060 = vcmp.gt.f32.partialorder %v2028, 0.0
      %vm2061 = vcmp.gt.f32.partialorder %v2029, 0.0
      %vm2062 = vcmp.gt.f32.partialorder %v2030, 0.0
      %vm2063 = vcmp.gt.f32.partialorder %v2031, 0.0
      %v2064 = vmul.f32 %v2000, 0.1
      %v2065 = vmul.f32 %v2001, 0.1
      %v2066 = vmul.f32 %v2002, 0.1
      %v2067 = vmul.f32 %v2003, 0.1
      %v2068 = vmul.f32 %v2004, 0.1
      %v2069 = vmul.f32 %v2005, 0.1
      %v2070 = vmul.f32 %v2006, 0.1
      %v2071 = vmul.f32 %v2007, 0.1
      %v2072 = vmul.f32 %v2008, 0.1
      %v2073 = vmul.f32 %v2009, 0.1
      %v2074 = vmul.f32 %v2010, 0.1
      %v2075 = vmul.f32 %v2011, 0.1
      %v2076 = vmul.f32 %v2012, 0.1
      %v2077 = vmul.f32 %v2013, 0.1
      %v2078 = vmul.f32 %v2014, 0.1
      %v2079 = vmul.f32 %v2015, 0.1
      %v2080 = vmul.f32 %v2016, 0.1
      %v2081 = vmul.f32 %v2017, 0.1
      %v2082 = vmul.f32 %v2018, 0.1
      %v2083 = vmul.f32 %v2019, 0.1
      %v2084 = vmul.f32 %v2020, 0.1
      %v2085 = vmul.f32 %v2021, 0.1
      %v2086 = vmul.f32 %v2022, 0.1
      %v2087 = vmul.f32 %v2023, 0.1
      %v2088 = vmul.f32 %v2024, 0.1
      %v2089 = vmul.f32 %v2025, 0.1
      %v2090 = vmul.f32 %v2026, 0.1
      %v2091 = vmul.f32 %v2027, 0.1
      %v2092 = vmul.f32 %v2028, 0.1
      %v2093 = vmul.f32 %v2029, 0.1
      %v2094 = vmul.f32 %v2030, 0.1
      %v2095 = vmul.f32 %v2031, 0.1
      %v2096 = vsel %vm2032, %v2000, %v2064
      %v2097 = vsel %vm2033, %v2001, %v2065
      %v2098 = vsel %vm2034, %v2002, %v2066
      %v2099 = vsel %vm2035, %v2003, %v2067
      %v2100 = vsel %vm2036, %v2004, %v2068
      %v2101 = vsel %vm2037, %v2005, %v2069
      %v2102 = vsel %vm2038, %v2006, %v2070
      %v2103 = vsel %vm2039, %v2007, %v2071
      %v2104 = vsel %vm2040, %v2008, %v2072
      %v2105 = vsel %vm2041, %v2009, %v2073
      %v2106 = vsel %vm2042, %v2010, %v2074
      %v2107 = vsel %vm2043, %v2011, %v2075
      %v2108 = vsel %vm2044, %v2012, %v2076
      %v2109 = vsel %vm2045, %v2013, %v2077
      %v2110 = vsel %vm2046, %v2014, %v2078
      %v2111 = vsel %vm2047, %v2015, %v2079
      %v2112 = vsel %vm2048, %v2016, %v2080
      %v2113 = vsel %vm2049, %v2017, %v2081
      %v2114 = vsel %vm2050, %v2018, %v2082
      %v2115 = vsel %vm2051, %v2019, %v2083
      %v2116 = vsel %vm2052, %v2020, %v2084
      %v2117 = vsel %vm2053, %v2021, %v2085
      %v2118 = vsel %vm2054, %v2022, %v2086
      %v2119 = vsel %vm2055, %v2023, %v2087
      %v2120 = vsel %vm2056, %v2024, %v2088
      %v2121 = vsel %vm2057, %v2025, %v2089
      %v2122 = vsel %vm2058, %v2026, %v2090
      %v2123 = vsel %vm2059, %v2027, %v2091
      %v2124 = vsel %vm2060, %v2028, %v2092
      %v2125 = vsel %vm2061, %v2029, %v2093
      %v2126 = vsel %vm2062, %v2030, %v2094
      %v2127 = vsel %vm2063, %v2031, %v2095
      %vm2128 = vcmask 64512
      %2129 = vst.msk [vmem:[%s170] sm:$0xff] %vm2128, %v2096
      %2130 = vst.msk [vmem:[%s170 + $0x8] sm:$0xff] %vm2128, %v2097
      %2131 = vst.msk [vmem:[%s170 + $0x10] sm:$0xff] %vm2128, %v2098
      %2132 = vst.msk [vmem:[%s170 + $0x18] sm:$0xff] %vm2128, %v2099
      %2133 = vst.msk [vmem:[%s170 + $0x20] sm:$0xff] %vm2128, %v2100
      %2134 = vst.msk [vmem:[%s170 + $0x28] sm:$0xff] %vm2128, %v2101
      %2135 = vst.msk [vmem:[%s170 + $0x30] sm:$0xff] %vm2128, %v2102
      %2136 = vst.msk [vmem:[%s170 + $0x38] sm:$0xff] %vm2128, %v2103
      %2137 = vst.msk [vmem:[%s170 + $0x40] sm:$0xff] %vm2128, %v2104
      %2138 = vst.msk [vmem:[%s170 + $0x48] sm:$0xff] %vm2128, %v2105
      %2139 = vst.msk [vmem:[%s170 + $0x50] sm:$0xff] %vm2128, %v2106
      %2140 = vst.msk [vmem:[%s170 + $0x58] sm:$0xff] %vm2128, %v2107
      %2141 = vst.msk [vmem:[%s170 + $0x60] sm:$0xff] %vm2128, %v2108
      %2142 = vst.msk [vmem:[%s170 + $0x68] sm:$0xff] %vm2128, %v2109
      %2143 = vst.msk [vmem:[%s170 + $0x70] sm:$0xff] %vm2128, %v2110
      %2144 = vst.msk [vmem:[%s170 + $0x78] sm:$0xff] %vm2128, %v2111
      %2145 = vst.msk [vmem:[%s170 + $0x80] sm:$0xff] %vm2128, %v2112
      %2146 = vst.msk [vmem:[%s170 + $0x88] sm:$0xff] %vm2128, %v2113
      %2147 = vst.msk [vmem:[%s170 + $0x90] sm:$0xff] %vm2128, %v2114
      %2148 = vst.msk [vmem:[%s170 + $0x98] sm:$0xff] %vm2128, %v2115
      %2149 = vst.msk [vmem:[%s170 + $0xa0] sm:$0xff] %vm2128, %v2116
      %2150 = vst.msk [vmem:[%s170 + $0xa8] sm:$0xff] %vm2128, %v2117
      %2151 = vst.msk [vmem:[%s170 + $0xb0] sm:$0xff] %vm2128, %v2118
      %2152 = vst.msk [vmem:[%s170 + $0xb8] sm:$0xff] %vm2128, %v2119
      %2153 = vst.msk [vmem:[%s170 + $0xc0] sm:$0xff] %vm2128, %v2120
      %2154 = vst.msk [vmem:[%s170 + $0xc8] sm:$0xff] %vm2128, %v2121
      %2155 = vst.msk [vmem:[%s170 + $0xd0] sm:$0xff] %vm2128, %v2122
      %2156 = vst.msk [vmem:[%s170 + $0xd8] sm:$0xff] %vm2128, %v2123
      %2157 = vst.msk [vmem:[%s170 + $0xe0] sm:$0xff] %vm2128, %v2124
      %2158 = vst.msk [vmem:[%s170 + $0xe8] sm:$0xff] %vm2128, %v2125
      %2159 = vst.msk [vmem:[%s170 + $0xf0] sm:$0xff] %vm2128, %v2126
      %2160 = vst.msk [vmem:[%s170 + $0xf8] sm:$0xff] %vm2128, %v2127
      %p2161 = scmp.lt.s32.totalorder %s14, 1
      %s2162 = scalar_select %p2161, %s14, 1
      %s2163 = smul.addr %s2162, 32
      %s2164 = smul.addr %s2163, 8
      %s2165 = scalar_lea.vmem %s3, %s2164
      // Predicated region
      $region33: #{cnn_unit_forward.3} parent=31 // pred_check
        %p2166 = pneg %p100
      $region34: #{cnn_unit_forward.3} parent=31 // pred_check_branch
        %2168 = sbr.rel (%p2166) target = $region36
      $region35: #{cnn_unit_forward.3} parent=31 // pred_region
        _
      $region36: #{cnn_unit_forward.3} parent=31 // pred_fallthru
        _
    $region32: #{cnn_unit_forward.3} parent=5 // pred_fallthru
      _
    %p2169 = scmp.le.s32.totalorder 2, %s9
    // Predicated region
    $region37: #{cnn_unit_forward.3} parent=5 // pred_check
      %p2170 = pneg %p2169
    $region38: #{cnn_unit_forward.3} parent=5 // pred_check_branch
      %2172 = sbr.rel (%p2170) target = $region40
    $region39: #{cnn_unit_forward.3} parent=5 // pred_region
      %s2173 = ssub.s32 %s9, 2
      // Predicated region
      $region41: #{cnn_unit_forward.3} parent=39 // pred_check
        %p2174 = pneg %p106
      $region42: #{cnn_unit_forward.3} parent=39 // pred_check_branch
        %2176 = sbr.rel (%p2174) target = $region44
      $region43: #{cnn_unit_forward.3} parent=39 // pred_region
        %p2177 = scmp.lt.s32.totalorder %s15, 1
        %s2178 = scalar_select %p2177, %s15, 1
        %s2179 = smul.addr %s2178, 32
        %s2180 = smul.addr %s2179, 8
        %s2181 = scalar_lea.vmem %s3, %s2180
      $region44: #{cnn_unit_forward.3} parent=39 // pred_fallthru
        _
    $region40: #{cnn_unit_forward.3} parent=5 // pred_fallthru
      _
  $region6: #{cnn_unit_forward.3} parent=0 // loop_footer
    %s13 = sadd.s32 1, %s9
  $region7: #{cnn_unit_forward.3} parent=0 // loop_footer_branch
    %8 = sbr.rel target = $region3
  $region8: #{cnn_unit_forward.3} parent=0 // loop_exit
    _

</llo_original>
